<compile_context>
chip_gen: v7x
topology: tpu7x:2x2x1
jax: 0.10.0
libtpu: 0.0.40
codegen_flags: <defaults>
</compile_context>

<pallas_src>
import functools
import math

import jax
import jax.numpy as jnp
from jax.experimental import pallas as pl
from jax.experimental.pallas import tpu as pltpu


_BF16_ROWS = 16   # bf16 sublane packing: keep bf16 row slices 16-row aligned


# ----------------------------------------------------------------------------
# Small helpers
# ----------------------------------------------------------------------------
def _round_up(x, m):
    return (x + m - 1) // m * m


def _vmem_capacity_bytes():
    try:
        info = pltpu.get_tpu_info()
        cap = getattr(info, "vmem_capacity_bytes", None)
        if cap:
            return int(cap)
    except Exception:
        pass
    return 128 * 1024 * 1024


def _compiler_params(dims):
    cap = _vmem_capacity_bytes()
    return pltpu.CompilerParams(
        dimension_semantics=dims,
        vmem_limit_bytes=int(min(cap, 128 * 1024 * 1024) * 3 // 4),
    )


def _leaky(x, slope):
    if slope is None:
        return x
    return jnp.where(x >= 0.0, x, jnp.float32(slope) * x)


# ----------------------------------------------------------------------------
# Kernel 1: deep-K im2col matmul + bias + LeakyReLU (used for conv1)
# ----------------------------------------------------------------------------
def _matmul_bias_act_kernel(x_ref, w_ref, b_ref, o_ref, *, slope):
    acc = jnp.dot(x_ref[...], w_ref[...], preferred_element_type=jnp.float32)
    acc = _leaky(acc + b_ref[...], slope)
    o_ref[...] = acc.astype(o_ref.dtype)


def conv2d_im2col(x, w_packed, b, *, kh, kw, pad, slope, out_dtype, target_m):
    """Stride-1 Conv2d + bias + LeakyReLU as one deep-K matmul per big M tile.

    x:        (N, H, W, Cin) activation (cast to bf16 here).
    w_packed: (K_pad, Cout) bf16 with row order (di, dj, cin)  (pack_params()).
    b:        (1, Cout) f32.
    Returns (N, Ho, Wo, Cout) in out_dtype.
    """
    n, h, w, cin = x.shape
    k_pad, cout = w_packed.shape
    kin = kh * kw * cin
    assert k_pad >= kin
    ho = h + 2 * pad - kh + 1
    wo = w + 2 * pad - kw + 1
    assert ho > 0 and wo > 0

    xb = jnp.pad(x.astype(jnp.bfloat16),
                 ((0, 0), (pad, pad), (pad, pad), (0, 0)))
    # full im2col (tiny blow-up at cin=3); tap order (di, dj, cin)
    taps = [xb[:, di:di + ho, dj:dj + wo, :]
            for di in range(kh) for dj in range(kw)]
    patches = jnp.concatenate(taps, axis=-1).reshape(n * ho * wo, kin)
    if k_pad != kin:
        patches = jnp.pad(patches, ((0, 0), (0, k_pad - kin)))

    m_total = n * ho * wo
    # large tiles, but keep >=2 grid steps so both v7x TensorCores get work
    tm = min(target_m, max(256, _round_up(max(m_total // 2, 1), 256)))
    mp = _round_up(m_total, tm)
    if mp != m_total:
        patches = jnp.pad(patches, ((0, mp - m_total), (0, 0)))

    out = pl.pallas_call(
        functools.partial(_matmul_bias_act_kernel, slope=slope),
        out_shape=jax.ShapeDtypeStruct((mp, cout), out_dtype),
        grid=(mp // tm,),
        in_specs=[
            pl.BlockSpec((tm, k_pad), lambda i: (i, 0)),
            pl.BlockSpec((k_pad, cout), lambda i: (0, 0)),
            pl.BlockSpec((1, cout), lambda i: (0, 0)),
        ],
        out_specs=pl.BlockSpec((tm, cout), lambda i: (i, 0)),
        compiler_params=_compiler_params(("parallel",)),
    )(patches, w_packed, b)
    return out[:m_total].reshape(n, ho, wo, cout)


# ----------------------------------------------------------------------------
# Kernel 2: fused 3x3 conv + bias + LeakyReLU + 1x1 projection (conv2 + conv3)
# ----------------------------------------------------------------------------
def _conv_proj_kernel(x_ref, w_ref, b_ref, pw_ref, pb_ref, o_ref, *,
                      kh, kw, wrow, m_out, mc, slope):
    """Halo-tile 3x3 conv (bf16 MXU, f32 acc) fused with the 1x1 projection.

    x_ref:  (1, 1, (tile_h+kh)*wrow, cin) bf16, flat index = row*wrow + col
    w_ref:  (kh*kw, cin, cout) bf16
    b_ref:  (1, cout) f32     pw_ref: (1, cout) f32     pb_ref: (1, 1) f32 SMEM
    o_ref:  (1, 1, m_out, 1)  output pixel per flattened row
    """
    cout = w_ref.shape[2]
    bias = b_ref[...]
    pw = pw_ref[...]
    pb = pb_ref[0, 0]

    for c in range(m_out // mc):               # register-resident M chunks
        m0 = c * mc
        acc = jnp.zeros((mc, cout), jnp.float32)
        for di in range(kh):
            base = di * wrow + m0              # multiple of 16: aligned bf16 slice
            xs = x_ref[0, 0, base: base + mc + _BF16_ROWS, :]
            for dj in range(kw):
                y = jnp.dot(xs, w_ref[di * kw + dj],
                            preferred_element_type=jnp.float32)
                # the kw column shift becomes a cheap f32 row shift
                acc = acc + y[dj: dj + mc, :]
        acc = _leaky(acc + bias, slope)
        # fused 1x1 conv to one channel: lane reduction against pw
        s = jnp.sum(acc * pw, axis=-1, keepdims=True) + pb          # (mc, 1)
        # NOTE: single-channel store stays (mc,1); with the accumulator now
        # register-resident the masked-store path sits well under the MXU time.
        o_ref[0, 0, m0: m0 + mc, :] = s.astype(o_ref.dtype)


def conv2d_halo_proj(x, w_packed, b, pw, pb, *, kh, kw, pad, slope, target_m):
    """Stride-1 Conv2d + bias + LeakyReLU + fused 1x1 conv (to 1 channel)."""
    n, h, w, cin = x.shape
    taps, cin_w, cout = w_packed.shape
    assert taps == kh * kw and cin_w == cin
    ho = h + 2 * pad - kh + 1
    wo = w + 2 * pad - kw + 1
    assert ho > 0 and wo > 0

    wrow = _round_up(w + 2 * pad, _BF16_ROWS)
    step_h = 128 // math.gcd(wrow, 128)            # makes m_out % 128 == 0
    cap_h = max(step_h, (max(target_m, wrow) // wrow) // step_h * step_h)
    tile_h = min(cap_h, _round_up(ho, step_h))
    t = pl.cdiv(ho, tile_h)
    hh = tile_h + kh                               # halo + >=16-row read slack
    hp = (t - 1) * tile_h + hh
    m_out = tile_h * wrow
    mc = 128                                       # (128,64) f32 acc = 8 vregs
    assert m_out % mc == 0

    xp = jnp.pad(x.astype(jnp.bfloat16),
                 ((0, 0), (pad, hp - h - pad), (pad, wrow - w - pad), (0, 0)))
    if t == 1:
        xt = xp.reshape(n, 1, hh * wrow, cin)
    else:
        xt = jnp.stack([xp[:, i * tile_h: i * tile_h + hh] for i in range(t)],
                       axis=1).reshape(n, t, hh * wrow, cin)

    kernel = functools.partial(_conv_proj_kernel, kh=kh, kw=kw, wrow=wrow,
                               m_out=m_out, mc=mc, slope=slope)
    out = pl.pallas_call(
        kernel,
        out_shape=jax.ShapeDtypeStruct((n, t, m_out, 1), jnp.float32),
        grid=(n, t),
        in_specs=[
            pl.BlockSpec((1, 1, hh * wrow, cin), lambda i, j: (i, j, 0, 0)),
            pl.BlockSpec((taps, cin, cout), lambda i, j: (0, 0, 0)),
            pl.BlockSpec((1, cout), lambda i, j: (0, 0)),
            pl.BlockSpec((1, cout), lambda i, j: (0, 0)),
            pl.BlockSpec(memory_space=pltpu.MemorySpace.SMEM),
        ],
        out_specs=pl.BlockSpec((1, 1, m_out, 1), lambda i, j: (i, j, 0, 0)),
        compiler_params=_compiler_params(("parallel", "parallel")),
    )(xt, w_packed, b, pw, pb)

    return out.reshape(n, t * tile_h, wrow, 1)[:, :ho, :wo, :]


# ----------------------------------------------------------------------------
# Parameter packing (hoisted out of the forward path)
# ----------------------------------------------------------------------------
def pack_params(p):
    def pack_im2col(w_oikk, k_align=16):
        cout, cin, kh, kw = w_oikk.shape
        kin = kh * kw * cin
        wt = jnp.transpose(w_oikk, (2, 3, 1, 0)).reshape(kin, cout)
        k_pad = _round_up(kin, k_align)
        if k_pad != kin:
            wt = jnp.pad(wt, ((0, k_pad - kin), (0, 0)))
        return wt.astype(jnp.bfloat16)

    def pack_taps(w_oikk):
        cout, cin, kh, kw = w_oikk.shape
        return jnp.transpose(w_oikk, (2, 3, 1, 0)).reshape(
            kh * kw, cin, cout).astype(jnp.bfloat16)

    return {
        "w1": pack_im2col(p["w1"]),                              # (160, 128) bf16
        "b1": p["b1"].reshape(1, -1).astype(jnp.float32),
        "w2": pack_taps(p["w2"]),                                # (9, 128, 64) bf16
        "b2": p["b2"].reshape(1, -1).astype(jnp.float32),
        "w3": p["w3"].reshape(1, -1).astype(jnp.float32),        # (1, 64) f32
        "b3": p["b3"].reshape(1, 1).astype(jnp.float32),         # (1, 1) f32 (SMEM)
    }


# ----------------------------------------------------------------------------
# Discriminator forward
# ----------------------------------------------------------------------------
def discriminator_forward(x_nchw, packed):
    big_vmem = _vmem_capacity_bytes() >= 100 * 1024 * 1024       # v5e/v6e vs v7x
    x = jnp.transpose(x_nchw, (0, 2, 3, 1))                      # NCHW -> NHWC
    x = conv2d_im2col(x, packed["w1"], packed["b1"], kh=7, kw=7, pad=1,
                      slope=0.2, out_dtype=jnp.bfloat16,
                      target_m=4096 if big_vmem else 2048)
    x = conv2d_halo_proj(x, packed["w2"], packed["b2"],
                         packed["w3"], packed["b3"], kh=3, kw=3, pad=1,
                         slope=0.2, target_m=2048)               # conv3 fused
    return jnp.transpose(x, (0, 3, 1, 2))                        # NHWC -> NCHW


def init_params(key):
    ks = jax.random.split(key, 6)
    scale = 0.05
    return {
        "w1": scale * jax.random.normal(ks[0], (128, 3, 7, 7), jnp.float32),
        "b1": scale * jax.random.normal(ks[1], (128,), jnp.float32),
        "w2": scale * jax.random.normal(ks[2], (64, 128, 3, 3), jnp.float32),
        "b2": scale * jax.random.normal(ks[3], (64,), jnp.float32),
        "w3": scale * jax.random.normal(ks[4], (1, 64, 1, 1), jnp.float32),
        "b3": scale * jax.random.normal(ks[5], (1,), jnp.float32),
    }


# ----------------------------------------------------------------------------
# Pure-JAX f32 reference (lax.conv) for correctness
# ----------------------------------------------------------------------------
def _leaky_ref(x, s):
    return jnp.where(x >= 0.0, x, s * x)


def discriminator_reference(x_nchw, p):
    dn = ("NCHW", "OIHW", "NCHW")
    x = jax.lax.conv_general_dilated(x_nchw, p["w1"], (1, 1), [(1, 1), (1, 1)],
                                     dimension_numbers=dn)
    x = _leaky_ref(x + p["b1"][None, :, None, None], 0.2)
    x = jax.lax.conv_general_dilated(x, p["w2"], (1, 1), [(1, 1), (1, 1)],
                                     dimension_numbers=dn)
    x = _leaky_ref(x + p["b2"][None, :, None, None], 0.2)
    x = jax.lax.conv_general_dilated(x, p["w3"], (1, 1), [(0, 0), (0, 0)],
                                     dimension_numbers=dn)
    return x + p["b3"][None, :, None, None]


if __name__ == "__main__":
    key = jax.random.PRNGKey(0)
    kx, kp = jax.random.split(key)
    # Small NCHW input consistent with Conv2d(3, ...): (batch=2, C=3, H=16, W=16)
    x = jax.random.normal(kx, (2, 3, 16, 16), jnp.float32)
    params = init_params(kp)
    packed = pack_params(params)          # one-time weight repack (bf16)

    fwd = jax.jit(discriminator_forward)
    out = jax.block_until_ready(fwd(x, packed))

    # 7x7 conv with pad=1 shrinks spatial by 4 -> (2, 1, 12, 12)
    assert out.shape == (2, 1, 12, 12), out.shape

    ref = jax.block_until_ready(discriminator_reference(x, params))
    err = float(jnp.max(jnp.abs(out - ref)))
    assert jnp.allclose(out, ref, atol=2e-2, rtol=2e-2), err

    print("KERNEL_OK")
</pallas_src>

<mosaic_0001>
module attributes {stable_mosaic.version = 11 : i64} {
  func.func @_matmul_bias_act_kernel(%arg0: i32, %arg1: memref<256x160xbf16, #tpu.memory_space<vmem>>, %arg2: memref<160x128xbf16, #tpu.memory_space<vmem>>, %arg3: memref<1x128xf32, #tpu.memory_space<vmem>>, %arg4: memref<256x128xbf16, #tpu.memory_space<vmem>>) attributes {dimension_semantics = [#tpu.dimension_semantics<parallel>], iteration_bounds = array<i64: 2>, scalar_prefetch = 0 : i64, scratch_operands = 0 : i64, tpu.core_type = #tpu.core_type<tc>, window_params = [{transform_indices = @transform_0, window_bounds = array<i64: 256, 160>}, {pipeline_mode = #tpu.pipeline_mode<synchronous>, transform_indices = @transform_1, window_bounds = array<i64: 160, 128>}, {pipeline_mode = #tpu.pipeline_mode<synchronous>, transform_indices = @transform_2, window_bounds = array<i64: 1, 128>}, {transform_indices = @transform_3, window_bounds = array<i64: 256, 128>}]} {
    %c0 = arith.constant 0 : index
    %c0_0 = arith.constant 0 : index
    %0 = vector.load %arg1[%c0, %c0_0] : memref<256x160xbf16, #tpu.memory_space<vmem>>, vector<256x160xbf16>
    %c0_1 = arith.constant 0 : index
    %c0_2 = arith.constant 0 : index
    %1 = vector.load %arg2[%c0_1, %c0_2] : memref<160x128xbf16, #tpu.memory_space<vmem>>, vector<160x128xbf16>
    %cst = arith.constant dense<0.000000e+00> : vector<256x128xf32>
    %2 = tpu.matmul %0, %1, %cst {dimension_numbers = #tpu.dot_dimension_numbers<[1], [0], [0], [1], [0, 0, 1, 1], [], []>} : vector<256x160xbf16>, vector<160x128xbf16>, vector<256x128xf32> -> vector<256x128xf32>
    %c0_3 = arith.constant 0 : index
    %c0_4 = arith.constant 0 : index
    %3 = vector.load %arg3[%c0_3, %c0_4] : memref<1x128xf32, #tpu.memory_space<vmem>>, vector<1x128xf32>
    %4 = vector.broadcast %3 : vector<1x128xf32> to vector<256x128xf32>
    %5 = arith.addf %2, %4 : vector<256x128xf32>
    %cst_5 = arith.constant 0.000000e+00 : f32
    %6 = vector.broadcast %cst_5 : f32 to vector<256x128xf32>
    %7 = arith.cmpf oge, %5, %6 : vector<256x128xf32>
    %cst_6 = arith.constant 2.000000e-01 : f32
    %8 = vector.broadcast %cst_6 : f32 to vector<256x128xf32>
    %9 = arith.mulf %8, %5 : vector<256x128xf32>
    %10 = arith.select %7, %5, %9 : vector<256x128xi1>, vector<256x128xf32>
    %11 = arith.truncf %10 : vector<256x128xf32> to vector<256x128xbf16>
    %c0_7 = arith.constant 0 : index
    %c0_8 = arith.constant 0 : index
    %12 = vector.load %arg4[%c0_7, %c0_8] : memref<256x128xbf16, #tpu.memory_space<vmem>>, vector<256x128xbf16>
    tpu.vector_store %arg4[%c0_7, %c0_8], %11 {strides = array<i32>} : memref<256x128xbf16, #tpu.memory_space<vmem>>, vector<256x128xbf16>,
    return
  }
  func.func @transform_0(%arg0: i32) -> (i32, i32) {
    %c0_i32 = arith.constant 0 : i32
    %c0_i32_0 = arith.constant 0 : i32
    return %arg0, %c0_i32 : i32, i32
  }
  func.func @transform_1(%arg0: i32) -> (i32, i32) {
    %c0_i32 = arith.constant 0 : i32
    %c0_i32_0 = arith.constant 0 : i32
    %c0_i32_1 = arith.constant 0 : i32
    return %c0_i32, %c0_i32_0 : i32, i32
  }
  func.func @transform_2(%arg0: i32) -> (i32, i32) {
    %c0_i32 = arith.constant 0 : i32
    %c0_i32_0 = arith.constant 0 : i32
    %c0_i32_1 = arith.constant 0 : i32
    return %c0_i32, %c0_i32_0 : i32, i32
  }
  func.func @transform_3(%arg0: i32) -> (i32, i32) {
    %c0_i32 = arith.constant 0 : i32
    %c0_i32_0 = arith.constant 0 : i32
    return %arg0, %c0_i32 : i32, i32
  }
}

module attributes {stable_mosaic.version = 11 : i64} {
  func.func @_conv_proj_kernel(%arg0: i32, %arg1: i32, %arg2: memref<1x1x304x128xbf16, #tpu.memory_space<vmem>>, %arg3: memref<9x128x64xbf16, #tpu.memory_space<vmem>>, %arg4: memref<1x64xf32, #tpu.memory_space<vmem>>, %arg5: memref<1x64xf32, #tpu.memory_space<vmem>>, %arg6: memref<1x1xf32, #tpu.memory_space<smem>>, %arg7: memref<1x1x256x1xf32, #tpu.memory_space<vmem>>) attributes {dimension_semantics = [#tpu.dimension_semantics<parallel>, #tpu.dimension_semantics<parallel>], iteration_bounds = array<i64: 2, 1>, scalar_prefetch = 0 : i64, scratch_operands = 0 : i64, tpu.core_type = #tpu.core_type<tc>, window_params = [{transform_indices = @transform_0, window_bounds = array<i64: 1, 1, 304, 128>}, {pipeline_mode = #tpu.pipeline_mode<synchronous>, transform_indices = @transform_1, window_bounds = array<i64: 9, 128, 64>}, {pipeline_mode = #tpu.pipeline_mode<synchronous>, transform_indices = @transform_2, window_bounds = array<i64: 1, 64>}, {pipeline_mode = #tpu.pipeline_mode<synchronous>, transform_indices = @transform_3, window_bounds = array<i64: 1, 64>}, {transform_indices = @transform_4, window_bounds = array<i64: 1, 1>}, {transform_indices = @transform_5, window_bounds = array<i64: 1, 1, 256, 1>}]} {
    %c0 = arith.constant 0 : index
    %c0_0 = arith.constant 0 : index
    %0 = vector.load %arg4[%c0, %c0_0] : memref<1x64xf32, #tpu.memory_space<vmem>>, vector<1x64xf32>
    %c0_1 = arith.constant 0 : index
    %c0_2 = arith.constant 0 : index
    %1 = vector.load %arg5[%c0_1, %c0_2] : memref<1x64xf32, #tpu.memory_space<vmem>>, vector<1x64xf32>
    %c0_3 = arith.constant 0 : index
    %c0_4 = arith.constant 0 : index
    %2 = memref.load %arg6[%c0_3, %c0_4] : memref<1x1xf32, #tpu.memory_space<smem>>
    %cst = arith.constant 0.000000e+00 : f32
    %3 = vector.broadcast %cst : f32 to vector<128x64xf32>
    %c0_5 = arith.constant 0 : index
    %c0_6 = arith.constant 0 : index
    %c0_7 = arith.constant 0 : index
    %c0_8 = arith.constant 0 : index
    %4 = vector.load %arg2[%c0_5, %c0_6, %c0_7, %c0_8] : memref<1x1x304x128xbf16, #tpu.memory_space<vmem>>, vector<1x1x144x128xbf16>
    %5 = vector.shape_cast %4 : vector<1x1x144x128xbf16> to vector<144x128xbf16>
    %c0_9 = arith.constant 0 : index
    %c0_10 = arith.constant 0 : index
    %c0_11 = arith.constant 0 : index
    %6 = vector.load %arg3[%c0_9, %c0_10, %c0_11] : memref<9x128x64xbf16, #tpu.memory_space<vmem>>, vector<1x128x64xbf16>
    %7 = vector.shape_cast %6 : vector<1x128x64xbf16> to vector<128x64xbf16>
    %cst_12 = arith.constant dense<0.000000e+00> : vector<144x64xf32>
    %8 = tpu.matmul %5, %7, %cst_12 {dimension_numbers = #tpu.dot_dimension_numbers<[1], [0], [0], [1], [0, 0, 1, 1], [], []>} : vector<144x128xbf16>, vector<128x64xbf16>, vector<144x64xf32> -> vector<144x64xf32>
    %9 = vector.extract_strided_slice %8 {offsets = [0, 0], sizes = [128, 64], strides = [1, 1]} : vector<144x64xf32> to vector<128x64xf32>
    %10 = arith.addf %3, %9 : vector<128x64xf32>
    %c1 = arith.constant 1 : index
    %c0_13 = arith.constant 0 : index
    %c0_14 = arith.constant 0 : index
    %11 = vector.load %arg3[%c1, %c0_13, %c0_14] : memref<9x128x64xbf16, #tpu.memory_space<vmem>>, vector<1x128x64xbf16>
    %12 = vector.shape_cast %11 : vector<1x128x64xbf16> to vector<128x64xbf16>
    %cst_15 = arith.constant dense<0.000000e+00> : vector<144x64xf32>
    %13 = tpu.matmul %5, %12, %cst_15 {dimension_numbers = #tpu.dot_dimension_numbers<[1], [0], [0], [1], [0, 0, 1, 1], [], []>} : vector<144x128xbf16>, vector<128x64xbf16>, vector<144x64xf32> -> vector<144x64xf32>
    %14 = vector.extract_strided_slice %13 {offsets = [1, 0], sizes = [128, 64], strides = [1, 1]} : vector<144x64xf32> to vector<128x64xf32>
    %15 = arith.addf %10, %14 : vector<128x64xf32>
    %c2 = arith.constant 2 : index
    %c0_16 = arith.constant 0 : index
    %c0_17 = arith.constant 0 : index
    %16 = vector.load %arg3[%c2, %c0_16, %c0_17] : memref<9x128x64xbf16, #tpu.memory_space<vmem>>, vector<1x128x64xbf16>
    %17 = vector.shape_cast %16 : vector<1x128x64xbf16> to vector<128x64xbf16>
    %cst_18 = arith.constant dense<0.000000e+00> : vector<144x64xf32>
    %18 = tpu.matmul %5, %17, %cst_18 {dimension_numbers = #tpu.dot_dimension_numbers<[1], [0], [0], [1], [0, 0, 1, 1], [], []>} : vector<144x128xbf16>, vector<128x64xbf16>, vector<144x64xf32> -> vector<144x64xf32>
    %19 = vector.extract_strided_slice %18 {offsets = [2, 0], sizes = [128, 64], strides = [1, 1]} : vector<144x64xf32> to vector<128x64xf32>
    %20 = arith.addf %15, %19 : vector<128x64xf32>
    %c0_19 = arith.constant 0 : index
    %c0_20 = arith.constant 0 : index
    %c16 = arith.constant 16 : index
    %c0_21 = arith.constant 0 : index
    %21 = vector.load %arg2[%c0_19, %c0_20, %c16, %c0_21] : memref<1x1x304x128xbf16, #tpu.memory_space<vmem>>, vector<1x1x144x128xbf16>
    %22 = vector.shape_cast %21 : vector<1x1x144x128xbf16> to vector<144x128xbf16>
    %c3 = arith.constant 3 : index
    %c0_22 = arith.constant 0 : index
    %c0_23 = arith.constant 0 : index
    %23 = vector.load %arg3[%c3, %c0_22, %c0_23] : memref<9x128x64xbf16, #tpu.memory_space<vmem>>, vector<1x128x64xbf16>
    %24 = vector.shape_cast %23 : vector<1x128x64xbf16> to vector<128x64xbf16>
    %cst_24 = arith.constant dense<0.000000e+00> : vector<144x64xf32>
    %25 = tpu.matmul %22, %24, %cst_24 {dimension_numbers = #tpu.dot_dimension_numbers<[1], [0], [0], [1], [0, 0, 1, 1], [], []>} : vector<144x128xbf16>, vector<128x64xbf16>, vector<144x64xf32> -> vector<144x64xf32>
    %26 = vector.extract_strided_slice %25 {offsets = [0, 0], sizes = [128, 64], strides = [1, 1]} : vector<144x64xf32> to vector<128x64xf32>
    %27 = arith.addf %20, %26 : vector<128x64xf32>
    %c4 = arith.constant 4 : index
    %c0_25 = arith.constant 0 : index
    %c0_26 = arith.constant 0 : index
    %28 = vector.load %arg3[%c4, %c0_25, %c0_26] : memref<9x128x64xbf16, #tpu.memory_space<vmem>>, vector<1x128x64xbf16>
    %29 = vector.shape_cast %28 : vector<1x128x64xbf16> to vector<128x64xbf16>
    %cst_27 = arith.constant dense<0.000000e+00> : vector<144x64xf32>
    %30 = tpu.matmul %22, %29, %cst_27 {dimension_numbers = #tpu.dot_dimension_numbers<[1], [0], [0], [1], [0, 0, 1, 1], [], []>} : vector<144x128xbf16>, vector<128x64xbf16>, vector<144x64xf32> -> vector<144x64xf32>
    %31 = vector.extract_strided_slice %30 {offsets = [1, 0], sizes = [128, 64], strides = [1, 1]} : vector<144x64xf32> to vector<128x64xf32>
    %32 = arith.addf %27, %31 : vector<128x64xf32>
    %c5 = arith.constant 5 : index
    %c0_28 = arith.constant 0 : index
    %c0_29 = arith.constant 0 : index
    %33 = vector.load %arg3[%c5, %c0_28, %c0_29] : memref<9x128x64xbf16, #tpu.memory_space<vmem>>, vector<1x128x64xbf16>
    %34 = vector.shape_cast %33 : vector<1x128x64xbf16> to vector<128x64xbf16>
    %cst_30 = arith.constant dense<0.000000e+00> : vector<144x64xf32>
    %35 = tpu.matmul %22, %34, %cst_30 {dimension_numbers = #tpu.dot_dimension_numbers<[1], [0], [0], [1], [0, 0, 1, 1], [], []>} : vector<144x128xbf16>, vector<128x64xbf16>, vector<144x64xf32> -> vector<144x64xf32>
    %36 = vector.extract_strided_slice %35 {offsets = [2, 0], sizes = [128, 64], strides = [1, 1]} : vector<144x64xf32> to vector<128x64xf32>
    %37 = arith.addf %32, %36 : vector<128x64xf32>
    %c0_31 = arith.constant 0 : index
    %c0_32 = arith.constant 0 : index
    %c32 = arith.constant 32 : index
    %c0_33 = arith.constant 0 : index
    %38 = vector.load %arg2[%c0_31, %c0_32, %c32, %c0_33] : memref<1x1x304x128xbf16, #tpu.memory_space<vmem>>, vector<1x1x144x128xbf16>
    %39 = vector.shape_cast %38 : vector<1x1x144x128xbf16> to vector<144x128xbf16>
    %c6 = arith.constant 6 : index
    %c0_34 = arith.constant 0 : index
    %c0_35 = arith.constant 0 : index
    %40 = vector.load %arg3[%c6, %c0_34, %c0_35] : memref<9x128x64xbf16, #tpu.memory_space<vmem>>, vector<1x128x64xbf16>
    %41 = vector.shape_cast %40 : vector<1x128x64xbf16> to vector<128x64xbf16>
    %cst_36 = arith.constant dense<0.000000e+00> : vector<144x64xf32>
    %42 = tpu.matmul %39, %41, %cst_36 {dimension_numbers = #tpu.dot_dimension_numbers<[1], [0], [0], [1], [0, 0, 1, 1], [], []>} : vector<144x128xbf16>, vector<128x64xbf16>, vector<144x64xf32> -> vector<144x64xf32>
    %43 = vector.extract_strided_slice %42 {offsets = [0, 0], sizes = [128, 64], strides = [1, 1]} : vector<144x64xf32> to vector<128x64xf32>
    %44 = arith.addf %37, %43 : vector<128x64xf32>
    %c7 = arith.constant 7 : index
    %c0_37 = arith.constant 0 : index
    %c0_38 = arith.constant 0 : index
    %45 = vector.load %arg3[%c7, %c0_37, %c0_38] : memref<9x128x64xbf16, #tpu.memory_space<vmem>>, vector<1x128x64xbf16>
    %46 = vector.shape_cast %45 : vector<1x128x64xbf16> to vector<128x64xbf16>
    %cst_39 = arith.constant dense<0.000000e+00> : vector<144x64xf32>
    %47 = tpu.matmul %39, %46, %cst_39 {dimension_numbers = #tpu.dot_dimension_numbers<[1], [0], [0], [1], [0, 0, 1, 1], [], []>} : vector<144x128xbf16>, vector<128x64xbf16>, vector<144x64xf32> -> vector<144x64xf32>
    %48 = vector.extract_strided_slice %47 {offsets = [1, 0], sizes = [128, 64], strides = [1, 1]} : vector<144x64xf32> to vector<128x64xf32>
    %49 = arith.addf %44, %48 : vector<128x64xf32>
    %c8 = arith.constant 8 : index
    %c0_40 = arith.constant 0 : index
    %c0_41 = arith.constant 0 : index
    %50 = vector.load %arg3[%c8, %c0_40, %c0_41] : memref<9x128x64xbf16, #tpu.memory_space<vmem>>, vector<1x128x64xbf16>
    %51 = vector.shape_cast %50 : vector<1x128x64xbf16> to vector<128x64xbf16>
    %cst_42 = arith.constant dense<0.000000e+00> : vector<144x64xf32>
    %52 = tpu.matmul %39, %51, %cst_42 {dimension_numbers = #tpu.dot_dimension_numbers<[1], [0], [0], [1], [0, 0, 1, 1], [], []>} : vector<144x128xbf16>, vector<128x64xbf16>, vector<144x64xf32> -> vector<144x64xf32>
    %53 = vector.extract_strided_slice %52 {offsets = [2, 0], sizes = [128, 64], strides = [1, 1]} : vector<144x64xf32> to vector<128x64xf32>
    %54 = arith.addf %49, %53 : vector<128x64xf32>
    %55 = vector.broadcast %0 : vector<1x64xf32> to vector<128x64xf32>
    %56 = arith.addf %54, %55 : vector<128x64xf32>
    %cst_43 = arith.constant 0.000000e+00 : f32
    %57 = vector.broadcast %cst_43 : f32 to vector<128x64xf32>
    %58 = arith.cmpf oge, %56, %57 : vector<128x64xf32>
    %cst_44 = arith.constant 2.000000e-01 : f32
    %59 = vector.broadcast %cst_44 : f32 to vector<128x64xf32>
    %60 = arith.mulf %59, %56 : vector<128x64xf32>
    %61 = arith.select %58, %56, %60 : vector<128x64xi1>, vector<128x64xf32>
    %62 = vector.broadcast %1 : vector<1x64xf32> to vector<128x64xf32>
    %63 = arith.mulf %61, %62 : vector<128x64xf32>
    %cst_45 = arith.constant dense<0.000000e+00> : vector<128xf32>
    %64 = vector.multi_reduction <add>, %63, %cst_45 [1] : vector<128x64xf32> to vector<128xf32>
    %65 = vector.shape_cast %64 : vector<128xf32> to vector<128x1xf32>
    %66 = vector.broadcast %2 : f32 to vector<128x1xf32>
    %67 = arith.addf %65, %66 : vector<128x1xf32>
    %c0_46 = arith.constant 0 : index
    %c0_47 = arith.constant 0 : index
    %c0_48 = arith.constant 0 : index
    %c0_49 = arith.constant 0 : index
    %68 = vector.load %arg7[%c0_46, %c0_47, %c0_48, %c0_49] : memref<1x1x256x1xf32, #tpu.memory_space<vmem>>, vector<1x1x128x1xf32>
    %69 = vector.shape_cast %68 : vector<1x1x128x1xf32> to vector<128x1xf32>
    %70 = vector.shape_cast %67 : vector<128x1xf32> to vector<1x1x128x1xf32>
    tpu.vector_store %arg7[%c0_46, %c0_47, %c0_48, %c0_49], %70 {strides = array<i32>} : memref<1x1x256x1xf32, #tpu.memory_space<vmem>>, vector<1x1x128x1xf32>,
    %cst_50 = arith.constant 0.000000e+00 : f32
    %71 = vector.broadcast %cst_50 : f32 to vector<128x64xf32>
    %c0_51 = arith.constant 0 : index
    %c0_52 = arith.constant 0 : index
    %c128 = arith.constant 128 : index
    %c0_53 = arith.constant 0 : index
    %72 = vector.load %arg2[%c0_51, %c0_52, %c128, %c0_53] : memref<1x1x304x128xbf16, #tpu.memory_space<vmem>>, vector<1x1x144x128xbf16>
    %73 = vector.shape_cast %72 : vector<1x1x144x128xbf16> to vector<144x128xbf16>
    %c0_54 = arith.constant 0 : index
    %c0_55 = arith.constant 0 : index
    %c0_56 = arith.constant 0 : index
    %74 = vector.load %arg3[%c0_54, %c0_55, %c0_56] : memref<9x128x64xbf16, #tpu.memory_space<vmem>>, vector<1x128x64xbf16>
    %75 = vector.shape_cast %74 : vector<1x128x64xbf16> to vector<128x64xbf16>
    %cst_57 = arith.constant dense<0.000000e+00> : vector<144x64xf32>
    %76 = tpu.matmul %73, %75, %cst_57 {dimension_numbers = #tpu.dot_dimension_numbers<[1], [0], [0], [1], [0, 0, 1, 1], [], []>} : vector<144x128xbf16>, vector<128x64xbf16>, vector<144x64xf32> -> vector<144x64xf32>
    %77 = vector.extract_strided_slice %76 {offsets = [0, 0], sizes = [128, 64], strides = [1, 1]} : vector<144x64xf32> to vector<128x64xf32>
    %78 = arith.addf %71, %77 : vector<128x64xf32>
    %c1_58 = arith.constant 1 : index
    %c0_59 = arith.constant 0 : index
    %c0_60 = arith.constant 0 : index
    %79 = vector.load %arg3[%c1_58, %c0_59, %c0_60] : memref<9x128x64xbf16, #tpu.memory_space<vmem>>, vector<1x128x64xbf16>
    %80 = vector.shape_cast %79 : vector<1x128x64xbf16> to vector<128x64xbf16>
    %cst_61 = arith.constant dense<0.000000e+00> : vector<144x64xf32>
    %81 = tpu.matmul %73, %80, %cst_61 {dimension_numbers = #tpu.dot_dimension_numbers<[1], [0], [0], [1], [0, 0, 1, 1], [], []>} : vector<144x128xbf16>, vector<128x64xbf16>, vector<144x64xf32> -> vector<144x64xf32>
    %82 = vector.extract_strided_slice %81 {offsets = [1, 0], sizes = [128, 64], strides = [1, 1]} : vector<144x64xf32> to vector<128x64xf32>
    %83 = arith.addf %78, %82 : vector<128x64xf32>
    %c2_62 = arith.constant 2 : index
    %c0_63 = arith.constant 0 : index
    %c0_64 = arith.constant 0 : index
    %84 = vector.load %arg3[%c2_62, %c0_63, %c0_64] : memref<9x128x64xbf16, #tpu.memory_space<vmem>>, vector<1x128x64xbf16>
    %85 = vector.shape_cast %84 : vector<1x128x64xbf16> to vector<128x64xbf16>
    %cst_65 = arith.constant dense<0.000000e+00> : vector<144x64xf32>
    %86 = tpu.matmul %73, %85, %cst_65 {dimension_numbers = #tpu.dot_dimension_numbers<[1], [0], [0], [1], [0, 0, 1, 1], [], []>} : vector<144x128xbf16>, vector<128x64xbf16>, vector<144x64xf32> -> vector<144x64xf32>
    %87 = vector.extract_strided_slice %86 {offsets = [2, 0], sizes = [128, 64], strides = [1, 1]} : vector<144x64xf32> to vector<128x64xf32>
    %88 = arith.addf %83, %87 : vector<128x64xf32>
    %c0_66 = arith.constant 0 : index
    %c0_67 = arith.constant 0 : index
    %c144 = arith.constant 144 : index
    %c0_68 = arith.constant 0 : index
    %89 = vector.load %arg2[%c0_66, %c0_67, %c144, %c0_68] : memref<1x1x304x128xbf16, #tpu.memory_space<vmem>>, vector<1x1x144x128xbf16>
    %90 = vector.shape_cast %89 : vector<1x1x144x128xbf16> to vector<144x128xbf16>
    %c3_69 = arith.constant 3 : index
    %c0_70 = arith.constant 0 : index
    %c0_71 = arith.constant 0 : index
    %91 = vector.load %arg3[%c3_69, %c0_70, %c0_71] : memref<9x128x64xbf16, #tpu.memory_space<vmem>>, vector<1x128x64xbf16>
    %92 = vector.shape_cast %91 : vector<1x128x64xbf16> to vector<128x64xbf16>
    %cst_72 = arith.constant dense<0.000000e+00> : vector<144x64xf32>
    %93 = tpu.matmul %90, %92, %cst_72 {dimension_numbers = #tpu.dot_dimension_numbers<[1], [0], [0], [1], [0, 0, 1, 1], [], []>} : vector<144x128xbf16>, vector<128x64xbf16>, vector<144x64xf32> -> vector<144x64xf32>
    %94 = vector.extract_strided_slice %93 {offsets = [0, 0], sizes = [128, 64], strides = [1, 1]} : vector<144x64xf32> to vector<128x64xf32>
    %95 = arith.addf %88, %94 : vector<128x64xf32>
    %c4_73 = arith.constant 4 : index
    %c0_74 = arith.constant 0 : index
    %c0_75 = arith.constant 0 : index
    %96 = vector.load %arg3[%c4_73, %c0_74, %c0_75] : memref<9x128x64xbf16, #tpu.memory_space<vmem>>, vector<1x128x64xbf16>
    %97 = vector.shape_cast %96 : vector<1x128x64xbf16> to vector<128x64xbf16>
    %cst_76 = arith.constant dense<0.000000e+00> : vector<144x64xf32>
    %98 = tpu.matmul %90, %97, %cst_76 {dimension_numbers = #tpu.dot_dimension_numbers<[1], [0], [0], [1], [0, 0, 1, 1], [], []>} : vector<144x128xbf16>, vector<128x64xbf16>, vector<144x64xf32> -> vector<144x64xf32>
    %99 = vector.extract_strided_slice %98 {offsets = [1, 0], sizes = [128, 64], strides = [1, 1]} : vector<144x64xf32> to vector<128x64xf32>
    %100 = arith.addf %95, %99 : vector<128x64xf32>
    %c5_77 = arith.constant 5 : index
    %c0_78 = arith.constant 0 : index
    %c0_79 = arith.constant 0 : index
    %101 = vector.load %arg3[%c5_77, %c0_78, %c0_79] : memref<9x128x64xbf16, #tpu.memory_space<vmem>>, vector<1x128x64xbf16>
    %102 = vector.shape_cast %101 : vector<1x128x64xbf16> to vector<128x64xbf16>
    %cst_80 = arith.constant dense<0.000000e+00> : vector<144x64xf32>
    %103 = tpu.matmul %90, %102, %cst_80 {dimension_numbers = #tpu.dot_dimension_numbers<[1], [0], [0], [1], [0, 0, 1, 1], [], []>} : vector<144x128xbf16>, vector<128x64xbf16>, vector<144x64xf32> -> vector<144x64xf32>
    %104 = vector.extract_strided_slice %103 {offsets = [2, 0], sizes = [128, 64], strides = [1, 1]} : vector<144x64xf32> to vector<128x64xf32>
    %105 = arith.addf %100, %104 : vector<128x64xf32>
    %c0_81 = arith.constant 0 : index
    %c0_82 = arith.constant 0 : index
    %c160 = arith.constant 160 : index
    %c0_83 = arith.constant 0 : index
    %106 = vector.load %arg2[%c0_81, %c0_82, %c160, %c0_83] : memref<1x1x304x128xbf16, #tpu.memory_space<vmem>>, vector<1x1x144x128xbf16>
    %107 = vector.shape_cast %106 : vector<1x1x144x128xbf16> to vector<144x128xbf16>
    %c6_84 = arith.constant 6 : index
    %c0_85 = arith.constant 0 : index
    %c0_86 = arith.constant 0 : index
    %108 = vector.load %arg3[%c6_84, %c0_85, %c0_86] : memref<9x128x64xbf16, #tpu.memory_space<vmem>>, vector<1x128x64xbf16>
    %109 = vector.shape_cast %108 : vector<1x128x64xbf16> to vector<128x64xbf16>
    %cst_87 = arith.constant dense<0.000000e+00> : vector<144x64xf32>
    %110 = tpu.matmul %107, %109, %cst_87 {dimension_numbers = #tpu.dot_dimension_numbers<[1], [0], [0], [1], [0, 0, 1, 1], [], []>} : vector<144x128xbf16>, vector<128x64xbf16>, vector<144x64xf32> -> vector<144x64xf32>
    %111 = vector.extract_strided_slice %110 {offsets = [0, 0], sizes = [128, 64], strides = [1, 1]} : vector<144x64xf32> to vector<128x64xf32>
    %112 = arith.addf %105, %111 : vector<128x64xf32>
    %c7_88 = arith.constant 7 : index
    %c0_89 = arith.constant 0 : index
    %c0_90 = arith.constant 0 : index
    %113 = vector.load %arg3[%c7_88, %c0_89, %c0_90] : memref<9x128x64xbf16, #tpu.memory_space<vmem>>, vector<1x128x64xbf16>
    %114 = vector.shape_cast %113 : vector<1x128x64xbf16> to vector<128x64xbf16>
    %cst_91 = arith.constant dense<0.000000e+00> : vector<144x64xf32>
    %115 = tpu.matmul %107, %114, %cst_91 {dimension_numbers = #tpu.dot_dimension_numbers<[1], [0], [0], [1], [0, 0, 1, 1], [], []>} : vector<144x128xbf16>, vector<128x64xbf16>, vector<144x64xf32> -> vector<144x64xf32>
    %116 = vector.extract_strided_slice %115 {offsets = [1, 0], sizes = [128, 64], strides = [1, 1]} : vector<144x64xf32> to vector<128x64xf32>
    %117 = arith.addf %112, %116 : vector<128x64xf32>
    %c8_92 = arith.constant 8 : index
    %c0_93 = arith.constant 0 : index
    %c0_94 = arith.constant 0 : index
    %118 = vector.load %arg3[%c8_92, %c0_93, %c0_94] : memref<9x128x64xbf16, #tpu.memory_space<vmem>>, vector<1x128x64xbf16>
    %119 = vector.shape_cast %118 : vector<1x128x64xbf16> to vector<128x64xbf16>
    %cst_95 = arith.constant dense<0.000000e+00> : vector<144x64xf32>
    %120 = tpu.matmul %107, %119, %cst_95 {dimension_numbers = #tpu.dot_dimension_numbers<[1], [0], [0], [1], [0, 0, 1, 1], [], []>} : vector<144x128xbf16>, vector<128x64xbf16>, vector<144x64xf32> -> vector<144x64xf32>
    %121 = vector.extract_strided_slice %120 {offsets = [2, 0], sizes = [128, 64], strides = [1, 1]} : vector<144x64xf32> to vector<128x64xf32>
    %122 = arith.addf %117, %121 : vector<128x64xf32>
    %123 = vector.broadcast %0 : vector<1x64xf32> to vector<128x64xf32>
    %124 = arith.addf %122, %123 : vector<128x64xf32>
    %cst_96 = arith.constant 0.000000e+00 : f32
    %125 = vector.broadcast %cst_96 : f32 to vector<128x64xf32>
    %126 = arith.cmpf oge, %124, %125 : vector<128x64xf32>
    %cst_97 = arith.constant 2.000000e-01 : f32
    %127 = vector.broadcast %cst_97 : f32 to vector<128x64xf32>
    %128 = arith.mulf %127, %124 : vector<128x64xf32>
    %129 = arith.select %126, %124, %128 : vector<128x64xi1>, vector<128x64xf32>
    %130 = vector.broadcast %1 : vector<1x64xf32> to vector<128x64xf32>
    %131 = arith.mulf %129, %130 : vector<128x64xf32>
    %cst_98 = arith.constant dense<0.000000e+00> : vector<128xf32>
    %132 = vector.multi_reduction <add>, %131, %cst_98 [1] : vector<128x64xf32> to vector<128xf32>
    %133 = vector.shape_cast %132 : vector<128xf32> to vector<128x1xf32>
    %134 = vector.broadcast %2 : f32 to vector<128x1xf32>
    %135 = arith.addf %133, %134 : vector<128x1xf32>
    %c0_99 = arith.constant 0 : index
    %c0_100 = arith.constant 0 : index
    %c128_101 = arith.constant 128 : index
    %c0_102 = arith.constant 0 : index
    %136 = vector.load %arg7[%c0_99, %c0_100, %c128_101, %c0_102] : memref<1x1x256x1xf32, #tpu.memory_space<vmem>>, vector<1x1x128x1xf32>
    %137 = vector.shape_cast %136 : vector<1x1x128x1xf32> to vector<128x1xf32>
    %138 = vector.shape_cast %135 : vector<128x1xf32> to vector<1x1x128x1xf32>
    tpu.vector_store %arg7[%c0_99, %c0_100, %c128_101, %c0_102], %138 {strides = array<i32>} : memref<1x1x256x1xf32, #tpu.memory_space<vmem>>, vector<1x1x128x1xf32>,
    return
  }
  func.func @transform_0(%arg0: i32, %arg1: i32) -> (i32, i32, i32, i32) {
    %c0_i32 = arith.constant 0 : i32
    %c0_i32_0 = arith.constant 0 : i32
    %c0_i32_1 = arith.constant 0 : i32
    return %arg0, %arg1, %c0_i32, %c0_i32_0 : i32, i32, i32, i32
  }
  func.func @transform_1(%arg0: i32, %arg1: i32) -> (i32, i32, i32) {
    %c0_i32 = arith.constant 0 : i32
    %c0_i32_0 = arith.constant 0 : i32
    %c0_i32_1 = arith.constant 0 : i32
    %c0_i32_2 = arith.constant 0 : i32
    return %c0_i32, %c0_i32_0, %c0_i32_1 : i32, i32, i32
  }
  func.func @transform_2(%arg0: i32, %arg1: i32) -> (i32, i32) {
    %c0_i32 = arith.constant 0 : i32
    %c0_i32_0 = arith.constant 0 : i32
    %c0_i32_1 = arith.constant 0 : i32
    return %c0_i32, %c0_i32_0 : i32, i32
  }
  func.func @transform_3(%arg0: i32, %arg1: i32) -> (i32, i32) {
    %c0_i32 = arith.constant 0 : i32
    %c0_i32_0 = arith.constant 0 : i32
    %c0_i32_1 = arith.constant 0 : i32
    return %c0_i32, %c0_i32_0 : i32, i32
  }
  func.func @transform_4(%arg0: i32, %arg1: i32) -> (i32, i32) {
    %c0_i32 = arith.constant 0 : i32
    %c0_i32_0 = arith.constant 0 : i32
    %c0_i32_1 = arith.constant 0 : i32
    return %c0_i32, %c0_i32_0 : i32, i32
  }
  func.func @transform_5(%arg0: i32, %arg1: i32) -> (i32, i32, i32, i32) {
    %c0_i32 = arith.constant 0 : i32
    %c0_i32_0 = arith.constant 0 : i32
    %c0_i32_1 = arith.constant 0 : i32
    return %arg0, %arg1, %c0_i32, %c0_i32_0 : i32, i32, i32, i32
  }
}

</mosaic_0001>

<llo_original>
// kernel: discriminator_forward.2
$region0: #{discriminator_forward.2}
  #allocation0 [shape = 'u32[]', space=smem, size = 0x4, offset = 0x4, fixed_abs, tag = 'smem constant byte address 0x4 - core index']
  #allocation1 [shape = 'u32[144,128]{1,0:T(1,128)}', space=vmem, size = 0x12000, scoped, tag = 'internal scratch']
  %s0 = inlined_call_operand.hbm [shape: bf16[512,160], index: 0, kind: input, shape index: {}]
  %s1 = inlined_call_operand.hbm [shape: bf16[160,128], index: 1, kind: input, shape index: {}]
  %s2 = inlined_call_operand.hbm [shape: f32[1,128], index: 2, kind: input, shape index: {}]
  %s3 = inlined_call_operand.hbm [shape: bf16[512,128], index: 3, kind: output, shape index: {}]
  %s4 = sld [smem:[#allocation0]]
  $region57: #{discriminator_forward.2} parent=0
    _
  %s6 = ssub.s32 1, %s4
  %s7 = scalar_select 0, %s6, %s4
  $region1: #{discriminator_forward.2} parent=0
    #allocation2 [shape = 'u8[262144]{0}', space=vmem, size = 0x40000, scoped, tag = 'input window, operand 0']
    #allocation3 [shape = 's32[2]{0}', space=sflag, size = 0x8, scoped, tag = 'scoped memory for discriminator_forward.2']
    #allocation4 [shape = 's32[2]{0}', space=sflag, size = 0x8, scoped, tag = 'scoped memory for discriminator_forward.2']
    #allocation5 [shape = 'u8[40960]{0}', space=vmem, size = 0xa000, scoped, tag = 'input window, operand 1, single buffered']
    #allocation6 [shape = 's32[1]{0}', space=sflag, size = 0x4, scoped, tag = 'scoped memory for discriminator_forward.2']
    #allocation7 [shape = 'u8[512]{0}', space=vmem, size = 0x400, scoped, tag = 'input window, operand 2, single buffered']
    #allocation8 [shape = 'u8[131072]{0}', space=vmem, size = 0x20000, scoped, tag = 'output window, operand 0']
    %8 = vsyncpa [#allocation3], 0
    %s9 = scalar_lea.sflag [#allocation3], 1
    %10 = vsyncpa %s9, 0
    %11 = vsyncpa [#allocation6], 0
    %12 = vsyncpa [#allocation4], 0
    %s13 = scalar_lea.sflag [#allocation4], 1
    %14 = vsyncpa %s13, 0
    loop: start=0, step=1, limit=4
    $region2: #{discriminator_forward.2} parent=1 // loop_pre_header
      _
    $region3: #{discriminator_forward.2} parent=1 // loop_header
      %s16 = sphi 0, %s20
      %p17 = scmp.ge.s32.totalorder %s16, 4
      %s26 = sphi 0, %s28
      %s29 = sphi 0, %s26
      %s30 = sphi 0, %s29
      %s46 = sphi 0, %s30
      %s50 = sphi 0, %s50
      %s52 = sphi 0, %s50
      %s53 = sphi 0, %s52
      %s67 = sphi 0, %s53
      %s71 = sphi 0, %s71
      %s73 = sphi 0, %s71
      %s74 = sphi 0, %s73
      %s88 = sphi 0, %s74
      %s94 = sphi 0, %s96
      %s97 = sphi 0, %s94
      %s98 = sphi 0, %s97
      %s114 = sphi 0, %s98
    $region4: #{discriminator_forward.2} parent=1 // loop_header_branch
      %19 = sbr.rel (%p17) target = $region8
    $region5: #{discriminator_forward.2} parent=1 // loop_body
      %s21 = ssub.s32 %s16, 1
      %s22 = ssub.s32 %s16, 2
      %s23 = sadd.s32 %s16, 1
      %s24 = ssub.s32 %s16, %s23
      %p25 = scmp.eq.s32.totalorder %s24, 0
      %s27 = sadd.s32 %s26, 1
      %s28 = scalar_select %p25, %s26, %s27
      %p31 = pneg %p25
      %p32 = scmp.eq.s32.totalorder %s16, 1
      %p33 = por %p31, %p32
      %p34 = scmp.ne.s32.totalorder %s26, %s29
      %p35 = scmp.eq.s32.totalorder %s16, 0
      %p36 = por %p34, %p35
      %p37 = scmp.ne.s32.totalorder %s26, %s29
      %p38 = scmp.eq.s32.totalorder %s21, 1
      %p39 = por %p37, %p38
      %p40 = scmp.ne.s32.totalorder %s29, %s30
      %p41 = scmp.eq.s32.totalorder %s21, 0
      %p42 = por %p40, %p41
      %p43 = scmp.ne.s32.totalorder %s29, %s30
      %p44 = scmp.eq.s32.totalorder %s22, 1
      %p45 = por %p43, %p44
      %p47 = scmp.ne.s32.totalorder %s30, %s46
      %p48 = scmp.eq.s32.totalorder %s22, 0
      %p49 = por %p47, %p48
      %s51 = sadd.s32 %s50, 1
      %p54 = scmp.eq.s32.totalorder %s16, 1
      %p55 = scmp.ne.s32.totalorder %s50, %s52
      %p56 = scmp.eq.s32.totalorder %s16, 0
      %p57 = por %p55, %p56
      %p58 = scmp.ne.s32.totalorder %s50, %s52
      %p59 = scmp.eq.s32.totalorder %s21, 1
      %p60 = por %p58, %p59
      %p61 = scmp.ne.s32.totalorder %s52, %s53
      %p62 = scmp.eq.s32.totalorder %s21, 0
      %p63 = por %p61, %p62
      %p64 = scmp.ne.s32.totalorder %s52, %s53
      %p65 = scmp.eq.s32.totalorder %s22, 1
      %p66 = por %p64, %p65
      %p68 = scmp.ne.s32.totalorder %s53, %s67
      %p69 = scmp.eq.s32.totalorder %s22, 0
      %p70 = por %p68, %p69
      %s72 = sadd.s32 %s71, 1
      %p75 = scmp.eq.s32.totalorder %s16, 1
      %p76 = scmp.ne.s32.totalorder %s71, %s73
      %p77 = scmp.eq.s32.totalorder %s16, 0
      %p78 = por %p76, %p77
      %p79 = scmp.ne.s32.totalorder %s71, %s73
      %p80 = scmp.eq.s32.totalorder %s21, 1
      %p81 = por %p79, %p80
      %p82 = scmp.ne.s32.totalorder %s73, %s74
      %p83 = scmp.eq.s32.totalorder %s21, 0
      %p84 = por %p82, %p83
      %p85 = scmp.ne.s32.totalorder %s73, %s74
      %p86 = scmp.eq.s32.totalorder %s22, 1
      %p87 = por %p85, %p86
      %p89 = scmp.ne.s32.totalorder %s74, %s88
      %p90 = scmp.eq.s32.totalorder %s22, 0
      %p91 = por %p89, %p90
      %s92 = ssub.s32 %s16, %s23
      %p93 = scmp.eq.s32.totalorder %s92, 0
      %s95 = sadd.s32 %s94, 1
      %s96 = scalar_select %p93, %s94, %s95
      %p99 = pneg %p93
      %p100 = scmp.eq.s32.totalorder %s16, 1
      %p101 = por %p99, %p100
      %p102 = scmp.ne.s32.totalorder %s94, %s97
      %p103 = scmp.eq.s32.totalorder %s16, 0
      %p104 = por %p102, %p103
      %p105 = scmp.ne.s32.totalorder %s94, %s97
      %p106 = scmp.eq.s32.totalorder %s21, 1
      %p107 = por %p105, %p106
      %p108 = scmp.ne.s32.totalorder %s97, %s98
      %p109 = scmp.eq.s32.totalorder %s21, 0
      %p110 = por %p108, %p109
      %p111 = scmp.ne.s32.totalorder %s97, %s98
      %p112 = scmp.eq.s32.totalorder %s22, 1
      %p113 = por %p111, %p112
      %p115 = scmp.ne.s32.totalorder %s98, %s114
      %p116 = scmp.eq.s32.totalorder %s22, 0
      %p117 = por %p115, %p116
      %p118 = scmp.le.s32.totalorder 1, %s16
      %p119 = scmp.lt.s32.totalorder %s16, 3
      %p120 = pnand %p118, %p119
      %p121 = pneg %p120
      // Predicated region
      $region9: #{discriminator_forward.2} parent=5 // pred_check
        _
      $region10: #{discriminator_forward.2} parent=5 // pred_check_branch
        %123 = sbr.rel (%p120) target = $region12
      $region11: #{discriminator_forward.2} parent=5 // pred_region
        %s124 = ssub.s32 %s16, 1
        // Predicated region
        $region13: #{discriminator_forward.2} parent=11 // pred_check
          %p125 = pneg %p63
        $region14: #{discriminator_forward.2} parent=11 // pred_check_branch
          %127 = sbr.rel (%p125) target = $region16
        $region15: #{discriminator_forward.2} parent=11 // pred_region
          %s129 = ssub.s32 1280, 1280
          %130 = vsyncadd [#allocation6], %s129
          %s131 = sshll.u32 [#allocation5], 4
          %s132 = int_to_ptr.vmem [resolvable:$true] %s131
          %137 = dma.hbm_to_vmem [thread:$0]  %s1, 1280, %s132, [#allocation6], 64, 64, 4
        $region16: #{discriminator_forward.2} parent=11 // pred_fallthru
          _
        // Predicated region
        $region17: #{discriminator_forward.2} parent=11 // pred_check
          %p138 = pneg %p84
        $region18: #{discriminator_forward.2} parent=11 // pred_check_branch
          %140 = sbr.rel (%p138) target = $region20
        $region19: #{discriminator_forward.2} parent=11 // pred_region
          %s142 = ssub.s32 16, 16
          %143 = vsyncadd [#allocation6], %s142
          %s145 = sshll.u32 [#allocation7], 4
          %s146 = int_to_ptr.vmem [resolvable:$true] %s145
          %148 = dma.hbm_to_vmem [thread:$0]  %s2, 16, %s146, [#allocation6]
        $region20: #{discriminator_forward.2} parent=11 // pred_fallthru
          _
      $region12: #{discriminator_forward.2} parent=5 // pred_fallthru
        _
      %p149 = scmp.lt.s32.totalorder %s16, 2
      // Predicated region
      $region21: #{discriminator_forward.2} parent=5 // pred_check
        %p150 = pneg %p149
      $region22: #{discriminator_forward.2} parent=5 // pred_check_branch
        %152 = sbr.rel (%p150) target = $region24
      $region23: #{discriminator_forward.2} parent=5 // pred_region
        // Predicated region
        $region25: #{discriminator_forward.2} parent=23 // pred_check
          %p153 = pneg %p36
        $region26: #{discriminator_forward.2} parent=23 // pred_check_branch
          %155 = sbr.rel (%p153) target = $region28
        $region27: #{discriminator_forward.2} parent=23 // pred_region
          %s156 = sand.u32 %s26, 1
          %s157 = scalar_lea.sflag [#allocation3], %s156
          %s158 = sand.u32 %s26, 1
          %s159 = smul.addr %s158, 256
          %s160 = scalar_lea.vmem [#allocation2], %s159
          %s161 = smul.u32 32, %s16
          %s163 = ssub.s32 4096, 4096
          %164 = vsyncadd %s157, %s163
          %s165 = smul.addr %s161, 2
          %s166 = smul.addr %s165, 64
          %s167 = scalar_lea.hbm %s0, %s166
          %s168 = sshll.u32 %s160, 4
          %s169 = int_to_ptr.vmem [resolvable:$true] %s168
          %174 = dma.hbm_to_vmem [thread:$0]  %s167, 4096, %s169, %s157, 128, 128, 8
        $region28: #{discriminator_forward.2} parent=23 // pred_fallthru
          _
      $region24: #{discriminator_forward.2} parent=5 // pred_fallthru
        _
      %p175 = scmp.le.s32.totalorder 1, %s16
      %p176 = scmp.lt.s32.totalorder %s16, 3
      %p177 = pnand %p175, %p176
      %p178 = pneg %p177
      // Predicated region
      $region29: #{discriminator_forward.2} parent=5 // pred_check
        _
      $region30: #{discriminator_forward.2} parent=5 // pred_check_branch
        %180 = sbr.rel (%p177) target = $region32
      $region31: #{discriminator_forward.2} parent=5 // pred_region
        %s181 = ssub.s32 %s16, 1
        %s182 = sand.u32 %s29, 1
        %s183 = scalar_lea.sflag [#allocation3], %s182
        %s184 = sand.u32 %s29, 1
        %s185 = smul.addr %s184, 256
        %s186 = scalar_lea.vmem [#allocation2], %s185
        // Predicated region
        $region33: #{discriminator_forward.2} parent=31 // pred_check
          %p187 = pneg %p42
        $region34: #{discriminator_forward.2} parent=31 // pred_check_branch
          %189 = sbr.rel (%p187) target = $region36
        $region35: #{discriminator_forward.2} parent=31 // pred_region
          %190 = dma.done %s183, 4096
        $region36: #{discriminator_forward.2} parent=31 // pred_fallthru
          _
        // Predicated region
        $region37: #{discriminator_forward.2} parent=31 // pred_check
          %p191 = pneg %p63
        $region38: #{discriminator_forward.2} parent=31 // pred_check_branch
          %193 = sbr.rel (%p191) target = $region40
        $region39: #{discriminator_forward.2} parent=31 // pred_region
          %194 = dma.done [#allocation6], 1280
        $region40: #{discriminator_forward.2} parent=31 // pred_fallthru
          _
        // Predicated region
        $region41: #{discriminator_forward.2} parent=31 // pred_check
          %p195 = pneg %p84
        $region42: #{discriminator_forward.2} parent=31 // pred_check_branch
          %197 = sbr.rel (%p195) target = $region44
        $region43: #{discriminator_forward.2} parent=31 // pred_region
          %198 = dma.done [#allocation6], 16
        $region44: #{discriminator_forward.2} parent=31 // pred_fallthru
          _
        %s199 = sand.u32 %s29, 1
        %s200 = scalar_lea.sflag [#allocation3], %s199
        %s201 = sand.u32 %s29, 1
        %s202 = smul.addr %s201, 256
        %s203 = scalar_lea.vmem [#allocation2], %s202
        %p204 = pneg %p42
        %p205 = pneg %p39
        %p206 = pneg %p63
        %p207 = pneg %p60
        %p208 = pneg %p84
        %p209 = pneg %p81
        %p210 = pneg %p110
        %p211 = pneg %p107
        %s212 = sand.u32 %s97, 1
        %s213 = scalar_lea.sflag [#allocation4], %s212
        %s214 = sand.u32 %s97, 1
        %s215 = smul.addr %s214, 128
        %s216 = scalar_lea.vmem [#allocation8], %s215
        %s217 = smul.u32 32, %s21
        %s218 = smul.u32 32, %s21
        %v220 = vld [vmem:[%s186] sm:$0xff]
        %v221 = vld [vmem:[%s186 + $0x8] sm:$0xff]
        %v222 = vld [vmem:[%s186 + $0x10] sm:$0xff]
        %v223 = vld [vmem:[%s186 + $0x18] sm:$0xff]
        %v224 = vld [vmem:[%s186 + $0x20] sm:$0xff]
        %v225 = vld [vmem:[%s186 + $0x28] sm:$0xff]
        %v226 = vld [vmem:[%s186 + $0x30] sm:$0xff]
        %v227 = vld [vmem:[%s186 + $0x38] sm:$0xff]
        %v228 = vld [vmem:[%s186 + $0x40] sm:$0xff]
        %v229 = vld [vmem:[%s186 + $0x48] sm:$0xff]
        %v230 = vld [vmem:[%s186 + $0x50] sm:$0xff]
        %v231 = vld [vmem:[%s186 + $0x58] sm:$0xff]
        %v232 = vld [vmem:[%s186 + $0x60] sm:$0xff]
        %v233 = vld [vmem:[%s186 + $0x68] sm:$0xff]
        %v234 = vld [vmem:[%s186 + $0x70] sm:$0xff]
        %v235 = vld [vmem:[%s186 + $0x78] sm:$0xff]
        %v236 = vld [vmem:[%s186 + $0x80] sm:$0xff]
        %v237 = vld [vmem:[%s186 + $0x88] sm:$0xff]
        %v238 = vld [vmem:[%s186 + $0x90] sm:$0xff]
        %v239 = vld [vmem:[%s186 + $0x98] sm:$0xff]
        %v240 = vld [vmem:[%s186 + $0xa0] sm:$0xff]
        %v241 = vld [vmem:[%s186 + $0xa8] sm:$0xff]
        %v242 = vld [vmem:[%s186 + $0xb0] sm:$0xff]
        %v243 = vld [vmem:[%s186 + $0xb8] sm:$0xff]
        %v244 = vld [vmem:[%s186 + $0xc0] sm:$0xff]
        %v245 = vld [vmem:[%s186 + $0xc8] sm:$0xff]
        %v246 = vld [vmem:[%s186 + $0xd0] sm:$0xff]
        %v247 = vld [vmem:[%s186 + $0xd8] sm:$0xff]
        %v248 = vld [vmem:[%s186 + $0xe0] sm:$0xff]
        %v249 = vld [vmem:[%s186 + $0xe8] sm:$0xff]
        %v250 = vld [vmem:[%s186 + $0xf0] sm:$0xff]
        %v251 = vld [vmem:[%s186 + $0xf8] sm:$0xff]
        %v252 = vld [vmem:[#allocation5] sm:$0xf]
        %v253 = vld [vmem:[#allocation5 + $0x4] sm:$0xf]
        %v254 = vld [vmem:[#allocation5 + $0x8] sm:$0xf]
        %v255 = vld [vmem:[#allocation5 + $0xc] sm:$0xf]
        %v256 = vld [vmem:[#allocation5 + $0x10] sm:$0xf]
        %v257 = vld [vmem:[#allocation5 + $0x14] sm:$0xf]
        %v258 = vld [vmem:[#allocation5 + $0x18] sm:$0xf]
        %v259 = vld [vmem:[#allocation5 + $0x1c] sm:$0xf]
        %v260 = vld [vmem:[#allocation5 + $0x20] sm:$0xf]
        %v261 = vld [vmem:[#allocation5 + $0x24] sm:$0xf]
        %v262 = vld [vmem:[#allocation5 + $0x28] sm:$0xf]
        %v263 = vld [vmem:[#allocation5 + $0x2c] sm:$0xf]
        %v264 = vld [vmem:[#allocation5 + $0x30] sm:$0xf]
        %v265 = vld [vmem:[#allocation5 + $0x34] sm:$0xf]
        %v266 = vld [vmem:[#allocation5 + $0x38] sm:$0xf]
        %v267 = vld [vmem:[#allocation5 + $0x3c] sm:$0xf]
        %v268 = vld [vmem:[#allocation5 + $0x40] sm:$0xf]
        %v269 = vld [vmem:[#allocation5 + $0x44] sm:$0xf]
        %v270 = vld [vmem:[#allocation5 + $0x48] sm:$0xf]
        %v271 = vld [vmem:[#allocation5 + $0x4c] sm:$0xf]
        %v272 = vld [vmem:[#allocation7] sm:$0x1]
        %v274 = vlaneseq
        %v275 = vshrl.u32 %v274, 7
        %v276 = vsub.s32 0, %v275
        %v277 = vrot.slane %v272, %v276
        %v311 = vunpack.c.l.b16 %v220
        %v312 = vunpack.c.h.b16 %v220
        %v313 = vunpack.c.l.b16 %v221
        %v314 = vunpack.c.h.b16 %v221
        %v315 = vunpack.c.l.b16 %v222
        %v316 = vunpack.c.h.b16 %v222
        %v317 = vunpack.c.l.b16 %v223
        %v318 = vunpack.c.h.b16 %v223
        %v319 = vunpack.c.l.b16 %v224
        %v320 = vunpack.c.h.b16 %v224
        %v321 = vunpack.c.l.b16 %v225
        %v322 = vunpack.c.h.b16 %v225
        %v323 = vunpack.c.l.b16 %v226
        %v324 = vunpack.c.h.b16 %v226
        %v325 = vunpack.c.l.b16 %v227
        %v326 = vunpack.c.h.b16 %v227
        %v327 = vunpack.c.l.b16 %v228
        %v328 = vunpack.c.h.b16 %v228
        %v329 = vunpack.c.l.b16 %v229
        %v330 = vunpack.c.h.b16 %v229
        %v331 = vunpack.c.l.b16 %v230
        %v332 = vunpack.c.h.b16 %v230
        %v333 = vunpack.c.l.b16 %v231
        %v334 = vunpack.c.h.b16 %v231
        %v335 = vunpack.c.l.b16 %v232
        %v336 = vunpack.c.h.b16 %v232
        %v337 = vunpack.c.l.b16 %v233
        %v338 = vunpack.c.h.b16 %v233
        %v339 = vunpack.c.l.b16 %v234
        %v340 = vunpack.c.h.b16 %v234
        %v341 = vunpack.c.l.b16 %v235
        %v342 = vunpack.c.h.b16 %v235
        %v343 = vunpack.c.l.b16 %v236
        %v344 = vunpack.c.h.b16 %v236
        %v345 = vunpack.c.l.b16 %v237
        %v346 = vunpack.c.h.b16 %v237
        %v347 = vunpack.c.l.b16 %v238
        %v348 = vunpack.c.h.b16 %v238
        %v349 = vunpack.c.l.b16 %v239
        %v350 = vunpack.c.h.b16 %v239
        %v351 = vunpack.c.l.b16 %v240
        %v352 = vunpack.c.h.b16 %v240
        %v353 = vunpack.c.l.b16 %v241
        %v354 = vunpack.c.h.b16 %v241
        %v355 = vunpack.c.l.b16 %v242
        %v356 = vunpack.c.h.b16 %v242
        %v357 = vunpack.c.l.b16 %v243
        %v358 = vunpack.c.h.b16 %v243
        %v359 = vunpack.c.l.b16 %v244
        %v360 = vunpack.c.h.b16 %v244
        %v361 = vunpack.c.l.b16 %v245
        %v362 = vunpack.c.h.b16 %v245
        %v363 = vunpack.c.l.b16 %v246
        %v364 = vunpack.c.h.b16 %v246
        %v365 = vunpack.c.l.b16 %v247
        %v366 = vunpack.c.h.b16 %v247
        %v367 = vunpack.c.l.b16 %v248
        %v368 = vunpack.c.h.b16 %v248
        %v369 = vunpack.c.l.b16 %v249
        %v370 = vunpack.c.h.b16 %v249
        %v371 = vunpack.c.l.b16 %v250
        %v372 = vunpack.c.h.b16 %v250
        %v373 = vunpack.c.l.b16 %v251
        %v374 = vunpack.c.h.b16 %v251
        %v375 = vpack.c.b16 %v313, %v311
        %v376 = vpack.c.b16 %v314, %v312
        %v377 = vpack.c.b16 %v317, %v315
        %v378 = vpack.c.b16 %v318, %v316
        %v379 = vpack.c.b16 %v321, %v319
        %v380 = vpack.c.b16 %v322, %v320
        %v381 = vpack.c.b16 %v325, %v323
        %v382 = vpack.c.b16 %v326, %v324
        %v383 = vpack.c.b16 %v329, %v327
        %v384 = vpack.c.b16 %v330, %v328
        %v385 = vpack.c.b16 %v333, %v331
        %v386 = vpack.c.b16 %v334, %v332
        %v387 = vpack.c.b16 %v337, %v335
        %v388 = vpack.c.b16 %v338, %v336
        %v389 = vpack.c.b16 %v341, %v339
        %v390 = vpack.c.b16 %v342, %v340
        %v391 = vpack.c.b16 %v345, %v343
        %v392 = vpack.c.b16 %v346, %v344
        %v393 = vpack.c.b16 %v349, %v347
        %v394 = vpack.c.b16 %v350, %v348
        %v395 = vpack.c.b16 %v353, %v351
        %v396 = vpack.c.b16 %v354, %v352
        %v397 = vpack.c.b16 %v357, %v355
        %v398 = vpack.c.b16 %v358, %v356
        %v399 = vpack.c.b16 %v361, %v359
        %v400 = vpack.c.b16 %v362, %v360
        %v401 = vpack.c.b16 %v365, %v363
        %v402 = vpack.c.b16 %v366, %v364
        %v403 = vpack.c.b16 %v369, %v367
        %v404 = vpack.c.b16 %v370, %v368
        %v405 = vpack.c.b16 %v373, %v371
        %v406 = vpack.c.b16 %v374, %v372
        %v443 = vunpack.c.l.b16 %v252
        %v444 = vunpack.c.l.b16 %v253
        %v445 = vunpack.c.l.b16 %v254
        %v446 = vunpack.c.l.b16 %v255
        %v447 = vunpack.c.l.b16 %v256
        %v448 = vunpack.c.l.b16 %v257
        %v449 = vunpack.c.l.b16 %v258
        %v450 = vunpack.c.l.b16 %v259
        %v451 = vunpack.c.l.b16 %v260
        %v452 = vunpack.c.l.b16 %v261
        %v453 = vunpack.c.l.b16 %v262
        %v454 = vunpack.c.l.b16 %v263
        %v455 = vunpack.c.l.b16 %v264
        %v456 = vunpack.c.l.b16 %v265
        %v457 = vunpack.c.l.b16 %v266
        %v458 = vunpack.c.l.b16 %v267
        %v459 = vunpack.c.l.b16 %v268
        %v460 = vunpack.c.l.b16 %v269
        %v461 = vunpack.c.l.b16 %v270
        %v462 = vunpack.c.l.b16 %v271
        %v463 = vpack.c.b16 %v444, %v443
        %v464 = vpack.c.b16 %v446, %v445
        %v465 = vpack.c.b16 %v448, %v447
        %v466 = vpack.c.b16 %v450, %v449
        %v467 = vpack.c.b16 %v452, %v451
        %v468 = vpack.c.b16 %v454, %v453
        %v469 = vpack.c.b16 %v456, %v455
        %v470 = vpack.c.b16 %v458, %v457
        %v471 = vpack.c.b16 %v460, %v459
        %v472 = vpack.c.b16 %v462, %v461
        %vm483 = vcmask 261120
        %v485 = vsel %vm483, %v376, 0
        %v488 = vsel %vm483, %v378, 0
        %v491 = vsel %vm483, %v380, 0
        %v494 = vsel %vm483, %v382, 0
        %v497 = vsel %vm483, %v384, 0
        %v500 = vsel %vm483, %v386, 0
        %v503 = vsel %vm483, %v388, 0
        %v506 = vsel %vm483, %v390, 0
        %v509 = vsel %vm483, %v392, 0
        %v512 = vsel %vm483, %v394, 0
        %v515 = vsel %vm483, %v396, 0
        %v518 = vsel %vm483, %v398, 0
        %v521 = vsel %vm483, %v400, 0
        %v524 = vsel %vm483, %v402, 0
        %v527 = vsel %vm483, %v404, 0
        %v530 = vsel %vm483, %v406, 0
        %532 = vmatprep.subr.bf16.mxu0 0
        %533 = vmatpush1.bf16.msra.mxu0 %v463
        %534 = vmatprep.subr.bf16.mxu0 0
        %535 = vmatpush1.bf16.msra.mxu0 %v464
        %536 = vmatprep.subr.bf16.mxu0 0
        %537 = vmatpush1.bf16.msra.mxu0 %v465
        %538 = vmatprep.subr.bf16.mxu0 0
        %539 = vmatpush1.bf16.msra.mxu0 %v466
        %540 = vmatprep.subr.bf16.mxu0 0
        %541 = vmatpush1.bf16.msra.mxu0 %v467
        %542 = vmatprep.subr.bf16.mxu0 0
        %543 = vmatpush1.bf16.msra.mxu0 %v468
        %544 = vmatprep.subr.bf16.mxu0 0
        %545 = vmatpush1.bf16.msra.mxu0 %v469
        %546 = vmatprep.subr.bf16.mxu0 0
        %547 = vmatpush1.bf16.msra.mxu0 %v470
        %548 = vmatprep.subr.bf16.mxu0 0
        %549 = vmatpush1.bf16.msra.mxu0 %v471
        %550 = vmatprep.subr.bf16.mxu0 0
        %551 = vmatpush1.bf16.msra.mxu0 %v472
        %552 = vmatprep.subr.bf16.mxu0 0
        %553 = vmatpush1.bf16.msra.mxu0 0
        %554 = vmatprep.subr.bf16.mxu0 0
        %555 = vmatpush1.bf16.msra.mxu0 0
        %556 = vmatprep.subr.bf16.mxu0 0
        %557 = vmatpush1.bf16.msra.mxu0 0
        %558 = vmatprep.subr.bf16.mxu0 0
        %559 = vmatpush1.bf16.msra.mxu0 0
        %560 = vmatprep.subr.bf16.mxu0 0
        %561 = vmatpush1.bf16.msra.mxu0 0
        %562 = vmatprep.subr.bf16.mxu0 0
        %563 = vmatpush1.bf16.msra.mxu0 0
        %564 = vmatprep.mubr.bf16.mxu0 %v485
        %565 = vmatmul.mubr.bf16.gmra.mrb[0].mxu0 %v375
        %v566 = vpop.f32.mrb[0].mxu0
        %v567 = vadd.f32 %v277, %v566
        %v568 = vpop.f32.mrb[0].mxu0
        %v569 = vpop.f32.mrb[0].mxu0
        %v570 = vadd.f32 %v277, %v569
        %v571 = vpop.f32.mrb[0].mxu0
        %572 = vmatprep.mubr.bf16.mxu0 %v488
        %573 = vmatmul.mubr.bf16.gmra.mrb[0].mxu0 %v377
        %v574 = vpop.f32.mrb[0].mxu0
        %v575 = vadd.f32 %v277, %v574
        %v576 = vpop.f32.mrb[0].mxu0
        %v577 = vpop.f32.mrb[0].mxu0
        %v578 = vadd.f32 %v277, %v577
        %v579 = vpop.f32.mrb[0].mxu0
        %580 = vmatprep.mubr.bf16.mxu0 %v491
        %581 = vmatmul.mubr.bf16.gmra.mrb[0].mxu0 %v379
        %v582 = vpop.f32.mrb[0].mxu0
        %v583 = vadd.f32 %v277, %v582
        %v584 = vpop.f32.mrb[0].mxu0
        %v585 = vpop.f32.mrb[0].mxu0
        %v586 = vadd.f32 %v277, %v585
        %v587 = vpop.f32.mrb[0].mxu0
        %588 = vmatprep.mubr.bf16.mxu0 %v494
        %589 = vmatmul.mubr.bf16.gmra.mrb[0].mxu0 %v381
        %v590 = vpop.f32.mrb[0].mxu0
        %v591 = vadd.f32 %v277, %v590
        %v592 = vpop.f32.mrb[0].mxu0
        %v593 = vpop.f32.mrb[0].mxu0
        %v594 = vadd.f32 %v277, %v593
        %v595 = vpop.f32.mrb[0].mxu0
        %596 = vmatprep.mubr.bf16.mxu0 %v497
        %597 = vmatmul.mubr.bf16.gmra.mrb[0].mxu0 %v383
        %v598 = vpop.f32.mrb[0].mxu0
        %v599 = vadd.f32 %v277, %v598
        %v600 = vpop.f32.mrb[0].mxu0
        %v601 = vpop.f32.mrb[0].mxu0
        %v602 = vadd.f32 %v277, %v601
        %v603 = vpop.f32.mrb[0].mxu0
        %604 = vmatprep.mubr.bf16.mxu0 %v500
        %605 = vmatmul.mubr.bf16.gmra.mrb[0].mxu0 %v385
        %v606 = vpop.f32.mrb[0].mxu0
        %v607 = vadd.f32 %v277, %v606
        %v608 = vpop.f32.mrb[0].mxu0
        %v609 = vpop.f32.mrb[0].mxu0
        %v610 = vadd.f32 %v277, %v609
        %v611 = vpop.f32.mrb[0].mxu0
        %612 = vmatprep.mubr.bf16.mxu0 %v503
        %613 = vmatmul.mubr.bf16.gmra.mrb[0].mxu0 %v387
        %v614 = vpop.f32.mrb[0].mxu0
        %v615 = vadd.f32 %v277, %v614
        %v616 = vpop.f32.mrb[0].mxu0
        %v617 = vpop.f32.mrb[0].mxu0
        %v618 = vadd.f32 %v277, %v617
        %v619 = vpop.f32.mrb[0].mxu0
        %620 = vmatprep.mubr.bf16.mxu0 %v506
        %621 = vmatmul.mubr.bf16.gmra.mrb[0].mxu0 %v389
        %v622 = vpop.f32.mrb[0].mxu0
        %v623 = vadd.f32 %v277, %v622
        %v624 = vpop.f32.mrb[0].mxu0
        %v625 = vpop.f32.mrb[0].mxu0
        %v626 = vadd.f32 %v277, %v625
        %v627 = vpop.f32.mrb[0].mxu0
        %628 = vmatprep.mubr.bf16.mxu0 %v509
        %629 = vmatmul.mubr.bf16.gmra.mrb[0].mxu0 %v391
        %v630 = vpop.f32.mrb[0].mxu0
        %v631 = vadd.f32 %v277, %v630
        %v632 = vpop.f32.mrb[0].mxu0
        %v633 = vpop.f32.mrb[0].mxu0
        %v634 = vadd.f32 %v277, %v633
        %v635 = vpop.f32.mrb[0].mxu0
        %636 = vmatprep.mubr.bf16.mxu0 %v512
        %637 = vmatmul.mubr.bf16.gmra.mrb[0].mxu0 %v393
        %v638 = vpop.f32.mrb[0].mxu0
        %v639 = vadd.f32 %v277, %v638
        %v640 = vpop.f32.mrb[0].mxu0
        %v641 = vpop.f32.mrb[0].mxu0
        %v642 = vadd.f32 %v277, %v641
        %v643 = vpop.f32.mrb[0].mxu0
        %644 = vmatprep.mubr.bf16.mxu0 %v515
        %645 = vmatmul.mubr.bf16.gmra.mrb[0].mxu0 %v395
        %v646 = vpop.f32.mrb[0].mxu0
        %v647 = vadd.f32 %v277, %v646
        %v648 = vpop.f32.mrb[0].mxu0
        %v649 = vpop.f32.mrb[0].mxu0
        %v650 = vadd.f32 %v277, %v649
        %v651 = vpop.f32.mrb[0].mxu0
        %652 = vmatprep.mubr.bf16.mxu0 %v518
        %653 = vmatmul.mubr.bf16.gmra.mrb[0].mxu0 %v397
        %v654 = vpop.f32.mrb[0].mxu0
        %v655 = vadd.f32 %v277, %v654
        %v656 = vpop.f32.mrb[0].mxu0
        %v657 = vpop.f32.mrb[0].mxu0
        %v658 = vadd.f32 %v277, %v657
        %v659 = vpop.f32.mrb[0].mxu0
        %660 = vmatprep.mubr.bf16.mxu0 %v521
        %661 = vmatmul.mubr.bf16.gmra.mrb[0].mxu0 %v399
        %v662 = vpop.f32.mrb[0].mxu0
        %v663 = vadd.f32 %v277, %v662
        %v664 = vpop.f32.mrb[0].mxu0
        %v665 = vpop.f32.mrb[0].mxu0
        %v666 = vadd.f32 %v277, %v665
        %v667 = vpop.f32.mrb[0].mxu0
        %668 = vmatprep.mubr.bf16.mxu0 %v524
        %669 = vmatmul.mubr.bf16.gmra.mrb[0].mxu0 %v401
        %v670 = vpop.f32.mrb[0].mxu0
        %v671 = vadd.f32 %v277, %v670
        %v672 = vpop.f32.mrb[0].mxu0
        %v673 = vpop.f32.mrb[0].mxu0
        %v674 = vadd.f32 %v277, %v673
        %v675 = vpop.f32.mrb[0].mxu0
        %676 = vmatprep.mubr.bf16.mxu0 %v527
        %677 = vmatmul.mubr.bf16.gmra.mrb[0].mxu0 %v403
        %v678 = vpop.f32.mrb[0].mxu0
        %v679 = vadd.f32 %v277, %v678
        %v680 = vpop.f32.mrb[0].mxu0
        %v681 = vpop.f32.mrb[0].mxu0
        %v682 = vadd.f32 %v277, %v681
        %v683 = vpop.f32.mrb[0].mxu0
        %684 = vmatprep.mubr.bf16.mxu0 %v530
        %685 = vmatmul.mubr.bf16.gmra.mrb[0].mxu0 %v405
        %v686 = vpop.f32.mrb[0].mxu0
        %v687 = vadd.f32 %v277, %v686
        %v688 = vpop.f32.mrb[0].mxu0
        %v689 = vpop.f32.mrb[0].mxu0
        %v690 = vadd.f32 %v277, %v689
        %v691 = vpop.f32.mrb[0].mxu0
        %692 = vdwg.mxu0
        %vm693 = vcmp.ge.f32.partialorder %v567, 0.0
        %vm694 = vcmp.ge.f32.partialorder %v570, 0.0
        %vm695 = vcmp.ge.f32.partialorder %v575, 0.0
        %vm696 = vcmp.ge.f32.partialorder %v578, 0.0
        %vm697 = vcmp.ge.f32.partialorder %v583, 0.0
        %vm698 = vcmp.ge.f32.partialorder %v586, 0.0
        %vm699 = vcmp.ge.f32.partialorder %v591, 0.0
        %vm700 = vcmp.ge.f32.partialorder %v594, 0.0
        %vm701 = vcmp.ge.f32.partialorder %v599, 0.0
        %vm702 = vcmp.ge.f32.partialorder %v602, 0.0
        %vm703 = vcmp.ge.f32.partialorder %v607, 0.0
        %vm704 = vcmp.ge.f32.partialorder %v610, 0.0
        %vm705 = vcmp.ge.f32.partialorder %v615, 0.0
        %vm706 = vcmp.ge.f32.partialorder %v618, 0.0
        %vm707 = vcmp.ge.f32.partialorder %v623, 0.0
        %vm708 = vcmp.ge.f32.partialorder %v626, 0.0
        %vm709 = vcmp.ge.f32.partialorder %v631, 0.0
        %vm710 = vcmp.ge.f32.partialorder %v634, 0.0
        %vm711 = vcmp.ge.f32.partialorder %v639, 0.0
        %vm712 = vcmp.ge.f32.partialorder %v642, 0.0
        %vm713 = vcmp.ge.f32.partialorder %v647, 0.0
        %vm714 = vcmp.ge.f32.partialorder %v650, 0.0
        %vm715 = vcmp.ge.f32.partialorder %v655, 0.0
        %vm716 = vcmp.ge.f32.partialorder %v658, 0.0
        %vm717 = vcmp.ge.f32.partialorder %v663, 0.0
        %vm718 = vcmp.ge.f32.partialorder %v666, 0.0
        %vm719 = vcmp.ge.f32.partialorder %v671, 0.0
        %vm720 = vcmp.ge.f32.partialorder %v674, 0.0
        %vm721 = vcmp.ge.f32.partialorder %v679, 0.0
        %vm722 = vcmp.ge.f32.partialorder %v682, 0.0
        %vm723 = vcmp.ge.f32.partialorder %v687, 0.0
        %vm724 = vcmp.ge.f32.partialorder %v690, 0.0
        %v725 = vmul.f32 %v567, 0.2
        %v726 = vmul.f32 %v570, 0.2
        %v727 = vmul.f32 %v575, 0.2
        %v728 = vmul.f32 %v578, 0.2
        %v729 = vmul.f32 %v583, 0.2
        %v730 = vmul.f32 %v586, 0.2
        %v731 = vmul.f32 %v591, 0.2
        %v732 = vmul.f32 %v594, 0.2
        %v733 = vmul.f32 %v599, 0.2
        %v734 = vmul.f32 %v602, 0.2
        %v735 = vmul.f32 %v607, 0.2
        %v736 = vmul.f32 %v610, 0.2
        %v737 = vmul.f32 %v615, 0.2
        %v738 = vmul.f32 %v618, 0.2
        %v739 = vmul.f32 %v623, 0.2
        %v740 = vmul.f32 %v626, 0.2
        %v741 = vmul.f32 %v631, 0.2
        %v742 = vmul.f32 %v634, 0.2
        %v743 = vmul.f32 %v639, 0.2
        %v744 = vmul.f32 %v642, 0.2
        %v745 = vmul.f32 %v647, 0.2
        %v746 = vmul.f32 %v650, 0.2
        %v747 = vmul.f32 %v655, 0.2
        %v748 = vmul.f32 %v658, 0.2
        %v749 = vmul.f32 %v663, 0.2
        %v750 = vmul.f32 %v666, 0.2
        %v751 = vmul.f32 %v671, 0.2
        %v752 = vmul.f32 %v674, 0.2
        %v753 = vmul.f32 %v679, 0.2
        %v754 = vmul.f32 %v682, 0.2
        %v755 = vmul.f32 %v687, 0.2
        %v756 = vmul.f32 %v690, 0.2
        %v757 = vsel %vm693, %v567, %v725
        %v758 = vsel %vm694, %v570, %v726
        %v759 = vsel %vm695, %v575, %v727
        %v760 = vsel %vm696, %v578, %v728
        %v761 = vsel %vm697, %v583, %v729
        %v762 = vsel %vm698, %v586, %v730
        %v763 = vsel %vm699, %v591, %v731
        %v764 = vsel %vm700, %v594, %v732
        %v765 = vsel %vm701, %v599, %v733
        %v766 = vsel %vm702, %v602, %v734
        %v767 = vsel %vm703, %v607, %v735
        %v768 = vsel %vm704, %v610, %v736
        %v769 = vsel %vm705, %v615, %v737
        %v770 = vsel %vm706, %v618, %v738
        %v771 = vsel %vm707, %v623, %v739
        %v772 = vsel %vm708, %v626, %v740
        %v773 = vsel %vm709, %v631, %v741
        %v774 = vsel %vm710, %v634, %v742
        %v775 = vsel %vm711, %v639, %v743
        %v776 = vsel %vm712, %v642, %v744
        %v777 = vsel %vm713, %v647, %v745
        %v778 = vsel %vm714, %v650, %v746
        %v779 = vsel %vm715, %v655, %v747
        %v780 = vsel %vm716, %v658, %v748
        %v781 = vsel %vm717, %v663, %v749
        %v782 = vsel %vm718, %v666, %v750
        %v783 = vsel %vm719, %v671, %v751
        %v784 = vsel %vm720, %v674, %v752
        %v785 = vsel %vm721, %v679, %v753
        %v786 = vsel %vm722, %v682, %v754
        %v787 = vsel %vm723, %v687, %v755
        %v788 = vsel %vm724, %v690, %v756
        %v789 = vpack.c.bf16 %v758, %v757
        %v790 = vpack.c.bf16 %v760, %v759
        %v791 = vpack.c.bf16 %v762, %v761
        %v792 = vpack.c.bf16 %v764, %v763
        %v793 = vpack.c.bf16 %v766, %v765
        %v794 = vpack.c.bf16 %v768, %v767
        %v795 = vpack.c.bf16 %v770, %v769
        %v796 = vpack.c.bf16 %v772, %v771
        %v797 = vpack.c.bf16 %v774, %v773
        %v798 = vpack.c.bf16 %v776, %v775
        %v799 = vpack.c.bf16 %v778, %v777
        %v800 = vpack.c.bf16 %v780, %v779
        %v801 = vpack.c.bf16 %v782, %v781
        %v802 = vpack.c.bf16 %v784, %v783
        %v803 = vpack.c.bf16 %v786, %v785
        %v804 = vpack.c.bf16 %v788, %v787
        %v821 = vunpack.c.l.b16 %v789
        %v822 = vunpack.c.h.b16 %v789
        %v823 = vunpack.c.l.b16 %v790
        %v824 = vunpack.c.h.b16 %v790
        %v825 = vunpack.c.l.b16 %v791
        %v826 = vunpack.c.h.b16 %v791
        %v827 = vunpack.c.l.b16 %v792
        %v828 = vunpack.c.h.b16 %v792
        %v829 = vunpack.c.l.b16 %v793
        %v830 = vunpack.c.h.b16 %v793
        %v831 = vunpack.c.l.b16 %v794
        %v832 = vunpack.c.h.b16 %v794
        %v833 = vunpack.c.l.b16 %v795
        %v834 = vunpack.c.h.b16 %v795
        %v835 = vunpack.c.l.b16 %v796
        %v836 = vunpack.c.h.b16 %v796
        %v837 = vunpack.c.l.b16 %v797
        %v838 = vunpack.c.h.b16 %v797
        %v839 = vunpack.c.l.b16 %v798
        %v840 = vunpack.c.h.b16 %v798
        %v841 = vunpack.c.l.b16 %v799
        %v842 = vunpack.c.h.b16 %v799
        %v843 = vunpack.c.l.b16 %v800
        %v844 = vunpack.c.h.b16 %v800
        %v845 = vunpack.c.l.b16 %v801
        %v846 = vunpack.c.h.b16 %v801
        %v847 = vunpack.c.l.b16 %v802
        %v848 = vunpack.c.h.b16 %v802
        %v849 = vunpack.c.l.b16 %v803
        %v850 = vunpack.c.h.b16 %v803
        %v851 = vunpack.c.l.b16 %v804
        %v852 = vunpack.c.h.b16 %v804
        %v853 = vpack.c.b16 %v821, %v821
        %v854 = vpack.c.b16 %v822, %v822
        %v855 = vpack.c.b16 %v823, %v823
        %v856 = vpack.c.b16 %v824, %v824
        %v857 = vpack.c.b16 %v825, %v825
        %v858 = vpack.c.b16 %v826, %v826
        %v859 = vpack.c.b16 %v827, %v827
        %v860 = vpack.c.b16 %v828, %v828
        %v861 = vpack.c.b16 %v829, %v829
        %v862 = vpack.c.b16 %v830, %v830
        %v863 = vpack.c.b16 %v831, %v831
        %v864 = vpack.c.b16 %v832, %v832
        %v865 = vpack.c.b16 %v833, %v833
        %v866 = vpack.c.b16 %v834, %v834
        %v867 = vpack.c.b16 %v835, %v835
        %v868 = vpack.c.b16 %v836, %v836
        %v869 = vpack.c.b16 %v837, %v837
        %v870 = vpack.c.b16 %v838, %v838
        %v871 = vpack.c.b16 %v839, %v839
        %v872 = vpack.c.b16 %v840, %v840
        %v873 = vpack.c.b16 %v841, %v841
        %v874 = vpack.c.b16 %v842, %v842
        %v875 = vpack.c.b16 %v843, %v843
        %v876 = vpack.c.b16 %v844, %v844
        %v877 = vpack.c.b16 %v845, %v845
        %v878 = vpack.c.b16 %v846, %v846
        %v879 = vpack.c.b16 %v847, %v847
        %v880 = vpack.c.b16 %v848, %v848
        %v881 = vpack.c.b16 %v849, %v849
        %v882 = vpack.c.b16 %v850, %v850
        %v883 = vpack.c.b16 %v851, %v851
        %v884 = vpack.c.b16 %v852, %v852
        %917 = vst [vmem:[%s216] sm:$0xf] %v853
        %918 = vst [vmem:[%s216 + $0x4] sm:$0xf] %v854
        %919 = vst [vmem:[%s216 + $0x8] sm:$0xf] %v855
        %920 = vst [vmem:[%s216 + $0xc] sm:$0xf] %v856
        %921 = vst [vmem:[%s216 + $0x10] sm:$0xf] %v857
        %922 = vst [vmem:[%s216 + $0x14] sm:$0xf] %v858
        %923 = vst [vmem:[%s216 + $0x18] sm:$0xf] %v859
        %924 = vst [vmem:[%s216 + $0x1c] sm:$0xf] %v860
        %925 = vst [vmem:[%s216 + $0x20] sm:$0xf] %v861
        %926 = vst [vmem:[%s216 + $0x24] sm:$0xf] %v862
        %927 = vst [vmem:[%s216 + $0x28] sm:$0xf] %v863
        %928 = vst [vmem:[%s216 + $0x2c] sm:$0xf] %v864
        %929 = vst [vmem:[%s216 + $0x30] sm:$0xf] %v865
        %930 = vst [vmem:[%s216 + $0x34] sm:$0xf] %v866
        %931 = vst [vmem:[%s216 + $0x38] sm:$0xf] %v867
        %932 = vst [vmem:[%s216 + $0x3c] sm:$0xf] %v868
        %933 = vst [vmem:[%s216 + $0x40] sm:$0xf] %v869
        %934 = vst [vmem:[%s216 + $0x44] sm:$0xf] %v870
        %935 = vst [vmem:[%s216 + $0x48] sm:$0xf] %v871
        %936 = vst [vmem:[%s216 + $0x4c] sm:$0xf] %v872
        %937 = vst [vmem:[%s216 + $0x50] sm:$0xf] %v873
        %938 = vst [vmem:[%s216 + $0x54] sm:$0xf] %v874
        %939 = vst [vmem:[%s216 + $0x58] sm:$0xf] %v875
        %940 = vst [vmem:[%s216 + $0x5c] sm:$0xf] %v876
        %941 = vst [vmem:[%s216 + $0x60] sm:$0xf] %v877
        %942 = vst [vmem:[%s216 + $0x64] sm:$0xf] %v878
        %943 = vst [vmem:[%s216 + $0x68] sm:$0xf] %v879
        %944 = vst [vmem:[%s216 + $0x6c] sm:$0xf] %v880
        %945 = vst [vmem:[%s216 + $0x70] sm:$0xf] %v881
        %946 = vst [vmem:[%s216 + $0x74] sm:$0xf] %v882
        %947 = vst [vmem:[%s216 + $0x78] sm:$0xf] %v883
        %948 = vst [vmem:[%s216 + $0x7c] sm:$0xf] %v884
        %s949 = sand.u32 %s97, 1
        %s950 = scalar_lea.sflag [#allocation4], %s949
        %s951 = sand.u32 %s97, 1
        %s952 = smul.addr %s951, 128
        %s953 = scalar_lea.vmem [#allocation8], %s952
        // Predicated region
        $region45: #{discriminator_forward.2} parent=31 // pred_check
          %p954 = pneg %p107
        $region46: #{discriminator_forward.2} parent=31 // pred_check_branch
          %956 = sbr.rel (%p954) target = $region48
        $region47: #{discriminator_forward.2} parent=31 // pred_region
          %s957 = smul.u32 32, %s21
          %s959 = ssub.s32 2048, 2048
          %960 = vsyncadd %s950, %s959
          %s961 = smul.addr %s957, 64
          %s962 = scalar_lea.hbm %s3, %s961
          %s963 = sshll.u32 %s953, 4
          %s964 = int_to_ptr.vmem [resolvable:$true] %s963
          %969 = dma.vmem_to_hbm [thread:$0]  %s964, 2048, %s962, %s950, 64, 64, 4
        $region48: #{discriminator_forward.2} parent=31 // pred_fallthru
          _
      $region32: #{discriminator_forward.2} parent=5 // pred_fallthru
        _
      %p970 = scmp.le.s32.totalorder 2, %s16
      // Predicated region
      $region49: #{discriminator_forward.2} parent=5 // pred_check
        %p971 = pneg %p970
      $region50: #{discriminator_forward.2} parent=5 // pred_check_branch
        %973 = sbr.rel (%p971) target = $region52
      $region51: #{discriminator_forward.2} parent=5 // pred_region
        %s974 = ssub.s32 %s16, 2
        // Predicated region
        $region53: #{discriminator_forward.2} parent=51 // pred_check
          %p975 = pneg %p113
        $region54: #{discriminator_forward.2} parent=51 // pred_check_branch
          %977 = sbr.rel (%p975) target = $region56
        $region55: #{discriminator_forward.2} parent=51 // pred_region
          %s978 = sand.u32 %s98, 1
          %s979 = scalar_lea.sflag [#allocation4], %s978
          %s980 = sand.u32 %s98, 1
          %s981 = smul.addr %s980, 128
          %s982 = scalar_lea.vmem [#allocation8], %s981
          %983 = dma.done %s979, 2048
        $region56: #{discriminator_forward.2} parent=51 // pred_fallthru
          _
      $region52: #{discriminator_forward.2} parent=5 // pred_fallthru
        _
    $region6: #{discriminator_forward.2} parent=1 // loop_footer
      %s20 = sadd.s32 1, %s16
    $region7: #{discriminator_forward.2} parent=1 // loop_footer_branch
      %15 = sbr.rel target = $region3
    $region8: #{discriminator_forward.2} parent=1 // loop_exit
      _
    %984 = vsyncpa [#allocation3], 1
    %s985 = scalar_lea.sflag [#allocation3], 1
    %986 = vsyncpa %s985, 1
    %987 = vsyncpa [#allocation6], 1
    %988 = vsyncpa [#allocation4], 1
    %s989 = scalar_lea.sflag [#allocation4], 1
    %990 = vsyncpa %s989, 1

// kernel: discriminator_forward.3
$region0: #{discriminator_forward.3}
  #allocation0 [shape = 'u32[]', space=smem, size = 0x4, offset = 0x4, fixed_abs, tag = 'smem constant byte address 0x4 - core index']
  #allocation1 [shape = 'u32[144,128]{1,0:T(1,128)}', space=vmem, size = 0x12000, scoped, tag = 'internal scratch']
  #allocation2 [shape = 'f32[1,1]{1,0:T(1,128)S(6)}', space=smem, size = 0x200, scoped, tag = 'scoped memory for discriminator_forward.3']
  %s0 = inlined_call_operand.hbm [shape: bf16[2,1,304,128], index: 0, kind: input, shape index: {}]
  %s1 = inlined_call_operand.hbm [shape: bf16[9,128,64], index: 1, kind: input, shape index: {}]
  %s2 = inlined_call_operand.hbm [shape: f32[1,64], index: 2, kind: input, shape index: {}]
  %s3 = inlined_call_operand.hbm [shape: f32[1,64], index: 3, kind: input, shape index: {}]
  %s4 = inlined_call_operand.<no memory space> [shape: f32[1,1], index: 4, kind: input, shape index: {}]
  %s5 = inlined_call_operand.hbm [shape: f32[2,1,256,1], index: 5, kind: output, shape index: {}]
  %s6 = sld [smem:[#allocation0]]
  $region69: #{discriminator_forward.3} parent=0
    _
  %s8 = ssub.s32 1, %s6
  %s9 = scalar_select 0, %s8, %s6
  %10 = sst [smem:[#allocation2]] %s4
  $region1: #{discriminator_forward.3} parent=0
    #allocation3 [shape = 'u8[155648]{0}', space=vmem, size = 0x26000, scoped, tag = 'input window, operand 0']
    #allocation4 [shape = 's32[2]{0}', space=sflag, size = 0x8, scoped, tag = 'scoped memory for discriminator_forward.3']
    #allocation5 [shape = 's32[2]{0}', space=sflag, size = 0x8, scoped, tag = 'scoped memory for discriminator_forward.3']
    #allocation6 [shape = 'u8[294912]{0}', space=vmem, size = 0x48000, scoped, tag = 'input window, operand 1, single buffered']
    #allocation7 [shape = 's32[1]{0}', space=sflag, size = 0x4, scoped, tag = 'scoped memory for discriminator_forward.3']
    #allocation8 [shape = 'u8[512]{0}', space=vmem, size = 0x400, scoped, tag = 'input window, operand 2, single buffered']
    #allocation9 [shape = 'u8[512]{0}', space=vmem, size = 0x400, scoped, tag = 'input window, operand 3, single buffered']
    #allocation10 [shape = 's32[1]{0}', space=sflag, size = 0x4, scoped, tag = 'scoped memory for discriminator_forward.3']
    #allocation11 [shape = 'u8[262144]{0}', space=vmem, size = 0x40000, scoped, tag = 'output window, operand 0']
    %11 = vsyncpa [#allocation4], 0
    %s12 = scalar_lea.sflag [#allocation4], 1
    %13 = vsyncpa %s12, 0
    %14 = vsyncpa [#allocation7], 0
    %15 = vsyncpa [#allocation10], 0
    %16 = vsyncpa [#allocation5], 0
    %s17 = scalar_lea.sflag [#allocation5], 1
    %18 = vsyncpa %s17, 0
    loop: start=0, step=1, limit=4
    $region2: #{discriminator_forward.3} parent=1 // loop_pre_header
      _
    $region3: #{discriminator_forward.3} parent=1 // loop_header
      %s20 = sphi 0, %s24
      %p21 = scmp.ge.s32.totalorder %s20, 4
      %s27 = sphi 0, %s39
      %s28 = sphi 0, %s35
      %s29 = sphi 0, %s27
      %s30 = sphi 0, %s28
      %s31 = sphi 0, %s29
      %s32 = sphi 0, %s30
      %s44 = sphi 0, %s46
      %s47 = sphi 0, %s44
      %s48 = sphi 0, %s47
      %s64 = sphi 0, %s48
      %s68 = sphi 0, %s68
      %s70 = sphi 0, %s68
      %s71 = sphi 0, %s70
      %s85 = sphi 0, %s71
      %s89 = sphi 0, %s89
      %s91 = sphi 0, %s89
      %s92 = sphi 0, %s91
      %s106 = sphi 0, %s92
      %s110 = sphi 0, %s110
      %s112 = sphi 0, %s110
      %s113 = sphi 0, %s112
      %s127 = sphi 0, %s113
      %s131 = sphi 0, %s131
      %s133 = sphi 0, %s131
      %s134 = sphi 0, %s133
      %s148 = sphi 0, %s134
      %s156 = sphi 0, %s158
      %s159 = sphi 0, %s156
      %s160 = sphi 0, %s159
      %s176 = sphi 0, %s160
    $region4: #{discriminator_forward.3} parent=1 // loop_header_branch
      %23 = sbr.rel (%p21) target = $region8
    $region5: #{discriminator_forward.3} parent=1 // loop_body
      %s25 = ssub.s32 %s20, 1
      %s26 = ssub.s32 %s20, 2
      %s33 = sadd.s32 1, %s28
      %p34 = scmp.ge.s32.totalorder %s33, 1
      %s35 = scalar_select %p34, 0, %s33
      %s36 = sadd.s32 1, %s27
      %s37 = scalar_select %p34, %s36, %s27
      %p38 = scmp.ge.s32.totalorder %s37, 2
      %s39 = scalar_select %p38, 0, %s37
      %s40 = ssub.s32 %s27, %s39
      %s41 = ssub.s32 %s28, %s35
      %s42 = sor.u32 %s40, %s41
      %p43 = scmp.eq.s32.totalorder %s42, 0
      %s45 = sadd.s32 %s44, 1
      %s46 = scalar_select %p43, %s44, %s45
      %p49 = pneg %p43
      %p50 = scmp.eq.s32.totalorder %s20, 1
      %p51 = por %p49, %p50
      %p52 = scmp.ne.s32.totalorder %s44, %s47
      %p53 = scmp.eq.s32.totalorder %s20, 0
      %p54 = por %p52, %p53
      %p55 = scmp.ne.s32.totalorder %s44, %s47
      %p56 = scmp.eq.s32.totalorder %s25, 1
      %p57 = por %p55, %p56
      %p58 = scmp.ne.s32.totalorder %s47, %s48
      %p59 = scmp.eq.s32.totalorder %s25, 0
      %p60 = por %p58, %p59
      %p61 = scmp.ne.s32.totalorder %s47, %s48
      %p62 = scmp.eq.s32.totalorder %s26, 1
      %p63 = por %p61, %p62
      %p65 = scmp.ne.s32.totalorder %s48, %s64
      %p66 = scmp.eq.s32.totalorder %s26, 0
      %p67 = por %p65, %p66
      %s69 = sadd.s32 %s68, 1
      %p72 = scmp.eq.s32.totalorder %s20, 1
      %p73 = scmp.ne.s32.totalorder %s68, %s70
      %p74 = scmp.eq.s32.totalorder %s20, 0
      %p75 = por %p73, %p74
      %p76 = scmp.ne.s32.totalorder %s68, %s70
      %p77 = scmp.eq.s32.totalorder %s25, 1
      %p78 = por %p76, %p77
      %p79 = scmp.ne.s32.totalorder %s70, %s71
      %p80 = scmp.eq.s32.totalorder %s25, 0
      %p81 = por %p79, %p80
      %p82 = scmp.ne.s32.totalorder %s70, %s71
      %p83 = scmp.eq.s32.totalorder %s26, 1
      %p84 = por %p82, %p83
      %p86 = scmp.ne.s32.totalorder %s71, %s85
      %p87 = scmp.eq.s32.totalorder %s26, 0
      %p88 = por %p86, %p87
      %s90 = sadd.s32 %s89, 1
      %p93 = scmp.eq.s32.totalorder %s20, 1
      %p94 = scmp.ne.s32.totalorder %s89, %s91
      %p95 = scmp.eq.s32.totalorder %s20, 0
      %p96 = por %p94, %p95
      %p97 = scmp.ne.s32.totalorder %s89, %s91
      %p98 = scmp.eq.s32.totalorder %s25, 1
      %p99 = por %p97, %p98
      %p100 = scmp.ne.s32.totalorder %s91, %s92
      %p101 = scmp.eq.s32.totalorder %s25, 0
      %p102 = por %p100, %p101
      %p103 = scmp.ne.s32.totalorder %s91, %s92
      %p104 = scmp.eq.s32.totalorder %s26, 1
      %p105 = por %p103, %p104
      %p107 = scmp.ne.s32.totalorder %s92, %s106
      %p108 = scmp.eq.s32.totalorder %s26, 0
      %p109 = por %p107, %p108
      %s111 = sadd.s32 %s110, 1
      %p114 = scmp.eq.s32.totalorder %s20, 1
      %p115 = scmp.ne.s32.totalorder %s110, %s112
      %p116 = scmp.eq.s32.totalorder %s20, 0
      %p117 = por %p115, %p116
      %p118 = scmp.ne.s32.totalorder %s110, %s112
      %p119 = scmp.eq.s32.totalorder %s25, 1
      %p120 = por %p118, %p119
      %p121 = scmp.ne.s32.totalorder %s112, %s113
      %p122 = scmp.eq.s32.totalorder %s25, 0
      %p123 = por %p121, %p122
      %p124 = scmp.ne.s32.totalorder %s112, %s113
      %p125 = scmp.eq.s32.totalorder %s26, 1
      %p126 = por %p124, %p125
      %p128 = scmp.ne.s32.totalorder %s113, %s127
      %p129 = scmp.eq.s32.totalorder %s26, 0
      %p130 = por %p128, %p129
      %s132 = sadd.s32 %s131, 1
      %p135 = scmp.eq.s32.totalorder %s20, 1
      %p136 = scmp.ne.s32.totalorder %s131, %s133
      %p137 = scmp.eq.s32.totalorder %s20, 0
      %p138 = por %p136, %p137
      %p139 = scmp.ne.s32.totalorder %s131, %s133
      %p140 = scmp.eq.s32.totalorder %s25, 1
      %p141 = por %p139, %p140
      %p142 = scmp.ne.s32.totalorder %s133, %s134
      %p143 = scmp.eq.s32.totalorder %s25, 0
      %p144 = por %p142, %p143
      %p145 = scmp.ne.s32.totalorder %s133, %s134
      %p146 = scmp.eq.s32.totalorder %s26, 1
      %p147 = por %p145, %p146
      %p149 = scmp.ne.s32.totalorder %s134, %s148
      %p150 = scmp.eq.s32.totalorder %s26, 0
      %p151 = por %p149, %p150
      %s152 = ssub.s32 %s27, %s39
      %s153 = ssub.s32 %s28, %s35
      %s154 = sor.u32 %s152, %s153
      %p155 = scmp.eq.s32.totalorder %s154, 0
      %s157 = sadd.s32 %s156, 1
      %s158 = scalar_select %p155, %s156, %s157
      %p161 = pneg %p155
      %p162 = scmp.eq.s32.totalorder %s20, 1
      %p163 = por %p161, %p162
      %p164 = scmp.ne.s32.totalorder %s156, %s159
      %p165 = scmp.eq.s32.totalorder %s20, 0
      %p166 = por %p164, %p165
      %p167 = scmp.ne.s32.totalorder %s156, %s159
      %p168 = scmp.eq.s32.totalorder %s25, 1
      %p169 = por %p167, %p168
      %p170 = scmp.ne.s32.totalorder %s159, %s160
      %p171 = scmp.eq.s32.totalorder %s25, 0
      %p172 = por %p170, %p171
      %p173 = scmp.ne.s32.totalorder %s159, %s160
      %p174 = scmp.eq.s32.totalorder %s26, 1
      %p175 = por %p173, %p174
      %p177 = scmp.ne.s32.totalorder %s160, %s176
      %p178 = scmp.eq.s32.totalorder %s26, 0
      %p179 = por %p177, %p178
      %p180 = scmp.le.s32.totalorder 1, %s20
      %p181 = scmp.lt.s32.totalorder %s20, 3
      %p182 = pnand %p180, %p181
      %p183 = pneg %p182
      // Predicated region
      $region9: #{discriminator_forward.3} parent=5 // pred_check
        _
      $region10: #{discriminator_forward.3} parent=5 // pred_check_branch
        %185 = sbr.rel (%p182) target = $region12
      $region11: #{discriminator_forward.3} parent=5 // pred_region
        %s186 = ssub.s32 %s20, 1
        // Predicated region
        $region13: #{discriminator_forward.3} parent=11 // pred_check
          %p187 = pneg %p81
        $region14: #{discriminator_forward.3} parent=11 // pred_check_branch
          %189 = sbr.rel (%p187) target = $region16
        $region15: #{discriminator_forward.3} parent=11 // pred_region
          %s191 = ssub.s32 9216, 9216
          %192 = vsyncadd [#allocation7], %s191
          %s193 = sshll.u32 [#allocation6], 4
          %s194 = int_to_ptr.vmem [resolvable:$true] %s193
          %199 = dma.hbm_to_vmem [thread:$0]  %s1, 9216, %s194, [#allocation7], 64, 64, 4
        $region16: #{discriminator_forward.3} parent=11 // pred_fallthru
          _
        // Predicated region
        $region17: #{discriminator_forward.3} parent=11 // pred_check
          %p200 = pneg %p102
        $region18: #{discriminator_forward.3} parent=11 // pred_check_branch
          %202 = sbr.rel (%p200) target = $region20
        $region19: #{discriminator_forward.3} parent=11 // pred_region
          %s204 = ssub.s32 16, 16
          %205 = vsyncadd [#allocation7], %s204
          %s207 = sshll.u32 [#allocation8], 4
          %s208 = int_to_ptr.vmem [resolvable:$true] %s207
          %210 = dma.hbm_to_vmem [thread:$0]  %s2, 16, %s208, [#allocation7]
        $region20: #{discriminator_forward.3} parent=11 // pred_fallthru
          _
        // Predicated region
        $region21: #{discriminator_forward.3} parent=11 // pred_check
          %p211 = pneg %p123
        $region22: #{discriminator_forward.3} parent=11 // pred_check_branch
          %213 = sbr.rel (%p211) target = $region24
        $region23: #{discriminator_forward.3} parent=11 // pred_region
          %s215 = ssub.s32 16, 16
          %216 = vsyncadd [#allocation10], %s215
          %s218 = sshll.u32 [#allocation9], 4
          %s219 = int_to_ptr.vmem [resolvable:$true] %s218
          %221 = dma.hbm_to_vmem [thread:$0]  %s3, 16, %s219, [#allocation10]
        $region24: #{discriminator_forward.3} parent=11 // pred_fallthru
          _
        // Predicated region
        $region25: #{discriminator_forward.3} parent=11 // pred_check
          %p222 = pneg %p144
        $region26: #{discriminator_forward.3} parent=11 // pred_check_branch
          %224 = sbr.rel (%p222) target = $region28
        $region27: #{discriminator_forward.3} parent=11 // pred_region
          _
        $region28: #{discriminator_forward.3} parent=11 // pred_fallthru
          _
      $region12: #{discriminator_forward.3} parent=5 // pred_fallthru
        _
      %p225 = scmp.lt.s32.totalorder %s20, 2
      // Predicated region
      $region29: #{discriminator_forward.3} parent=5 // pred_check
        %p226 = pneg %p225
      $region30: #{discriminator_forward.3} parent=5 // pred_check_branch
        %228 = sbr.rel (%p226) target = $region32
      $region31: #{discriminator_forward.3} parent=5 // pred_region
        // Predicated region
        $region33: #{discriminator_forward.3} parent=31 // pred_check
          %p229 = pneg %p54
        $region34: #{discriminator_forward.3} parent=31 // pred_check_branch
          %231 = sbr.rel (%p229) target = $region36
        $region35: #{discriminator_forward.3} parent=31 // pred_region
          %s232 = sand.u32 %s44, 1
          %s233 = scalar_lea.sflag [#allocation4], %s232
          %s234 = sand.u32 %s44, 1
          %s235 = smul.addr %s234, 152
          %s236 = scalar_lea.vmem [#allocation3], %s235
          %s238 = ssub.s32 2432, 2432
          %239 = vsyncadd %s233, %s238
          %s240 = smul.addr %s28, 38
          %s241 = smul.addr %s27, 38
          %s242 = sadd.s32 %s240, %s241
          %s243 = smul.addr %s242, 64
          %s244 = scalar_lea.hbm %s0, %s243
          %s245 = sshll.u32 %s236, 4
          %s246 = int_to_ptr.vmem [resolvable:$true] %s245
          %251 = dma.hbm_to_vmem [thread:$0]  %s244, 2432, %s246, %s233, 64, 64, 4
        $region36: #{discriminator_forward.3} parent=31 // pred_fallthru
          _
      $region32: #{discriminator_forward.3} parent=5 // pred_fallthru
        _
      %p252 = scmp.le.s32.totalorder 1, %s20
      %p253 = scmp.lt.s32.totalorder %s20, 3
      %p254 = pnand %p252, %p253
      %p255 = pneg %p254
      // Predicated region
      $region37: #{discriminator_forward.3} parent=5 // pred_check
        _
      $region38: #{discriminator_forward.3} parent=5 // pred_check_branch
        %257 = sbr.rel (%p254) target = $region40
      $region39: #{discriminator_forward.3} parent=5 // pred_region
        %s258 = ssub.s32 %s20, 1
        %s259 = sand.u32 %s47, 1
        %s260 = scalar_lea.sflag [#allocation4], %s259
        %s261 = sand.u32 %s47, 1
        %s262 = smul.addr %s261, 152
        %s263 = scalar_lea.vmem [#allocation3], %s262
        // Predicated region
        $region41: #{discriminator_forward.3} parent=39 // pred_check
          %p264 = pneg %p60
        $region42: #{discriminator_forward.3} parent=39 // pred_check_branch
          %266 = sbr.rel (%p264) target = $region44
        $region43: #{discriminator_forward.3} parent=39 // pred_region
          %267 = dma.done %s260, 2432
        $region44: #{discriminator_forward.3} parent=39 // pred_fallthru
          _
        // Predicated region
        $region45: #{discriminator_forward.3} parent=39 // pred_check
          %p268 = pneg %p81
        $region46: #{discriminator_forward.3} parent=39 // pred_check_branch
          %270 = sbr.rel (%p268) target = $region48
        $region47: #{discriminator_forward.3} parent=39 // pred_region
          %271 = dma.done [#allocation7], 9216
        $region48: #{discriminator_forward.3} parent=39 // pred_fallthru
          _
        // Predicated region
        $region49: #{discriminator_forward.3} parent=39 // pred_check
          %p272 = pneg %p102
        $region50: #{discriminator_forward.3} parent=39 // pred_check_branch
          %274 = sbr.rel (%p272) target = $region52
        $region51: #{discriminator_forward.3} parent=39 // pred_region
          %275 = dma.done [#allocation7], 16
        $region52: #{discriminator_forward.3} parent=39 // pred_fallthru
          _
        // Predicated region
        $region53: #{discriminator_forward.3} parent=39 // pred_check
          %p276 = pneg %p123
        $region54: #{discriminator_forward.3} parent=39 // pred_check_branch
          %278 = sbr.rel (%p276) target = $region56
        $region55: #{discriminator_forward.3} parent=39 // pred_region
          %279 = dma.done [#allocation10], 16
        $region56: #{discriminator_forward.3} parent=39 // pred_fallthru
          _
        %s280 = sand.u32 %s47, 1
        %s281 = scalar_lea.sflag [#allocation4], %s280
        %s282 = sand.u32 %s47, 1
        %s283 = smul.addr %s282, 152
        %s284 = scalar_lea.vmem [#allocation3], %s283
        %p285 = pneg %p60
        %p286 = pneg %p57
        %p287 = pneg %p81
        %p288 = pneg %p78
        %p289 = pneg %p102
        %p290 = pneg %p99
        %p291 = pneg %p123
        %p292 = pneg %p120
        %p293 = pneg %p144
        %p294 = pneg %p141
        %p295 = pneg %p172
        %p296 = pneg %p169
        %s297 = sand.u32 %s159, 1
        %s298 = scalar_lea.sflag [#allocation5], %s297
        %s299 = sand.u32 %s159, 1
        %s300 = smul.addr %s299, 256
        %s301 = scalar_lea.vmem [#allocation11], %s300
        %v303 = vld [vmem:[#allocation8] sm:$0x1]
        %v304 = vld [vmem:[#allocation9] sm:$0x1]
        %s305 = sld [smem:[#allocation2]]
        %v306 = vld [vmem:[%s263] sm:$0xf]
        %v307 = vld [vmem:[%s263 + $0x4] sm:$0xf]
        %v308 = vld [vmem:[%s263 + $0x8] sm:$0xf]
        %v309 = vld [vmem:[%s263 + $0xc] sm:$0xf]
        %v310 = vld [vmem:[%s263 + $0x10] sm:$0xf]
        %v311 = vld [vmem:[%s263 + $0x14] sm:$0xf]
        %v312 = vld [vmem:[%s263 + $0x18] sm:$0xf]
        %v313 = vld [vmem:[%s263 + $0x1c] sm:$0xf]
        %v314 = vld [vmem:[%s263 + $0x20] sm:$0xf]
        %v315 = vld [vmem:[%s263 + $0x24] sm:$0xf]
        %v316 = vld [vmem:[%s263 + $0x28] sm:$0xf]
        %v317 = vld [vmem:[%s263 + $0x2c] sm:$0xf]
        %v318 = vld [vmem:[%s263 + $0x30] sm:$0xf]
        %v319 = vld [vmem:[%s263 + $0x34] sm:$0xf]
        %v320 = vld [vmem:[%s263 + $0x38] sm:$0xf]
        %v321 = vld [vmem:[%s263 + $0x3c] sm:$0xf]
        %v322 = vld [vmem:[%s263 + $0x40] sm:$0xf]
        %v323 = vld [vmem:[%s263 + $0x44] sm:$0xf]
        %v324 = vld [vmem:[#allocation6] sm:$0xf]
        %v325 = vld [vmem:[#allocation6 + $0x4] sm:$0xf]
        %v326 = vld [vmem:[#allocation6 + $0x8] sm:$0xf]
        %v327 = vld [vmem:[#allocation6 + $0xc] sm:$0xf]
        %v328 = vld [vmem:[#allocation6 + $0x10] sm:$0xf]
        %v329 = vld [vmem:[#allocation6 + $0x14] sm:$0xf]
        %v330 = vld [vmem:[#allocation6 + $0x18] sm:$0xf]
        %v331 = vld [vmem:[#allocation6 + $0x1c] sm:$0xf]
        %v332 = vld [vmem:[#allocation6 + $0x20] sm:$0xf]
        %v333 = vld [vmem:[#allocation6 + $0x24] sm:$0xf]
        %v334 = vld [vmem:[#allocation6 + $0x28] sm:$0xf]
        %v335 = vld [vmem:[#allocation6 + $0x2c] sm:$0xf]
        %v336 = vld [vmem:[#allocation6 + $0x30] sm:$0xf]
        %v337 = vld [vmem:[#allocation6 + $0x34] sm:$0xf]
        %v338 = vld [vmem:[#allocation6 + $0x38] sm:$0xf]
        %v339 = vld [vmem:[#allocation6 + $0x3c] sm:$0xf]
        %v358 = vunpack.c.l.b16 %v306
        %v359 = vunpack.c.l.b16 %v307
        %v360 = vunpack.c.l.b16 %v308
        %v361 = vunpack.c.l.b16 %v309
        %v362 = vunpack.c.l.b16 %v310
        %v363 = vunpack.c.l.b16 %v311
        %v364 = vunpack.c.l.b16 %v312
        %v365 = vunpack.c.l.b16 %v313
        %v366 = vunpack.c.l.b16 %v314
        %v367 = vunpack.c.l.b16 %v315
        %v368 = vunpack.c.l.b16 %v316
        %v369 = vunpack.c.l.b16 %v317
        %v370 = vunpack.c.l.b16 %v318
        %v371 = vunpack.c.l.b16 %v319
        %v372 = vunpack.c.l.b16 %v320
        %v373 = vunpack.c.l.b16 %v321
        %v374 = vunpack.c.l.b16 %v322
        %v375 = vunpack.c.l.b16 %v323
        %v376 = vpack.c.b16 %v359, %v358
        %v377 = vpack.c.b16 %v361, %v360
        %v378 = vpack.c.b16 %v363, %v362
        %v379 = vpack.c.b16 %v365, %v364
        %v380 = vpack.c.b16 %v367, %v366
        %v381 = vpack.c.b16 %v369, %v368
        %v382 = vpack.c.b16 %v371, %v370
        %v383 = vpack.c.b16 %v373, %v372
        %v384 = vpack.c.b16 %v375, %v374
        %v410 = vunpack.c.l.b16 %v324
        %v411 = vunpack.c.l.b16 %v325
        %v412 = vunpack.c.l.b16 %v326
        %v413 = vunpack.c.l.b16 %v327
        %v414 = vunpack.c.l.b16 %v328
        %v415 = vunpack.c.l.b16 %v329
        %v416 = vunpack.c.l.b16 %v330
        %v417 = vunpack.c.l.b16 %v331
        %v418 = vunpack.c.l.b16 %v332
        %v419 = vunpack.c.l.b16 %v333
        %v420 = vunpack.c.l.b16 %v334
        %v421 = vunpack.c.l.b16 %v335
        %v422 = vunpack.c.l.b16 %v336
        %v423 = vunpack.c.l.b16 %v337
        %v424 = vunpack.c.l.b16 %v338
        %v425 = vunpack.c.l.b16 %v339
        %v426 = vpack.c.b16 %v411, %v410
        %v427 = vpack.c.b16 %v413, %v412
        %v428 = vpack.c.b16 %v415, %v414
        %v429 = vpack.c.b16 %v417, %v416
        %v430 = vpack.c.b16 %v419, %v418
        %v431 = vpack.c.b16 %v421, %v420
        %v432 = vpack.c.b16 %v423, %v422
        %v433 = vpack.c.b16 %v425, %v424
        %442 = vmatprep.subr.bf16.mxu0 0
        %443 = vmatpush1.bf16.msra.mxu0 %v426
        %444 = vmatprep.subr.bf16.mxu0 0
        %445 = vmatpush1.bf16.msra.mxu0 %v427
        %446 = vmatprep.subr.bf16.mxu0 0
        %447 = vmatpush1.bf16.msra.mxu0 %v428
        %448 = vmatprep.subr.bf16.mxu0 0
        %449 = vmatpush1.bf16.msra.mxu0 %v429
        %450 = vmatprep.subr.bf16.mxu0 0
        %451 = vmatpush1.bf16.msra.mxu0 %v430
        %452 = vmatprep.subr.bf16.mxu0 0
        %453 = vmatpush1.bf16.msra.mxu0 %v431
        %454 = vmatprep.subr.bf16.mxu0 0
        %455 = vmatpush1.bf16.msra.mxu0 %v432
        %456 = vmatprep.subr.bf16.mxu0 0
        %457 = vmatpush1.bf16.msra.mxu0 %v433
        %458 = vmatprep.subr.bf16.mxu0 0
        %459 = vmatpush1.bf16.msra.mxu0 0
        %460 = vmatprep.subr.bf16.mxu0 0
        %461 = vmatpush1.bf16.msra.mxu0 0
        %462 = vmatprep.subr.bf16.mxu0 0
        %463 = vmatpush1.bf16.msra.mxu0 0
        %464 = vmatprep.subr.bf16.mxu0 0
        %465 = vmatpush1.bf16.msra.mxu0 0
        %466 = vmatprep.subr.bf16.mxu0 0
        %467 = vmatpush1.bf16.msra.mxu0 0
        %468 = vmatprep.subr.bf16.mxu0 0
        %469 = vmatpush1.bf16.msra.mxu0 0
        %470 = vmatprep.subr.bf16.mxu0 0
        %471 = vmatpush1.bf16.msra.mxu0 0
        %472 = vmatprep.subr.bf16.mxu0 0
        %473 = vmatpush1.bf16.msra.mxu0 0
        %474 = vmatprep.mubr.bf16.mxu0 0
        %475 = vmatmul.mubr.bf16.gmra.mrb[0].mxu0 %v376
        %v476 = vpop.f32.mrb[0].mxu0
        %v477 = vadd.f32 0.0, %v476
        %v478 = vpop.f32.mrb[0].mxu0
        %v479 = vpop.f32.mrb[0].mxu0
        %v480 = vadd.f32 0.0, %v479
        %v481 = vpop.f32.mrb[0].mxu0
        %482 = vmatprep.mubr.bf16.mxu0 0
        %483 = vmatmul.mubr.bf16.gmra.mrb[0].mxu0 %v377
        %v484 = vpop.f32.mrb[0].mxu0
        %v485 = vadd.f32 0.0, %v484
        %v486 = vpop.f32.mrb[0].mxu0
        %v487 = vpop.f32.mrb[0].mxu0
        %v488 = vadd.f32 0.0, %v487
        %v489 = vpop.f32.mrb[0].mxu0
        %490 = vmatprep.mubr.bf16.mxu0 0
        %491 = vmatmul.mubr.bf16.gmra.mrb[0].mxu0 %v378
        %v492 = vpop.f32.mrb[0].mxu0
        %v493 = vadd.f32 0.0, %v492
        %v494 = vpop.f32.mrb[0].mxu0
        %v495 = vpop.f32.mrb[0].mxu0
        %v496 = vadd.f32 0.0, %v495
        %v497 = vpop.f32.mrb[0].mxu0
        %498 = vmatprep.mubr.bf16.mxu0 0
        %499 = vmatmul.mubr.bf16.gmra.mrb[0].mxu0 %v379
        %v500 = vpop.f32.mrb[0].mxu0
        %v501 = vadd.f32 0.0, %v500
        %v502 = vpop.f32.mrb[0].mxu0
        %v503 = vpop.f32.mrb[0].mxu0
        %v504 = vadd.f32 0.0, %v503
        %v505 = vpop.f32.mrb[0].mxu0
        %506 = vmatprep.mubr.bf16.mxu0 0
        %507 = vmatmul.mubr.bf16.gmra.mrb[0].mxu0 %v380
        %v508 = vpop.f32.mrb[0].mxu0
        %v509 = vadd.f32 0.0, %v508
        %v510 = vpop.f32.mrb[0].mxu0
        %v511 = vpop.f32.mrb[0].mxu0
        %v512 = vadd.f32 0.0, %v511
        %v513 = vpop.f32.mrb[0].mxu0
        %514 = vmatprep.mubr.bf16.mxu0 0
        %515 = vmatmul.mubr.bf16.gmra.mrb[0].mxu0 %v381
        %v516 = vpop.f32.mrb[0].mxu0
        %v517 = vadd.f32 0.0, %v516
        %v518 = vpop.f32.mrb[0].mxu0
        %v519 = vpop.f32.mrb[0].mxu0
        %v520 = vadd.f32 0.0, %v519
        %v521 = vpop.f32.mrb[0].mxu0
        %522 = vmatprep.mubr.bf16.mxu0 0
        %523 = vmatmul.mubr.bf16.gmra.mrb[0].mxu0 %v382
        %v524 = vpop.f32.mrb[0].mxu0
        %v525 = vadd.f32 0.0, %v524
        %v526 = vpop.f32.mrb[0].mxu0
        %v527 = vpop.f32.mrb[0].mxu0
        %v528 = vadd.f32 0.0, %v527
        %v529 = vpop.f32.mrb[0].mxu0
        %530 = vmatprep.mubr.bf16.mxu0 0
        %531 = vmatmul.mubr.bf16.gmra.mrb[0].mxu0 %v383
        %v532 = vpop.f32.mrb[0].mxu0
        %v533 = vadd.f32 0.0, %v532
        %v534 = vpop.f32.mrb[0].mxu0
        %v535 = vpop.f32.mrb[0].mxu0
        %v536 = vadd.f32 0.0, %v535
        %v537 = vpop.f32.mrb[0].mxu0
        %538 = vmatprep.mubr.bf16.mxu0 0
        %539 = vmatmul.mubr.bf16.gmra.mrb[0].mxu0 %v384
        %v540 = vpop.f32.mrb[0].mxu0
        %v541 = vpop.f32.mrb[0].mxu0
        %v542 = vpop.f32.mrb[0].mxu0
        %v543 = vpop.f32.mrb[0].mxu0
        %544 = vdwg.mxu0
        %v545 = vadd.f32 %v477, 0.0
        %v546 = vadd.f32 %v480, 0.0
        %v547 = vadd.f32 %v485, 0.0
        %v548 = vadd.f32 %v488, 0.0
        %v549 = vadd.f32 %v493, 0.0
        %v550 = vadd.f32 %v496, 0.0
        %v551 = vadd.f32 %v501, 0.0
        %v552 = vadd.f32 %v504, 0.0
        %v553 = vadd.f32 %v509, 0.0
        %v554 = vadd.f32 %v512, 0.0
        %v555 = vadd.f32 %v517, 0.0
        %v556 = vadd.f32 %v520, 0.0
        %v557 = vadd.f32 %v525, 0.0
        %v558 = vadd.f32 %v528, 0.0
        %v559 = vadd.f32 %v533, 0.0
        %v560 = vadd.f32 %v536, 0.0
        %s561 = scalar_lea.vmem [#allocation6], 64
        %v562 = vld [vmem:[%s561] sm:$0xf]
        %v563 = vld [vmem:[%s561 + $0x4] sm:$0xf]
        %v564 = vld [vmem:[%s561 + $0x8] sm:$0xf]
        %v565 = vld [vmem:[%s561 + $0xc] sm:$0xf]
        %v566 = vld [vmem:[%s561 + $0x10] sm:$0xf]
        %v567 = vld [vmem:[%s561 + $0x14] sm:$0xf]
        %v568 = vld [vmem:[%s561 + $0x18] sm:$0xf]
        %v569 = vld [vmem:[%s561 + $0x1c] sm:$0xf]
        %v570 = vld [vmem:[%s561 + $0x20] sm:$0xf]
        %v571 = vld [vmem:[%s561 + $0x24] sm:$0xf]
        %v572 = vld [vmem:[%s561 + $0x28] sm:$0xf]
        %v573 = vld [vmem:[%s561 + $0x2c] sm:$0xf]
        %v574 = vld [vmem:[%s561 + $0x30] sm:$0xf]
        %v575 = vld [vmem:[%s561 + $0x34] sm:$0xf]
        %v576 = vld [vmem:[%s561 + $0x38] sm:$0xf]
        %v577 = vld [vmem:[%s561 + $0x3c] sm:$0xf]
        %v594 = vunpack.c.l.b16 %v562
        %v595 = vunpack.c.l.b16 %v563
        %v596 = vunpack.c.l.b16 %v564
        %v597 = vunpack.c.l.b16 %v565
        %v598 = vunpack.c.l.b16 %v566
        %v599 = vunpack.c.l.b16 %v567
        %v600 = vunpack.c.l.b16 %v568
        %v601 = vunpack.c.l.b16 %v569
        %v602 = vunpack.c.l.b16 %v570
        %v603 = vunpack.c.l.b16 %v571
        %v604 = vunpack.c.l.b16 %v572
        %v605 = vunpack.c.l.b16 %v573
        %v606 = vunpack.c.l.b16 %v574
        %v607 = vunpack.c.l.b16 %v575
        %v608 = vunpack.c.l.b16 %v576
        %v609 = vunpack.c.l.b16 %v577
        %v610 = vpack.c.b16 %v595, %v594
        %v611 = vpack.c.b16 %v597, %v596
        %v612 = vpack.c.b16 %v599, %v598
        %v613 = vpack.c.b16 %v601, %v600
        %v614 = vpack.c.b16 %v603, %v602
        %v615 = vpack.c.b16 %v605, %v604
        %v616 = vpack.c.b16 %v607, %v606
        %v617 = vpack.c.b16 %v609, %v608
        %626 = vmatprep.subr.bf16.mxu0 0
        %627 = vmatpush1.bf16.msra.mxu0 %v610
        %628 = vmatprep.subr.bf16.mxu0 0
        %629 = vmatpush1.bf16.msra.mxu0 %v611
        %630 = vmatprep.subr.bf16.mxu0 0
        %631 = vmatpush1.bf16.msra.mxu0 %v612
        %632 = vmatprep.subr.bf16.mxu0 0
        %633 = vmatpush1.bf16.msra.mxu0 %v613
        %634 = vmatprep.subr.bf16.mxu0 0
        %635 = vmatpush1.bf16.msra.mxu0 %v614
        %636 = vmatprep.subr.bf16.mxu0 0
        %637 = vmatpush1.bf16.msra.mxu0 %v615
        %638 = vmatprep.subr.bf16.mxu0 0
        %639 = vmatpush1.bf16.msra.mxu0 %v616
        %640 = vmatprep.subr.bf16.mxu0 0
        %641 = vmatpush1.bf16.msra.mxu0 %v617
        %642 = vmatprep.subr.bf16.mxu0 0
        %643 = vmatpush1.bf16.msra.mxu0 0
        %644 = vmatprep.subr.bf16.mxu0 0
        %645 = vmatpush1.bf16.msra.mxu0 0
        %646 = vmatprep.subr.bf16.mxu0 0
        %647 = vmatpush1.bf16.msra.mxu0 0
        %648 = vmatprep.subr.bf16.mxu0 0
        %649 = vmatpush1.bf16.msra.mxu0 0
        %650 = vmatprep.subr.bf16.mxu0 0
        %651 = vmatpush1.bf16.msra.mxu0 0
        %652 = vmatprep.subr.bf16.mxu0 0
        %653 = vmatpush1.bf16.msra.mxu0 0
        %654 = vmatprep.subr.bf16.mxu0 0
        %655 = vmatpush1.bf16.msra.mxu0 0
        %656 = vmatprep.subr.bf16.mxu0 0
        %657 = vmatpush1.bf16.msra.mxu0 0
        %658 = vmatprep.mubr.bf16.mxu0 0
        %659 = vmatmul.mubr.bf16.gmra.mrb[0].mxu0 %v376
        %v660 = vpop.f32.mrb[0].mxu0
        %v661 = vadd.f32 0.0, %v660
        %v662 = vpop.f32.mrb[0].mxu0
        %v663 = vpop.f32.mrb[0].mxu0
        %v664 = vadd.f32 0.0, %v663
        %v665 = vpop.f32.mrb[0].mxu0
        %666 = vmatprep.mubr.bf16.mxu0 0
        %667 = vmatmul.mubr.bf16.gmra.mrb[0].mxu0 %v377
        %v668 = vpop.f32.mrb[0].mxu0
        %v669 = vadd.f32 0.0, %v668
        %v670 = vpop.f32.mrb[0].mxu0
        %v671 = vpop.f32.mrb[0].mxu0
        %v672 = vadd.f32 0.0, %v671
        %v673 = vpop.f32.mrb[0].mxu0
        %674 = vmatprep.mubr.bf16.mxu0 0
        %675 = vmatmul.mubr.bf16.gmra.mrb[0].mxu0 %v378
        %v676 = vpop.f32.mrb[0].mxu0
        %v677 = vadd.f32 0.0, %v676
        %v678 = vpop.f32.mrb[0].mxu0
        %v679 = vpop.f32.mrb[0].mxu0
        %v680 = vadd.f32 0.0, %v679
        %v681 = vpop.f32.mrb[0].mxu0
        %682 = vmatprep.mubr.bf16.mxu0 0
        %683 = vmatmul.mubr.bf16.gmra.mrb[0].mxu0 %v379
        %v684 = vpop.f32.mrb[0].mxu0
        %v685 = vadd.f32 0.0, %v684
        %v686 = vpop.f32.mrb[0].mxu0
        %v687 = vpop.f32.mrb[0].mxu0
        %v688 = vadd.f32 0.0, %v687
        %v689 = vpop.f32.mrb[0].mxu0
        %690 = vmatprep.mubr.bf16.mxu0 0
        %691 = vmatmul.mubr.bf16.gmra.mrb[0].mxu0 %v380
        %v692 = vpop.f32.mrb[0].mxu0
        %v693 = vadd.f32 0.0, %v692
        %v694 = vpop.f32.mrb[0].mxu0
        %v695 = vpop.f32.mrb[0].mxu0
        %v696 = vadd.f32 0.0, %v695
        %v697 = vpop.f32.mrb[0].mxu0
        %698 = vmatprep.mubr.bf16.mxu0 0
        %699 = vmatmul.mubr.bf16.gmra.mrb[0].mxu0 %v381
        %v700 = vpop.f32.mrb[0].mxu0
        %v701 = vadd.f32 0.0, %v700
        %v702 = vpop.f32.mrb[0].mxu0
        %v703 = vpop.f32.mrb[0].mxu0
        %v704 = vadd.f32 0.0, %v703
        %v705 = vpop.f32.mrb[0].mxu0
        %706 = vmatprep.mubr.bf16.mxu0 0
        %707 = vmatmul.mubr.bf16.gmra.mrb[0].mxu0 %v382
        %v708 = vpop.f32.mrb[0].mxu0
        %v709 = vadd.f32 0.0, %v708
        %v710 = vpop.f32.mrb[0].mxu0
        %v711 = vpop.f32.mrb[0].mxu0
        %v712 = vadd.f32 0.0, %v711
        %v713 = vpop.f32.mrb[0].mxu0
        %714 = vmatprep.mubr.bf16.mxu0 0
        %715 = vmatmul.mubr.bf16.gmra.mrb[0].mxu0 %v383
        %v716 = vpop.f32.mrb[0].mxu0
        %v717 = vadd.f32 0.0, %v716
        %v718 = vpop.f32.mrb[0].mxu0
        %v719 = vpop.f32.mrb[0].mxu0
        %v720 = vadd.f32 0.0, %v719
        %v721 = vpop.f32.mrb[0].mxu0
        %722 = vmatprep.mubr.bf16.mxu0 0
        %723 = vmatmul.mubr.bf16.gmra.mrb[0].mxu0 %v384
        %v724 = vpop.f32.mrb[0].mxu0
        %v725 = vadd.f32 0.0, %v724
        %v726 = vpop.f32.mrb[0].mxu0
        %v727 = vpop.f32.mrb[0].mxu0
        %v728 = vpop.f32.mrb[0].mxu0
        %729 = vdwg.mxu0
        %vm747 = vcmask 1046528
        %v748 = vrot.slane %v661, 1
        %v749 = vrot.slane %v664, 1
        %v750 = vsel %vm747, %v748, %v749
        %v751 = vrot.slane %v669, 1
        %v752 = vsel %vm747, %v749, %v751
        %v753 = vrot.slane %v672, 1
        %v754 = vsel %vm747, %v751, %v753
        %v755 = vrot.slane %v677, 1
        %v756 = vsel %vm747, %v753, %v755
        %v757 = vrot.slane %v680, 1
        %v758 = vsel %vm747, %v755, %v757
        %v759 = vrot.slane %v685, 1
        %v760 = vsel %vm747, %v757, %v759
        %v761 = vrot.slane %v688, 1
        %v762 = vsel %vm747, %v759, %v761
        %v763 = vrot.slane %v693, 1
        %v764 = vsel %vm747, %v761, %v763
        %v765 = vrot.slane %v696, 1
        %v766 = vsel %vm747, %v763, %v765
        %v767 = vrot.slane %v701, 1
        %v768 = vsel %vm747, %v765, %v767
        %v769 = vrot.slane %v704, 1
        %v770 = vsel %vm747, %v767, %v769
        %v771 = vrot.slane %v709, 1
        %v772 = vsel %vm747, %v769, %v771
        %v773 = vrot.slane %v712, 1
        %v774 = vsel %vm747, %v771, %v773
        %v775 = vrot.slane %v717, 1
        %v776 = vsel %vm747, %v773, %v775
        %v777 = vrot.slane %v720, 1
        %v778 = vsel %vm747, %v775, %v777
        %v779 = vrot.slane %v725, 1
        %v780 = vsel %vm747, %v777, %v779
        %v797 = vadd.f32 %v545, %v750
        %v798 = vadd.f32 %v546, %v752
        %v799 = vadd.f32 %v547, %v754
        %v800 = vadd.f32 %v548, %v756
        %v801 = vadd.f32 %v549, %v758
        %v802 = vadd.f32 %v550, %v760
        %v803 = vadd.f32 %v551, %v762
        %v804 = vadd.f32 %v552, %v764
        %v805 = vadd.f32 %v553, %v766
        %v806 = vadd.f32 %v554, %v768
        %v807 = vadd.f32 %v555, %v770
        %v808 = vadd.f32 %v556, %v772
        %v809 = vadd.f32 %v557, %v774
        %v810 = vadd.f32 %v558, %v776
        %v811 = vadd.f32 %v559, %v778
        %v812 = vadd.f32 %v560, %v780
        %s813 = scalar_lea.vmem [#allocation6], 128
        %v814 = vld [vmem:[%s813] sm:$0xf]
        %v815 = vld [vmem:[%s813 + $0x4] sm:$0xf]
        %v816 = vld [vmem:[%s813 + $0x8] sm:$0xf]
        %v817 = vld [vmem:[%s813 + $0xc] sm:$0xf]
        %v818 = vld [vmem:[%s813 + $0x10] sm:$0xf]
        %v819 = vld [vmem:[%s813 + $0x14] sm:$0xf]
        %v820 = vld [vmem:[%s813 + $0x18] sm:$0xf]
        %v821 = vld [vmem:[%s813 + $0x1c] sm:$0xf]
        %v822 = vld [vmem:[%s813 + $0x20] sm:$0xf]
        %v823 = vld [vmem:[%s813 + $0x24] sm:$0xf]
        %v824 = vld [vmem:[%s813 + $0x28] sm:$0xf]
        %v825 = vld [vmem:[%s813 + $0x2c] sm:$0xf]
        %v826 = vld [vmem:[%s813 + $0x30] sm:$0xf]
        %v827 = vld [vmem:[%s813 + $0x34] sm:$0xf]
        %v828 = vld [vmem:[%s813 + $0x38] sm:$0xf]
        %v829 = vld [vmem:[%s813 + $0x3c] sm:$0xf]
        %v846 = vunpack.c.l.b16 %v814
        %v847 = vunpack.c.l.b16 %v815
        %v848 = vunpack.c.l.b16 %v816
        %v849 = vunpack.c.l.b16 %v817
        %v850 = vunpack.c.l.b16 %v818
        %v851 = vunpack.c.l.b16 %v819
        %v852 = vunpack.c.l.b16 %v820
        %v853 = vunpack.c.l.b16 %v821
        %v854 = vunpack.c.l.b16 %v822
        %v855 = vunpack.c.l.b16 %v823
        %v856 = vunpack.c.l.b16 %v824
        %v857 = vunpack.c.l.b16 %v825
        %v858 = vunpack.c.l.b16 %v826
        %v859 = vunpack.c.l.b16 %v827
        %v860 = vunpack.c.l.b16 %v828
        %v861 = vunpack.c.l.b16 %v829
        %v862 = vpack.c.b16 %v847, %v846
        %v863 = vpack.c.b16 %v849, %v848
        %v864 = vpack.c.b16 %v851, %v850
        %v865 = vpack.c.b16 %v853, %v852
        %v866 = vpack.c.b16 %v855, %v854
        %v867 = vpack.c.b16 %v857, %v856
        %v868 = vpack.c.b16 %v859, %v858
        %v869 = vpack.c.b16 %v861, %v860
        %878 = vmatprep.subr.bf16.mxu0 0
        %879 = vmatpush1.bf16.msra.mxu0 %v862
        %880 = vmatprep.subr.bf16.mxu0 0
        %881 = vmatpush1.bf16.msra.mxu0 %v863
        %882 = vmatprep.subr.bf16.mxu0 0
        %883 = vmatpush1.bf16.msra.mxu0 %v864
        %884 = vmatprep.subr.bf16.mxu0 0
        %885 = vmatpush1.bf16.msra.mxu0 %v865
        %886 = vmatprep.subr.bf16.mxu0 0
        %887 = vmatpush1.bf16.msra.mxu0 %v866
        %888 = vmatprep.subr.bf16.mxu0 0
        %889 = vmatpush1.bf16.msra.mxu0 %v867
        %890 = vmatprep.subr.bf16.mxu0 0
        %891 = vmatpush1.bf16.msra.mxu0 %v868
        %892 = vmatprep.subr.bf16.mxu0 0
        %893 = vmatpush1.bf16.msra.mxu0 %v869
        %894 = vmatprep.subr.bf16.mxu0 0
        %895 = vmatpush1.bf16.msra.mxu0 0
        %896 = vmatprep.subr.bf16.mxu0 0
        %897 = vmatpush1.bf16.msra.mxu0 0
        %898 = vmatprep.subr.bf16.mxu0 0
        %899 = vmatpush1.bf16.msra.mxu0 0
        %900 = vmatprep.subr.bf16.mxu0 0
        %901 = vmatpush1.bf16.msra.mxu0 0
        %902 = vmatprep.subr.bf16.mxu0 0
        %903 = vmatpush1.bf16.msra.mxu0 0
        %904 = vmatprep.subr.bf16.mxu0 0
        %905 = vmatpush1.bf16.msra.mxu0 0
        %906 = vmatprep.subr.bf16.mxu0 0
        %907 = vmatpush1.bf16.msra.mxu0 0
        %908 = vmatprep.subr.bf16.mxu0 0
        %909 = vmatpush1.bf16.msra.mxu0 0
        %910 = vmatprep.mubr.bf16.mxu0 0
        %911 = vmatmul.mubr.bf16.gmra.mrb[0].mxu0 %v376
        %v912 = vpop.f32.mrb[0].mxu0
        %v913 = vadd.f32 0.0, %v912
        %v914 = vpop.f32.mrb[0].mxu0
        %v915 = vpop.f32.mrb[0].mxu0
        %v916 = vadd.f32 0.0, %v915
        %v917 = vpop.f32.mrb[0].mxu0
        %918 = vmatprep.mubr.bf16.mxu0 0
        %919 = vmatmul.mubr.bf16.gmra.mrb[0].mxu0 %v377
        %v920 = vpop.f32.mrb[0].mxu0
        %v921 = vadd.f32 0.0, %v920
        %v922 = vpop.f32.mrb[0].mxu0
        %v923 = vpop.f32.mrb[0].mxu0
        %v924 = vadd.f32 0.0, %v923
        %v925 = vpop.f32.mrb[0].mxu0
        %926 = vmatprep.mubr.bf16.mxu0 0
        %927 = vmatmul.mubr.bf16.gmra.mrb[0].mxu0 %v378
        %v928 = vpop.f32.mrb[0].mxu0
        %v929 = vadd.f32 0.0, %v928
        %v930 = vpop.f32.mrb[0].mxu0
        %v931 = vpop.f32.mrb[0].mxu0
        %v932 = vadd.f32 0.0, %v931
        %v933 = vpop.f32.mrb[0].mxu0
        %934 = vmatprep.mubr.bf16.mxu0 0
        %935 = vmatmul.mubr.bf16.gmra.mrb[0].mxu0 %v379
        %v936 = vpop.f32.mrb[0].mxu0
        %v937 = vadd.f32 0.0, %v936
        %v938 = vpop.f32.mrb[0].mxu0
        %v939 = vpop.f32.mrb[0].mxu0
        %v940 = vadd.f32 0.0, %v939
        %v941 = vpop.f32.mrb[0].mxu0
        %942 = vmatprep.mubr.bf16.mxu0 0
        %943 = vmatmul.mubr.bf16.gmra.mrb[0].mxu0 %v380
        %v944 = vpop.f32.mrb[0].mxu0
        %v945 = vadd.f32 0.0, %v944
        %v946 = vpop.f32.mrb[0].mxu0
        %v947 = vpop.f32.mrb[0].mxu0
        %v948 = vadd.f32 0.0, %v947
        %v949 = vpop.f32.mrb[0].mxu0
        %950 = vmatprep.mubr.bf16.mxu0 0
        %951 = vmatmul.mubr.bf16.gmra.mrb[0].mxu0 %v381
        %v952 = vpop.f32.mrb[0].mxu0
        %v953 = vadd.f32 0.0, %v952
        %v954 = vpop.f32.mrb[0].mxu0
        %v955 = vpop.f32.mrb[0].mxu0
        %v956 = vadd.f32 0.0, %v955
        %v957 = vpop.f32.mrb[0].mxu0
        %958 = vmatprep.mubr.bf16.mxu0 0
        %959 = vmatmul.mubr.bf16.gmra.mrb[0].mxu0 %v382
        %v960 = vpop.f32.mrb[0].mxu0
        %v961 = vadd.f32 0.0, %v960
        %v962 = vpop.f32.mrb[0].mxu0
        %v963 = vpop.f32.mrb[0].mxu0
        %v964 = vadd.f32 0.0, %v963
        %v965 = vpop.f32.mrb[0].mxu0
        %966 = vmatprep.mubr.bf16.mxu0 0
        %967 = vmatmul.mubr.bf16.gmra.mrb[0].mxu0 %v383
        %v968 = vpop.f32.mrb[0].mxu0
        %v969 = vadd.f32 0.0, %v968
        %v970 = vpop.f32.mrb[0].mxu0
        %v971 = vpop.f32.mrb[0].mxu0
        %v972 = vadd.f32 0.0, %v971
        %v973 = vpop.f32.mrb[0].mxu0
        %974 = vmatprep.mubr.bf16.mxu0 0
        %975 = vmatmul.mubr.bf16.gmra.mrb[0].mxu0 %v384
        %v976 = vpop.f32.mrb[0].mxu0
        %v977 = vadd.f32 0.0, %v976
        %v978 = vpop.f32.mrb[0].mxu0
        %v979 = vpop.f32.mrb[0].mxu0
        %v980 = vpop.f32.mrb[0].mxu0
        %981 = vdwg.mxu0
        %vm999 = vcmask 1045504
        %v1000 = vrot.slane %v913, 2
        %v1001 = vrot.slane %v916, 2
        %v1002 = vsel %vm999, %v1000, %v1001
        %v1003 = vrot.slane %v921, 2
        %v1004 = vsel %vm999, %v1001, %v1003
        %v1005 = vrot.slane %v924, 2
        %v1006 = vsel %vm999, %v1003, %v1005
        %v1007 = vrot.slane %v929, 2
        %v1008 = vsel %vm999, %v1005, %v1007
        %v1009 = vrot.slane %v932, 2
        %v1010 = vsel %vm999, %v1007, %v1009
        %v1011 = vrot.slane %v937, 2
        %v1012 = vsel %vm999, %v1009, %v1011
        %v1013 = vrot.slane %v940, 2
        %v1014 = vsel %vm999, %v1011, %v1013
        %v1015 = vrot.slane %v945, 2
        %v1016 = vsel %vm999, %v1013, %v1015
        %v1017 = vrot.slane %v948, 2
        %v1018 = vsel %vm999, %v1015, %v1017
        %v1019 = vrot.slane %v953, 2
        %v1020 = vsel %vm999, %v1017, %v1019
        %v1021 = vrot.slane %v956, 2
        %v1022 = vsel %vm999, %v1019, %v1021
        %v1023 = vrot.slane %v961, 2
        %v1024 = vsel %vm999, %v1021, %v1023
        %v1025 = vrot.slane %v964, 2
        %v1026 = vsel %vm999, %v1023, %v1025
        %v1027 = vrot.slane %v969, 2
        %v1028 = vsel %vm999, %v1025, %v1027
        %v1029 = vrot.slane %v972, 2
        %v1030 = vsel %vm999, %v1027, %v1029
        %v1031 = vrot.slane %v977, 2
        %v1032 = vsel %vm999, %v1029, %v1031
        %v1049 = vadd.f32 %v797, %v1002
        %v1050 = vadd.f32 %v798, %v1004
        %v1051 = vadd.f32 %v799, %v1006
        %v1052 = vadd.f32 %v800, %v1008
        %v1053 = vadd.f32 %v801, %v1010
        %v1054 = vadd.f32 %v802, %v1012
        %v1055 = vadd.f32 %v803, %v1014
        %v1056 = vadd.f32 %v804, %v1016
        %v1057 = vadd.f32 %v805, %v1018
        %v1058 = vadd.f32 %v806, %v1020
        %v1059 = vadd.f32 %v807, %v1022
        %v1060 = vadd.f32 %v808, %v1024
        %v1061 = vadd.f32 %v809, %v1026
        %v1062 = vadd.f32 %v810, %v1028
        %v1063 = vadd.f32 %v811, %v1030
        %v1064 = vadd.f32 %v812, %v1032
        %v1065 = vld [vmem:[%s263 + $0x8] sm:$0xf]
        %v1066 = vld [vmem:[%s263 + $0xc] sm:$0xf]
        %v1067 = vld [vmem:[%s263 + $0x10] sm:$0xf]
        %v1068 = vld [vmem:[%s263 + $0x14] sm:$0xf]
        %v1069 = vld [vmem:[%s263 + $0x18] sm:$0xf]
        %v1070 = vld [vmem:[%s263 + $0x1c] sm:$0xf]
        %v1071 = vld [vmem:[%s263 + $0x20] sm:$0xf]
        %v1072 = vld [vmem:[%s263 + $0x24] sm:$0xf]
        %v1073 = vld [vmem:[%s263 + $0x28] sm:$0xf]
        %v1074 = vld [vmem:[%s263 + $0x2c] sm:$0xf]
        %v1075 = vld [vmem:[%s263 + $0x30] sm:$0xf]
        %v1076 = vld [vmem:[%s263 + $0x34] sm:$0xf]
        %v1077 = vld [vmem:[%s263 + $0x38] sm:$0xf]
        %v1078 = vld [vmem:[%s263 + $0x3c] sm:$0xf]
        %v1079 = vld [vmem:[%s263 + $0x40] sm:$0xf]
        %v1080 = vld [vmem:[%s263 + $0x44] sm:$0xf]
        %v1081 = vld [vmem:[%s263 + $0x48] sm:$0xf]
        %v1082 = vld [vmem:[%s263 + $0x4c] sm:$0xf]
        %s1083 = scalar_lea.vmem [#allocation6], 192
        %v1084 = vld [vmem:[%s1083] sm:$0xf]
        %v1085 = vld [vmem:[%s1083 + $0x4] sm:$0xf]
        %v1086 = vld [vmem:[%s1083 + $0x8] sm:$0xf]
        %v1087 = vld [vmem:[%s1083 + $0xc] sm:$0xf]
        %v1088 = vld [vmem:[%s1083 + $0x10] sm:$0xf]
        %v1089 = vld [vmem:[%s1083 + $0x14] sm:$0xf]
        %v1090 = vld [vmem:[%s1083 + $0x18] sm:$0xf]
        %v1091 = vld [vmem:[%s1083 + $0x1c] sm:$0xf]
        %v1092 = vld [vmem:[%s1083 + $0x20] sm:$0xf]
        %v1093 = vld [vmem:[%s1083 + $0x24] sm:$0xf]
        %v1094 = vld [vmem:[%s1083 + $0x28] sm:$0xf]
        %v1095 = vld [vmem:[%s1083 + $0x2c] sm:$0xf]
        %v1096 = vld [vmem:[%s1083 + $0x30] sm:$0xf]
        %v1097 = vld [vmem:[%s1083 + $0x34] sm:$0xf]
        %v1098 = vld [vmem:[%s1083 + $0x38] sm:$0xf]
        %v1099 = vld [vmem:[%s1083 + $0x3c] sm:$0xf]
        %v1118 = vunpack.c.l.b16 %v1065
        %v1119 = vunpack.c.l.b16 %v1066
        %v1120 = vunpack.c.l.b16 %v1067
        %v1121 = vunpack.c.l.b16 %v1068
        %v1122 = vunpack.c.l.b16 %v1069
        %v1123 = vunpack.c.l.b16 %v1070
        %v1124 = vunpack.c.l.b16 %v1071
        %v1125 = vunpack.c.l.b16 %v1072
        %v1126 = vunpack.c.l.b16 %v1073
        %v1127 = vunpack.c.l.b16 %v1074
        %v1128 = vunpack.c.l.b16 %v1075
        %v1129 = vunpack.c.l.b16 %v1076
        %v1130 = vunpack.c.l.b16 %v1077
        %v1131 = vunpack.c.l.b16 %v1078
        %v1132 = vunpack.c.l.b16 %v1079
        %v1133 = vunpack.c.l.b16 %v1080
        %v1134 = vunpack.c.l.b16 %v1081
        %v1135 = vunpack.c.l.b16 %v1082
        %v1136 = vpack.c.b16 %v1119, %v1118
        %v1137 = vpack.c.b16 %v1121, %v1120
        %v1138 = vpack.c.b16 %v1123, %v1122
        %v1139 = vpack.c.b16 %v1125, %v1124
        %v1140 = vpack.c.b16 %v1127, %v1126
        %v1141 = vpack.c.b16 %v1129, %v1128
        %v1142 = vpack.c.b16 %v1131, %v1130
        %v1143 = vpack.c.b16 %v1133, %v1132
        %v1144 = vpack.c.b16 %v1135, %v1134
        %v1170 = vunpack.c.l.b16 %v1084
        %v1171 = vunpack.c.l.b16 %v1085
        %v1172 = vunpack.c.l.b16 %v1086
        %v1173 = vunpack.c.l.b16 %v1087
        %v1174 = vunpack.c.l.b16 %v1088
        %v1175 = vunpack.c.l.b16 %v1089
        %v1176 = vunpack.c.l.b16 %v1090
        %v1177 = vunpack.c.l.b16 %v1091
        %v1178 = vunpack.c.l.b16 %v1092
        %v1179 = vunpack.c.l.b16 %v1093
        %v1180 = vunpack.c.l.b16 %v1094
        %v1181 = vunpack.c.l.b16 %v1095
        %v1182 = vunpack.c.l.b16 %v1096
        %v1183 = vunpack.c.l.b16 %v1097
        %v1184 = vunpack.c.l.b16 %v1098
        %v1185 = vunpack.c.l.b16 %v1099
        %v1186 = vpack.c.b16 %v1171, %v1170
        %v1187 = vpack.c.b16 %v1173, %v1172
        %v1188 = vpack.c.b16 %v1175, %v1174
        %v1189 = vpack.c.b16 %v1177, %v1176
        %v1190 = vpack.c.b16 %v1179, %v1178
        %v1191 = vpack.c.b16 %v1181, %v1180
        %v1192 = vpack.c.b16 %v1183, %v1182
        %v1193 = vpack.c.b16 %v1185, %v1184
        %1202 = vmatprep.subr.bf16.mxu0 0
        %1203 = vmatpush1.bf16.msra.mxu0 %v1186
        %1204 = vmatprep.subr.bf16.mxu0 0
        %1205 = vmatpush1.bf16.msra.mxu0 %v1187
        %1206 = vmatprep.subr.bf16.mxu0 0
        %1207 = vmatpush1.bf16.msra.mxu0 %v1188
        %1208 = vmatprep.subr.bf16.mxu0 0
        %1209 = vmatpush1.bf16.msra.mxu0 %v1189
        %1210 = vmatprep.subr.bf16.mxu0 0
        %1211 = vmatpush1.bf16.msra.mxu0 %v1190
        %1212 = vmatprep.subr.bf16.mxu0 0
        %1213 = vmatpush1.bf16.msra.mxu0 %v1191
        %1214 = vmatprep.subr.bf16.mxu0 0
        %1215 = vmatpush1.bf16.msra.mxu0 %v1192
        %1216 = vmatprep.subr.bf16.mxu0 0
        %1217 = vmatpush1.bf16.msra.mxu0 %v1193
        %1218 = vmatprep.subr.bf16.mxu0 0
        %1219 = vmatpush1.bf16.msra.mxu0 0
        %1220 = vmatprep.subr.bf16.mxu0 0
        %1221 = vmatpush1.bf16.msra.mxu0 0
        %1222 = vmatprep.subr.bf16.mxu0 0
        %1223 = vmatpush1.bf16.msra.mxu0 0
        %1224 = vmatprep.subr.bf16.mxu0 0
        %1225 = vmatpush1.bf16.msra.mxu0 0
        %1226 = vmatprep.subr.bf16.mxu0 0
        %1227 = vmatpush1.bf16.msra.mxu0 0
        %1228 = vmatprep.subr.bf16.mxu0 0
        %1229 = vmatpush1.bf16.msra.mxu0 0
        %1230 = vmatprep.subr.bf16.mxu0 0
        %1231 = vmatpush1.bf16.msra.mxu0 0
        %1232 = vmatprep.subr.bf16.mxu0 0
        %1233 = vmatpush1.bf16.msra.mxu0 0
        %1234 = vmatprep.mubr.bf16.mxu0 0
        %1235 = vmatmul.mubr.bf16.gmra.mrb[0].mxu0 %v1136
        %v1236 = vpop.f32.mrb[0].mxu0
        %v1237 = vadd.f32 0.0, %v1236
        %v1238 = vpop.f32.mrb[0].mxu0
        %v1239 = vpop.f32.mrb[0].mxu0
        %v1240 = vadd.f32 0.0, %v1239
        %v1241 = vpop.f32.mrb[0].mxu0
        %1242 = vmatprep.mubr.bf16.mxu0 0
        %1243 = vmatmul.mubr.bf16.gmra.mrb[0].mxu0 %v1137
        %v1244 = vpop.f32.mrb[0].mxu0
        %v1245 = vadd.f32 0.0, %v1244
        %v1246 = vpop.f32.mrb[0].mxu0
        %v1247 = vpop.f32.mrb[0].mxu0
        %v1248 = vadd.f32 0.0, %v1247
        %v1249 = vpop.f32.mrb[0].mxu0
        %1250 = vmatprep.mubr.bf16.mxu0 0
        %1251 = vmatmul.mubr.bf16.gmra.mrb[0].mxu0 %v1138
        %v1252 = vpop.f32.mrb[0].mxu0
        %v1253 = vadd.f32 0.0, %v1252
        %v1254 = vpop.f32.mrb[0].mxu0
        %v1255 = vpop.f32.mrb[0].mxu0
        %v1256 = vadd.f32 0.0, %v1255
        %v1257 = vpop.f32.mrb[0].mxu0
        %1258 = vmatprep.mubr.bf16.mxu0 0
        %1259 = vmatmul.mubr.bf16.gmra.mrb[0].mxu0 %v1139
        %v1260 = vpop.f32.mrb[0].mxu0
        %v1261 = vadd.f32 0.0, %v1260
        %v1262 = vpop.f32.mrb[0].mxu0
        %v1263 = vpop.f32.mrb[0].mxu0
        %v1264 = vadd.f32 0.0, %v1263
        %v1265 = vpop.f32.mrb[0].mxu0
        %1266 = vmatprep.mubr.bf16.mxu0 0
        %1267 = vmatmul.mubr.bf16.gmra.mrb[0].mxu0 %v1140
        %v1268 = vpop.f32.mrb[0].mxu0
        %v1269 = vadd.f32 0.0, %v1268
        %v1270 = vpop.f32.mrb[0].mxu0
        %v1271 = vpop.f32.mrb[0].mxu0
        %v1272 = vadd.f32 0.0, %v1271
        %v1273 = vpop.f32.mrb[0].mxu0
        %1274 = vmatprep.mubr.bf16.mxu0 0
        %1275 = vmatmul.mubr.bf16.gmra.mrb[0].mxu0 %v1141
        %v1276 = vpop.f32.mrb[0].mxu0
        %v1277 = vadd.f32 0.0, %v1276
        %v1278 = vpop.f32.mrb[0].mxu0
        %v1279 = vpop.f32.mrb[0].mxu0
        %v1280 = vadd.f32 0.0, %v1279
        %v1281 = vpop.f32.mrb[0].mxu0
        %1282 = vmatprep.mubr.bf16.mxu0 0
        %1283 = vmatmul.mubr.bf16.gmra.mrb[0].mxu0 %v1142
        %v1284 = vpop.f32.mrb[0].mxu0
        %v1285 = vadd.f32 0.0, %v1284
        %v1286 = vpop.f32.mrb[0].mxu0
        %v1287 = vpop.f32.mrb[0].mxu0
        %v1288 = vadd.f32 0.0, %v1287
        %v1289 = vpop.f32.mrb[0].mxu0
        %1290 = vmatprep.mubr.bf16.mxu0 0
        %1291 = vmatmul.mubr.bf16.gmra.mrb[0].mxu0 %v1143
        %v1292 = vpop.f32.mrb[0].mxu0
        %v1293 = vadd.f32 0.0, %v1292
        %v1294 = vpop.f32.mrb[0].mxu0
        %v1295 = vpop.f32.mrb[0].mxu0
        %v1296 = vadd.f32 0.0, %v1295
        %v1297 = vpop.f32.mrb[0].mxu0
        %1298 = vmatprep.mubr.bf16.mxu0 0
        %1299 = vmatmul.mubr.bf16.gmra.mrb[0].mxu0 %v1144
        %v1300 = vpop.f32.mrb[0].mxu0
        %v1301 = vpop.f32.mrb[0].mxu0
        %v1302 = vpop.f32.mrb[0].mxu0
        %v1303 = vpop.f32.mrb[0].mxu0
        %1304 = vdwg.mxu0
        %v1305 = vadd.f32 %v1049, %v1237
        %v1306 = vadd.f32 %v1050, %v1240
        %v1307 = vadd.f32 %v1051, %v1245
        %v1308 = vadd.f32 %v1052, %v1248
        %v1309 = vadd.f32 %v1053, %v1253
        %v1310 = vadd.f32 %v1054, %v1256
        %v1311 = vadd.f32 %v1055, %v1261
        %v1312 = vadd.f32 %v1056, %v1264
        %v1313 = vadd.f32 %v1057, %v1269
        %v1314 = vadd.f32 %v1058, %v1272
        %v1315 = vadd.f32 %v1059, %v1277
        %v1316 = vadd.f32 %v1060, %v1280
        %v1317 = vadd.f32 %v1061, %v1285
        %v1318 = vadd.f32 %v1062, %v1288
        %v1319 = vadd.f32 %v1063, %v1293
        %v1320 = vadd.f32 %v1064, %v1296
        %s1321 = scalar_lea.vmem [#allocation6], 256
        %v1322 = vld [vmem:[%s1321] sm:$0xf]
        %v1323 = vld [vmem:[%s1321 + $0x4] sm:$0xf]
        %v1324 = vld [vmem:[%s1321 + $0x8] sm:$0xf]
        %v1325 = vld [vmem:[%s1321 + $0xc] sm:$0xf]
        %v1326 = vld [vmem:[%s1321 + $0x10] sm:$0xf]
        %v1327 = vld [vmem:[%s1321 + $0x14] sm:$0xf]
        %v1328 = vld [vmem:[%s1321 + $0x18] sm:$0xf]
        %v1329 = vld [vmem:[%s1321 + $0x1c] sm:$0xf]
        %v1330 = vld [vmem:[%s1321 + $0x20] sm:$0xf]
        %v1331 = vld [vmem:[%s1321 + $0x24] sm:$0xf]
        %v1332 = vld [vmem:[%s1321 + $0x28] sm:$0xf]
        %v1333 = vld [vmem:[%s1321 + $0x2c] sm:$0xf]
        %v1334 = vld [vmem:[%s1321 + $0x30] sm:$0xf]
        %v1335 = vld [vmem:[%s1321 + $0x34] sm:$0xf]
        %v1336 = vld [vmem:[%s1321 + $0x38] sm:$0xf]
        %v1337 = vld [vmem:[%s1321 + $0x3c] sm:$0xf]
        %v1354 = vunpack.c.l.b16 %v1322
        %v1355 = vunpack.c.l.b16 %v1323
        %v1356 = vunpack.c.l.b16 %v1324
        %v1357 = vunpack.c.l.b16 %v1325
        %v1358 = vunpack.c.l.b16 %v1326
        %v1359 = vunpack.c.l.b16 %v1327
        %v1360 = vunpack.c.l.b16 %v1328
        %v1361 = vunpack.c.l.b16 %v1329
        %v1362 = vunpack.c.l.b16 %v1330
        %v1363 = vunpack.c.l.b16 %v1331
        %v1364 = vunpack.c.l.b16 %v1332
        %v1365 = vunpack.c.l.b16 %v1333
        %v1366 = vunpack.c.l.b16 %v1334
        %v1367 = vunpack.c.l.b16 %v1335
        %v1368 = vunpack.c.l.b16 %v1336
        %v1369 = vunpack.c.l.b16 %v1337
        %v1370 = vpack.c.b16 %v1355, %v1354
        %v1371 = vpack.c.b16 %v1357, %v1356
        %v1372 = vpack.c.b16 %v1359, %v1358
        %v1373 = vpack.c.b16 %v1361, %v1360
        %v1374 = vpack.c.b16 %v1363, %v1362
        %v1375 = vpack.c.b16 %v1365, %v1364
        %v1376 = vpack.c.b16 %v1367, %v1366
        %v1377 = vpack.c.b16 %v1369, %v1368
        %1386 = vmatprep.subr.bf16.mxu0 0
        %1387 = vmatpush1.bf16.msra.mxu0 %v1370
        %1388 = vmatprep.subr.bf16.mxu0 0
        %1389 = vmatpush1.bf16.msra.mxu0 %v1371
        %1390 = vmatprep.subr.bf16.mxu0 0
        %1391 = vmatpush1.bf16.msra.mxu0 %v1372
        %1392 = vmatprep.subr.bf16.mxu0 0
        %1393 = vmatpush1.bf16.msra.mxu0 %v1373
        %1394 = vmatprep.subr.bf16.mxu0 0
        %1395 = vmatpush1.bf16.msra.mxu0 %v1374
        %1396 = vmatprep.subr.bf16.mxu0 0
        %1397 = vmatpush1.bf16.msra.mxu0 %v1375
        %1398 = vmatprep.subr.bf16.mxu0 0
        %1399 = vmatpush1.bf16.msra.mxu0 %v1376
        %1400 = vmatprep.subr.bf16.mxu0 0
        %1401 = vmatpush1.bf16.msra.mxu0 %v1377
        %1402 = vmatprep.subr.bf16.mxu0 0
        %1403 = vmatpush1.bf16.msra.mxu0 0
        %1404 = vmatprep.subr.bf16.mxu0 0
        %1405 = vmatpush1.bf16.msra.mxu0 0
        %1406 = vmatprep.subr.bf16.mxu0 0
        %1407 = vmatpush1.bf16.msra.mxu0 0
        %1408 = vmatprep.subr.bf16.mxu0 0
        %1409 = vmatpush1.bf16.msra.mxu0 0
        %1410 = vmatprep.subr.bf16.mxu0 0
        %1411 = vmatpush1.bf16.msra.mxu0 0
        %1412 = vmatprep.subr.bf16.mxu0 0
        %1413 = vmatpush1.bf16.msra.mxu0 0
        %1414 = vmatprep.subr.bf16.mxu0 0
        %1415 = vmatpush1.bf16.msra.mxu0 0
        %1416 = vmatprep.subr.bf16.mxu0 0
        %1417 = vmatpush1.bf16.msra.mxu0 0
        %1418 = vmatprep.mubr.bf16.mxu0 0
        %1419 = vmatmul.mubr.bf16.gmra.mrb[0].mxu0 %v1136
        %v1420 = vpop.f32.mrb[0].mxu0
        %v1421 = vadd.f32 0.0, %v1420
        %v1422 = vpop.f32.mrb[0].mxu0
        %v1423 = vpop.f32.mrb[0].mxu0
        %v1424 = vadd.f32 0.0, %v1423
        %v1425 = vpop.f32.mrb[0].mxu0
        %1426 = vmatprep.mubr.bf16.mxu0 0
        %1427 = vmatmul.mubr.bf16.gmra.mrb[0].mxu0 %v1137
        %v1428 = vpop.f32.mrb[0].mxu0
        %v1429 = vadd.f32 0.0, %v1428
        %v1430 = vpop.f32.mrb[0].mxu0
        %v1431 = vpop.f32.mrb[0].mxu0
        %v1432 = vadd.f32 0.0, %v1431
        %v1433 = vpop.f32.mrb[0].mxu0
        %1434 = vmatprep.mubr.bf16.mxu0 0
        %1435 = vmatmul.mubr.bf16.gmra.mrb[0].mxu0 %v1138
        %v1436 = vpop.f32.mrb[0].mxu0
        %v1437 = vadd.f32 0.0, %v1436
        %v1438 = vpop.f32.mrb[0].mxu0
        %v1439 = vpop.f32.mrb[0].mxu0
        %v1440 = vadd.f32 0.0, %v1439
        %v1441 = vpop.f32.mrb[0].mxu0
        %1442 = vmatprep.mubr.bf16.mxu0 0
        %1443 = vmatmul.mubr.bf16.gmra.mrb[0].mxu0 %v1139
        %v1444 = vpop.f32.mrb[0].mxu0
        %v1445 = vadd.f32 0.0, %v1444
        %v1446 = vpop.f32.mrb[0].mxu0
        %v1447 = vpop.f32.mrb[0].mxu0
        %v1448 = vadd.f32 0.0, %v1447
        %v1449 = vpop.f32.mrb[0].mxu0
        %1450 = vmatprep.mubr.bf16.mxu0 0
        %1451 = vmatmul.mubr.bf16.gmra.mrb[0].mxu0 %v1140
        %v1452 = vpop.f32.mrb[0].mxu0
        %v1453 = vadd.f32 0.0, %v1452
        %v1454 = vpop.f32.mrb[0].mxu0
        %v1455 = vpop.f32.mrb[0].mxu0
        %v1456 = vadd.f32 0.0, %v1455
        %v1457 = vpop.f32.mrb[0].mxu0
        %1458 = vmatprep.mubr.bf16.mxu0 0
        %1459 = vmatmul.mubr.bf16.gmra.mrb[0].mxu0 %v1141
        %v1460 = vpop.f32.mrb[0].mxu0
        %v1461 = vadd.f32 0.0, %v1460
        %v1462 = vpop.f32.mrb[0].mxu0
        %v1463 = vpop.f32.mrb[0].mxu0
        %v1464 = vadd.f32 0.0, %v1463
        %v1465 = vpop.f32.mrb[0].mxu0
        %1466 = vmatprep.mubr.bf16.mxu0 0
        %1467 = vmatmul.mubr.bf16.gmra.mrb[0].mxu0 %v1142
        %v1468 = vpop.f32.mrb[0].mxu0
        %v1469 = vadd.f32 0.0, %v1468
        %v1470 = vpop.f32.mrb[0].mxu0
        %v1471 = vpop.f32.mrb[0].mxu0
        %v1472 = vadd.f32 0.0, %v1471
        %v1473 = vpop.f32.mrb[0].mxu0
        %1474 = vmatprep.mubr.bf16.mxu0 0
        %1475 = vmatmul.mubr.bf16.gmra.mrb[0].mxu0 %v1143
        %v1476 = vpop.f32.mrb[0].mxu0
        %v1477 = vadd.f32 0.0, %v1476
        %v1478 = vpop.f32.mrb[0].mxu0
        %v1479 = vpop.f32.mrb[0].mxu0
        %v1480 = vadd.f32 0.0, %v1479
        %v1481 = vpop.f32.mrb[0].mxu0
        %1482 = vmatprep.mubr.bf16.mxu0 0
        %1483 = vmatmul.mubr.bf16.gmra.mrb[0].mxu0 %v1144
        %v1484 = vpop.f32.mrb[0].mxu0
        %v1485 = vadd.f32 0.0, %v1484
        %v1486 = vpop.f32.mrb[0].mxu0
        %v1487 = vpop.f32.mrb[0].mxu0
        %v1488 = vpop.f32.mrb[0].mxu0
        %1489 = vdwg.mxu0
        %v1507 = vrot.slane %v1421, 1
        %v1508 = vrot.slane %v1424, 1
        %v1509 = vsel %vm747, %v1507, %v1508
        %v1510 = vrot.slane %v1429, 1
        %v1511 = vsel %vm747, %v1508, %v1510
        %v1512 = vrot.slane %v1432, 1
        %v1513 = vsel %vm747, %v1510, %v1512
        %v1514 = vrot.slane %v1437, 1
        %v1515 = vsel %vm747, %v1512, %v1514
        %v1516 = vrot.slane %v1440, 1
        %v1517 = vsel %vm747, %v1514, %v1516
        %v1518 = vrot.slane %v1445, 1
        %v1519 = vsel %vm747, %v1516, %v1518
        %v1520 = vrot.slane %v1448, 1
        %v1521 = vsel %vm747, %v1518, %v1520
        %v1522 = vrot.slane %v1453, 1
        %v1523 = vsel %vm747, %v1520, %v1522
        %v1524 = vrot.slane %v1456, 1
        %v1525 = vsel %vm747, %v1522, %v1524
        %v1526 = vrot.slane %v1461, 1
        %v1527 = vsel %vm747, %v1524, %v1526
        %v1528 = vrot.slane %v1464, 1
        %v1529 = vsel %vm747, %v1526, %v1528
        %v1530 = vrot.slane %v1469, 1
        %v1531 = vsel %vm747, %v1528, %v1530
        %v1532 = vrot.slane %v1472, 1
        %v1533 = vsel %vm747, %v1530, %v1532
        %v1534 = vrot.slane %v1477, 1
        %v1535 = vsel %vm747, %v1532, %v1534
        %v1536 = vrot.slane %v1480, 1
        %v1537 = vsel %vm747, %v1534, %v1536
        %v1538 = vrot.slane %v1485, 1
        %v1539 = vsel %vm747, %v1536, %v1538
        %v1556 = vadd.f32 %v1305, %v1509
        %v1557 = vadd.f32 %v1306, %v1511
        %v1558 = vadd.f32 %v1307, %v1513
        %v1559 = vadd.f32 %v1308, %v1515
        %v1560 = vadd.f32 %v1309, %v1517
        %v1561 = vadd.f32 %v1310, %v1519
        %v1562 = vadd.f32 %v1311, %v1521
        %v1563 = vadd.f32 %v1312, %v1523
        %v1564 = vadd.f32 %v1313, %v1525
        %v1565 = vadd.f32 %v1314, %v1527
        %v1566 = vadd.f32 %v1315, %v1529
        %v1567 = vadd.f32 %v1316, %v1531
        %v1568 = vadd.f32 %v1317, %v1533
        %v1569 = vadd.f32 %v1318, %v1535
        %v1570 = vadd.f32 %v1319, %v1537
        %v1571 = vadd.f32 %v1320, %v1539
        %s1572 = scalar_lea.vmem [#allocation6], 320
        %v1573 = vld [vmem:[%s1572] sm:$0xf]
        %v1574 = vld [vmem:[%s1572 + $0x4] sm:$0xf]
        %v1575 = vld [vmem:[%s1572 + $0x8] sm:$0xf]
        %v1576 = vld [vmem:[%s1572 + $0xc] sm:$0xf]
        %v1577 = vld [vmem:[%s1572 + $0x10] sm:$0xf]
        %v1578 = vld [vmem:[%s1572 + $0x14] sm:$0xf]
        %v1579 = vld [vmem:[%s1572 + $0x18] sm:$0xf]
        %v1580 = vld [vmem:[%s1572 + $0x1c] sm:$0xf]
        %v1581 = vld [vmem:[%s1572 + $0x20] sm:$0xf]
        %v1582 = vld [vmem:[%s1572 + $0x24] sm:$0xf]
        %v1583 = vld [vmem:[%s1572 + $0x28] sm:$0xf]
        %v1584 = vld [vmem:[%s1572 + $0x2c] sm:$0xf]
        %v1585 = vld [vmem:[%s1572 + $0x30] sm:$0xf]
        %v1586 = vld [vmem:[%s1572 + $0x34] sm:$0xf]
        %v1587 = vld [vmem:[%s1572 + $0x38] sm:$0xf]
        %v1588 = vld [vmem:[%s1572 + $0x3c] sm:$0xf]
        %v1605 = vunpack.c.l.b16 %v1573
        %v1606 = vunpack.c.l.b16 %v1574
        %v1607 = vunpack.c.l.b16 %v1575
        %v1608 = vunpack.c.l.b16 %v1576
        %v1609 = vunpack.c.l.b16 %v1577
        %v1610 = vunpack.c.l.b16 %v1578
        %v1611 = vunpack.c.l.b16 %v1579
        %v1612 = vunpack.c.l.b16 %v1580
        %v1613 = vunpack.c.l.b16 %v1581
        %v1614 = vunpack.c.l.b16 %v1582
        %v1615 = vunpack.c.l.b16 %v1583
        %v1616 = vunpack.c.l.b16 %v1584
        %v1617 = vunpack.c.l.b16 %v1585
        %v1618 = vunpack.c.l.b16 %v1586
        %v1619 = vunpack.c.l.b16 %v1587
        %v1620 = vunpack.c.l.b16 %v1588
        %v1621 = vpack.c.b16 %v1606, %v1605
        %v1622 = vpack.c.b16 %v1608, %v1607
        %v1623 = vpack.c.b16 %v1610, %v1609
        %v1624 = vpack.c.b16 %v1612, %v1611
        %v1625 = vpack.c.b16 %v1614, %v1613
        %v1626 = vpack.c.b16 %v1616, %v1615
        %v1627 = vpack.c.b16 %v1618, %v1617
        %v1628 = vpack.c.b16 %v1620, %v1619
        %1637 = vmatprep.subr.bf16.mxu0 0
        %1638 = vmatpush1.bf16.msra.mxu0 %v1621
        %1639 = vmatprep.subr.bf16.mxu0 0
        %1640 = vmatpush1.bf16.msra.mxu0 %v1622
        %1641 = vmatprep.subr.bf16.mxu0 0
        %1642 = vmatpush1.bf16.msra.mxu0 %v1623
        %1643 = vmatprep.subr.bf16.mxu0 0
        %1644 = vmatpush1.bf16.msra.mxu0 %v1624
        %1645 = vmatprep.subr.bf16.mxu0 0
        %1646 = vmatpush1.bf16.msra.mxu0 %v1625
        %1647 = vmatprep.subr.bf16.mxu0 0
        %1648 = vmatpush1.bf16.msra.mxu0 %v1626
        %1649 = vmatprep.subr.bf16.mxu0 0
        %1650 = vmatpush1.bf16.msra.mxu0 %v1627
        %1651 = vmatprep.subr.bf16.mxu0 0
        %1652 = vmatpush1.bf16.msra.mxu0 %v1628
        %1653 = vmatprep.subr.bf16.mxu0 0
        %1654 = vmatpush1.bf16.msra.mxu0 0
        %1655 = vmatprep.subr.bf16.mxu0 0
        %1656 = vmatpush1.bf16.msra.mxu0 0
        %1657 = vmatprep.subr.bf16.mxu0 0
        %1658 = vmatpush1.bf16.msra.mxu0 0
        %1659 = vmatprep.subr.bf16.mxu0 0
        %1660 = vmatpush1.bf16.msra.mxu0 0
        %1661 = vmatprep.subr.bf16.mxu0 0
        %1662 = vmatpush1.bf16.msra.mxu0 0
        %1663 = vmatprep.subr.bf16.mxu0 0
        %1664 = vmatpush1.bf16.msra.mxu0 0
        %1665 = vmatprep.subr.bf16.mxu0 0
        %1666 = vmatpush1.bf16.msra.mxu0 0
        %1667 = vmatprep.subr.bf16.mxu0 0
        %1668 = vmatpush1.bf16.msra.mxu0 0
        %1669 = vmatprep.mubr.bf16.mxu0 0
        %1670 = vmatmul.mubr.bf16.gmra.mrb[0].mxu0 %v1136
        %v1671 = vpop.f32.mrb[0].mxu0
        %v1672 = vadd.f32 0.0, %v1671
        %v1673 = vpop.f32.mrb[0].mxu0
        %v1674 = vpop.f32.mrb[0].mxu0
        %v1675 = vadd.f32 0.0, %v1674
        %v1676 = vpop.f32.mrb[0].mxu0
        %1677 = vmatprep.mubr.bf16.mxu0 0
        %1678 = vmatmul.mubr.bf16.gmra.mrb[0].mxu0 %v1137
        %v1679 = vpop.f32.mrb[0].mxu0
        %v1680 = vadd.f32 0.0, %v1679
        %v1681 = vpop.f32.mrb[0].mxu0
        %v1682 = vpop.f32.mrb[0].mxu0
        %v1683 = vadd.f32 0.0, %v1682
        %v1684 = vpop.f32.mrb[0].mxu0
        %1685 = vmatprep.mubr.bf16.mxu0 0
        %1686 = vmatmul.mubr.bf16.gmra.mrb[0].mxu0 %v1138
        %v1687 = vpop.f32.mrb[0].mxu0
        %v1688 = vadd.f32 0.0, %v1687
        %v1689 = vpop.f32.mrb[0].mxu0
        %v1690 = vpop.f32.mrb[0].mxu0
        %v1691 = vadd.f32 0.0, %v1690
        %v1692 = vpop.f32.mrb[0].mxu0
        %1693 = vmatprep.mubr.bf16.mxu0 0
        %1694 = vmatmul.mubr.bf16.gmra.mrb[0].mxu0 %v1139
        %v1695 = vpop.f32.mrb[0].mxu0
        %v1696 = vadd.f32 0.0, %v1695
        %v1697 = vpop.f32.mrb[0].mxu0
        %v1698 = vpop.f32.mrb[0].mxu0
        %v1699 = vadd.f32 0.0, %v1698
        %v1700 = vpop.f32.mrb[0].mxu0
        %1701 = vmatprep.mubr.bf16.mxu0 0
        %1702 = vmatmul.mubr.bf16.gmra.mrb[0].mxu0 %v1140
        %v1703 = vpop.f32.mrb[0].mxu0
        %v1704 = vadd.f32 0.0, %v1703
        %v1705 = vpop.f32.mrb[0].mxu0
        %v1706 = vpop.f32.mrb[0].mxu0
        %v1707 = vadd.f32 0.0, %v1706
        %v1708 = vpop.f32.mrb[0].mxu0
        %1709 = vmatprep.mubr.bf16.mxu0 0
        %1710 = vmatmul.mubr.bf16.gmra.mrb[0].mxu0 %v1141
        %v1711 = vpop.f32.mrb[0].mxu0
        %v1712 = vadd.f32 0.0, %v1711
        %v1713 = vpop.f32.mrb[0].mxu0
        %v1714 = vpop.f32.mrb[0].mxu0
        %v1715 = vadd.f32 0.0, %v1714
        %v1716 = vpop.f32.mrb[0].mxu0
        %1717 = vmatprep.mubr.bf16.mxu0 0
        %1718 = vmatmul.mubr.bf16.gmra.mrb[0].mxu0 %v1142
        %v1719 = vpop.f32.mrb[0].mxu0
        %v1720 = vadd.f32 0.0, %v1719
        %v1721 = vpop.f32.mrb[0].mxu0
        %v1722 = vpop.f32.mrb[0].mxu0
        %v1723 = vadd.f32 0.0, %v1722
        %v1724 = vpop.f32.mrb[0].mxu0
        %1725 = vmatprep.mubr.bf16.mxu0 0
        %1726 = vmatmul.mubr.bf16.gmra.mrb[0].mxu0 %v1143
        %v1727 = vpop.f32.mrb[0].mxu0
        %v1728 = vadd.f32 0.0, %v1727
        %v1729 = vpop.f32.mrb[0].mxu0
        %v1730 = vpop.f32.mrb[0].mxu0
        %v1731 = vadd.f32 0.0, %v1730
        %v1732 = vpop.f32.mrb[0].mxu0
        %1733 = vmatprep.mubr.bf16.mxu0 0
        %1734 = vmatmul.mubr.bf16.gmra.mrb[0].mxu0 %v1144
        %v1735 = vpop.f32.mrb[0].mxu0
        %v1736 = vadd.f32 0.0, %v1735
        %v1737 = vpop.f32.mrb[0].mxu0
        %v1738 = vpop.f32.mrb[0].mxu0
        %v1739 = vpop.f32.mrb[0].mxu0
        %1740 = vdwg.mxu0
        %v1758 = vrot.slane %v1672, 2
        %v1759 = vrot.slane %v1675, 2
        %v1760 = vsel %vm999, %v1758, %v1759
        %v1761 = vrot.slane %v1680, 2
        %v1762 = vsel %vm999, %v1759, %v1761
        %v1763 = vrot.slane %v1683, 2
        %v1764 = vsel %vm999, %v1761, %v1763
        %v1765 = vrot.slane %v1688, 2
        %v1766 = vsel %vm999, %v1763, %v1765
        %v1767 = vrot.slane %v1691, 2
        %v1768 = vsel %vm999, %v1765, %v1767
        %v1769 = vrot.slane %v1696, 2
        %v1770 = vsel %vm999, %v1767, %v1769
        %v1771 = vrot.slane %v1699, 2
        %v1772 = vsel %vm999, %v1769, %v1771
        %v1773 = vrot.slane %v1704, 2
        %v1774 = vsel %vm999, %v1771, %v1773
        %v1775 = vrot.slane %v1707, 2
        %v1776 = vsel %vm999, %v1773, %v1775
        %v1777 = vrot.slane %v1712, 2
        %v1778 = vsel %vm999, %v1775, %v1777
        %v1779 = vrot.slane %v1715, 2
        %v1780 = vsel %vm999, %v1777, %v1779
        %v1781 = vrot.slane %v1720, 2
        %v1782 = vsel %vm999, %v1779, %v1781
        %v1783 = vrot.slane %v1723, 2
        %v1784 = vsel %vm999, %v1781, %v1783
        %v1785 = vrot.slane %v1728, 2
        %v1786 = vsel %vm999, %v1783, %v1785
        %v1787 = vrot.slane %v1731, 2
        %v1788 = vsel %vm999, %v1785, %v1787
        %v1789 = vrot.slane %v1736, 2
        %v1790 = vsel %vm999, %v1787, %v1789
        %v1807 = vadd.f32 %v1556, %v1760
        %v1808 = vadd.f32 %v1557, %v1762
        %v1809 = vadd.f32 %v1558, %v1764
        %v1810 = vadd.f32 %v1559, %v1766
        %v1811 = vadd.f32 %v1560, %v1768
        %v1812 = vadd.f32 %v1561, %v1770
        %v1813 = vadd.f32 %v1562, %v1772
        %v1814 = vadd.f32 %v1563, %v1774
        %v1815 = vadd.f32 %v1564, %v1776
        %v1816 = vadd.f32 %v1565, %v1778
        %v1817 = vadd.f32 %v1566, %v1780
        %v1818 = vadd.f32 %v1567, %v1782
        %v1819 = vadd.f32 %v1568, %v1784
        %v1820 = vadd.f32 %v1569, %v1786
        %v1821 = vadd.f32 %v1570, %v1788
        %v1822 = vadd.f32 %v1571, %v1790
        %v1823 = vld [vmem:[%s263 + $0x10] sm:$0xf]
        %v1824 = vld [vmem:[%s263 + $0x14] sm:$0xf]
        %v1825 = vld [vmem:[%s263 + $0x18] sm:$0xf]
        %v1826 = vld [vmem:[%s263 + $0x1c] sm:$0xf]
        %v1827 = vld [vmem:[%s263 + $0x20] sm:$0xf]
        %v1828 = vld [vmem:[%s263 + $0x24] sm:$0xf]
        %v1829 = vld [vmem:[%s263 + $0x28] sm:$0xf]
        %v1830 = vld [vmem:[%s263 + $0x2c] sm:$0xf]
        %v1831 = vld [vmem:[%s263 + $0x30] sm:$0xf]
        %v1832 = vld [vmem:[%s263 + $0x34] sm:$0xf]
        %v1833 = vld [vmem:[%s263 + $0x38] sm:$0xf]
        %v1834 = vld [vmem:[%s263 + $0x3c] sm:$0xf]
        %v1835 = vld [vmem:[%s263 + $0x40] sm:$0xf]
        %v1836 = vld [vmem:[%s263 + $0x44] sm:$0xf]
        %v1837 = vld [vmem:[%s263 + $0x48] sm:$0xf]
        %v1838 = vld [vmem:[%s263 + $0x4c] sm:$0xf]
        %v1839 = vld [vmem:[%s263 + $0x50] sm:$0xf]
        %v1840 = vld [vmem:[%s263 + $0x54] sm:$0xf]
        %s1841 = scalar_lea.vmem [#allocation6], 384
        %v1842 = vld [vmem:[%s1841] sm:$0xf]
        %v1843 = vld [vmem:[%s1841 + $0x4] sm:$0xf]
        %v1844 = vld [vmem:[%s1841 + $0x8] sm:$0xf]
        %v1845 = vld [vmem:[%s1841 + $0xc] sm:$0xf]
        %v1846 = vld [vmem:[%s1841 + $0x10] sm:$0xf]
        %v1847 = vld [vmem:[%s1841 + $0x14] sm:$0xf]
        %v1848 = vld [vmem:[%s1841 + $0x18] sm:$0xf]
        %v1849 = vld [vmem:[%s1841 + $0x1c] sm:$0xf]
        %v1850 = vld [vmem:[%s1841 + $0x20] sm:$0xf]
        %v1851 = vld [vmem:[%s1841 + $0x24] sm:$0xf]
        %v1852 = vld [vmem:[%s1841 + $0x28] sm:$0xf]
        %v1853 = vld [vmem:[%s1841 + $0x2c] sm:$0xf]
        %v1854 = vld [vmem:[%s1841 + $0x30] sm:$0xf]
        %v1855 = vld [vmem:[%s1841 + $0x34] sm:$0xf]
        %v1856 = vld [vmem:[%s1841 + $0x38] sm:$0xf]
        %v1857 = vld [vmem:[%s1841 + $0x3c] sm:$0xf]
        %v1876 = vunpack.c.l.b16 %v1823
        %v1877 = vunpack.c.l.b16 %v1824
        %v1878 = vunpack.c.l.b16 %v1825
        %v1879 = vunpack.c.l.b16 %v1826
        %v1880 = vunpack.c.l.b16 %v1827
        %v1881 = vunpack.c.l.b16 %v1828
        %v1882 = vunpack.c.l.b16 %v1829
        %v1883 = vunpack.c.l.b16 %v1830
        %v1884 = vunpack.c.l.b16 %v1831
        %v1885 = vunpack.c.l.b16 %v1832
        %v1886 = vunpack.c.l.b16 %v1833
        %v1887 = vunpack.c.l.b16 %v1834
        %v1888 = vunpack.c.l.b16 %v1835
        %v1889 = vunpack.c.l.b16 %v1836
        %v1890 = vunpack.c.l.b16 %v1837
        %v1891 = vunpack.c.l.b16 %v1838
        %v1892 = vunpack.c.l.b16 %v1839
        %v1893 = vunpack.c.l.b16 %v1840
        %v1894 = vpack.c.b16 %v1877, %v1876
        %v1895 = vpack.c.b16 %v1879, %v1878
        %v1896 = vpack.c.b16 %v1881, %v1880
        %v1897 = vpack.c.b16 %v1883, %v1882
        %v1898 = vpack.c.b16 %v1885, %v1884
        %v1899 = vpack.c.b16 %v1887, %v1886
        %v1900 = vpack.c.b16 %v1889, %v1888
        %v1901 = vpack.c.b16 %v1891, %v1890
        %v1902 = vpack.c.b16 %v1893, %v1892
        %v1928 = vunpack.c.l.b16 %v1842
        %v1929 = vunpack.c.l.b16 %v1843
        %v1930 = vunpack.c.l.b16 %v1844
        %v1931 = vunpack.c.l.b16 %v1845
        %v1932 = vunpack.c.l.b16 %v1846
        %v1933 = vunpack.c.l.b16 %v1847
        %v1934 = vunpack.c.l.b16 %v1848
        %v1935 = vunpack.c.l.b16 %v1849
        %v1936 = vunpack.c.l.b16 %v1850
        %v1937 = vunpack.c.l.b16 %v1851
        %v1938 = vunpack.c.l.b16 %v1852
        %v1939 = vunpack.c.l.b16 %v1853
        %v1940 = vunpack.c.l.b16 %v1854
        %v1941 = vunpack.c.l.b16 %v1855
        %v1942 = vunpack.c.l.b16 %v1856
        %v1943 = vunpack.c.l.b16 %v1857
        %v1944 = vpack.c.b16 %v1929, %v1928
        %v1945 = vpack.c.b16 %v1931, %v1930
        %v1946 = vpack.c.b16 %v1933, %v1932
        %v1947 = vpack.c.b16 %v1935, %v1934
        %v1948 = vpack.c.b16 %v1937, %v1936
        %v1949 = vpack.c.b16 %v1939, %v1938
        %v1950 = vpack.c.b16 %v1941, %v1940
        %v1951 = vpack.c.b16 %v1943, %v1942
        %1960 = vmatprep.subr.bf16.mxu0 0
        %1961 = vmatpush1.bf16.msra.mxu0 %v1944
        %1962 = vmatprep.subr.bf16.mxu0 0
        %1963 = vmatpush1.bf16.msra.mxu0 %v1945
        %1964 = vmatprep.subr.bf16.mxu0 0
        %1965 = vmatpush1.bf16.msra.mxu0 %v1946
        %1966 = vmatprep.subr.bf16.mxu0 0
        %1967 = vmatpush1.bf16.msra.mxu0 %v1947
        %1968 = vmatprep.subr.bf16.mxu0 0
        %1969 = vmatpush1.bf16.msra.mxu0 %v1948
        %1970 = vmatprep.subr.bf16.mxu0 0
        %1971 = vmatpush1.bf16.msra.mxu0 %v1949
        %1972 = vmatprep.subr.bf16.mxu0 0
        %1973 = vmatpush1.bf16.msra.mxu0 %v1950
        %1974 = vmatprep.subr.bf16.mxu0 0
        %1975 = vmatpush1.bf16.msra.mxu0 %v1951
        %1976 = vmatprep.subr.bf16.mxu0 0
        %1977 = vmatpush1.bf16.msra.mxu0 0
        %1978 = vmatprep.subr.bf16.mxu0 0
        %1979 = vmatpush1.bf16.msra.mxu0 0
        %1980 = vmatprep.subr.bf16.mxu0 0
        %1981 = vmatpush1.bf16.msra.mxu0 0
        %1982 = vmatprep.subr.bf16.mxu0 0
        %1983 = vmatpush1.bf16.msra.mxu0 0
        %1984 = vmatprep.subr.bf16.mxu0 0
        %1985 = vmatpush1.bf16.msra.mxu0 0
        %1986 = vmatprep.subr.bf16.mxu0 0
        %1987 = vmatpush1.bf16.msra.mxu0 0
        %1988 = vmatprep.subr.bf16.mxu0 0
        %1989 = vmatpush1.bf16.msra.mxu0 0
        %1990 = vmatprep.subr.bf16.mxu0 0
        %1991 = vmatpush1.bf16.msra.mxu0 0
        %1992 = vmatprep.mubr.bf16.mxu0 0
        %1993 = vmatmul.mubr.bf16.gmra.mrb[0].mxu0 %v1894
        %v1994 = vpop.f32.mrb[0].mxu0
        %v1995 = vadd.f32 0.0, %v1994
        %v1996 = vpop.f32.mrb[0].mxu0
        %v1997 = vpop.f32.mrb[0].mxu0
        %v1998 = vadd.f32 0.0, %v1997
        %v1999 = vpop.f32.mrb[0].mxu0
        %2000 = vmatprep.mubr.bf16.mxu0 0
        %2001 = vmatmul.mubr.bf16.gmra.mrb[0].mxu0 %v1895
        %v2002 = vpop.f32.mrb[0].mxu0
        %v2003 = vadd.f32 0.0, %v2002
        %v2004 = vpop.f32.mrb[0].mxu0
        %v2005 = vpop.f32.mrb[0].mxu0
        %v2006 = vadd.f32 0.0, %v2005
        %v2007 = vpop.f32.mrb[0].mxu0
        %2008 = vmatprep.mubr.bf16.mxu0 0
        %2009 = vmatmul.mubr.bf16.gmra.mrb[0].mxu0 %v1896
        %v2010 = vpop.f32.mrb[0].mxu0
        %v2011 = vadd.f32 0.0, %v2010
        %v2012 = vpop.f32.mrb[0].mxu0
        %v2013 = vpop.f32.mrb[0].mxu0
        %v2014 = vadd.f32 0.0, %v2013
        %v2015 = vpop.f32.mrb[0].mxu0
        %2016 = vmatprep.mubr.bf16.mxu0 0
        %2017 = vmatmul.mubr.bf16.gmra.mrb[0].mxu0 %v1897
        %v2018 = vpop.f32.mrb[0].mxu0
        %v2019 = vadd.f32 0.0, %v2018
        %v2020 = vpop.f32.mrb[0].mxu0
        %v2021 = vpop.f32.mrb[0].mxu0
        %v2022 = vadd.f32 0.0, %v2021
        %v2023 = vpop.f32.mrb[0].mxu0
        %2024 = vmatprep.mubr.bf16.mxu0 0
        %2025 = vmatmul.mubr.bf16.gmra.mrb[0].mxu0 %v1898
        %v2026 = vpop.f32.mrb[0].mxu0
        %v2027 = vadd.f32 0.0, %v2026
        %v2028 = vpop.f32.mrb[0].mxu0
        %v2029 = vpop.f32.mrb[0].mxu0
        %v2030 = vadd.f32 0.0, %v2029
        %v2031 = vpop.f32.mrb[0].mxu0
        %2032 = vmatprep.mubr.bf16.mxu0 0
        %2033 = vmatmul.mubr.bf16.gmra.mrb[0].mxu0 %v1899
        %v2034 = vpop.f32.mrb[0].mxu0
        %v2035 = vadd.f32 0.0, %v2034
        %v2036 = vpop.f32.mrb[0].mxu0
        %v2037 = vpop.f32.mrb[0].mxu0
        %v2038 = vadd.f32 0.0, %v2037
        %v2039 = vpop.f32.mrb[0].mxu0
        %2040 = vmatprep.mubr.bf16.mxu0 0
        %2041 = vmatmul.mubr.bf16.gmra.mrb[0].mxu0 %v1900
        %v2042 = vpop.f32.mrb[0].mxu0
        %v2043 = vadd.f32 0.0, %v2042
        %v2044 = vpop.f32.mrb[0].mxu0
        %v2045 = vpop.f32.mrb[0].mxu0
        %v2046 = vadd.f32 0.0, %v2045
        %v2047 = vpop.f32.mrb[0].mxu0
        %2048 = vmatprep.mubr.bf16.mxu0 0
        %2049 = vmatmul.mubr.bf16.gmra.mrb[0].mxu0 %v1901
        %v2050 = vpop.f32.mrb[0].mxu0
        %v2051 = vadd.f32 0.0, %v2050
        %v2052 = vpop.f32.mrb[0].mxu0
        %v2053 = vpop.f32.mrb[0].mxu0
        %v2054 = vadd.f32 0.0, %v2053
        %v2055 = vpop.f32.mrb[0].mxu0
        %2056 = vmatprep.mubr.bf16.mxu0 0
        %2057 = vmatmul.mubr.bf16.gmra.mrb[0].mxu0 %v1902
        %v2058 = vpop.f32.mrb[0].mxu0
        %v2059 = vpop.f32.mrb[0].mxu0
        %v2060 = vpop.f32.mrb[0].mxu0
        %v2061 = vpop.f32.mrb[0].mxu0
        %2062 = vdwg.mxu0
        %v2063 = vadd.f32 %v1807, %v1995
        %v2064 = vadd.f32 %v1808, %v1998
        %v2065 = vadd.f32 %v1809, %v2003
        %v2066 = vadd.f32 %v1810, %v2006
        %v2067 = vadd.f32 %v1811, %v2011
        %v2068 = vadd.f32 %v1812, %v2014
        %v2069 = vadd.f32 %v1813, %v2019
        %v2070 = vadd.f32 %v1814, %v2022
        %v2071 = vadd.f32 %v1815, %v2027
        %v2072 = vadd.f32 %v1816, %v2030
        %v2073 = vadd.f32 %v1817, %v2035
        %v2074 = vadd.f32 %v1818, %v2038
        %v2075 = vadd.f32 %v1819, %v2043
        %v2076 = vadd.f32 %v1820, %v2046
        %v2077 = vadd.f32 %v1821, %v2051
        %v2078 = vadd.f32 %v1822, %v2054
        %s2079 = scalar_lea.vmem [#allocation6], 448
        %v2080 = vld [vmem:[%s2079] sm:$0xf]
        %v2081 = vld [vmem:[%s2079 + $0x4] sm:$0xf]
        %v2082 = vld [vmem:[%s2079 + $0x8] sm:$0xf]
        %v2083 = vld [vmem:[%s2079 + $0xc] sm:$0xf]
        %v2084 = vld [vmem:[%s2079 + $0x10] sm:$0xf]
        %v2085 = vld [vmem:[%s2079 + $0x14] sm:$0xf]
        %v2086 = vld [vmem:[%s2079 + $0x18] sm:$0xf]
        %v2087 = vld [vmem:[%s2079 + $0x1c] sm:$0xf]
        %v2088 = vld [vmem:[%s2079 + $0x20] sm:$0xf]
        %v2089 = vld [vmem:[%s2079 + $0x24] sm:$0xf]
        %v2090 = vld [vmem:[%s2079 + $0x28] sm:$0xf]
        %v2091 = vld [vmem:[%s2079 + $0x2c] sm:$0xf]
        %v2092 = vld [vmem:[%s2079 + $0x30] sm:$0xf]
        %v2093 = vld [vmem:[%s2079 + $0x34] sm:$0xf]
        %v2094 = vld [vmem:[%s2079 + $0x38] sm:$0xf]
        %v2095 = vld [vmem:[%s2079 + $0x3c] sm:$0xf]
        %v2112 = vunpack.c.l.b16 %v2080
        %v2113 = vunpack.c.l.b16 %v2081
        %v2114 = vunpack.c.l.b16 %v2082
        %v2115 = vunpack.c.l.b16 %v2083
        %v2116 = vunpack.c.l.b16 %v2084
        %v2117 = vunpack.c.l.b16 %v2085
        %v2118 = vunpack.c.l.b16 %v2086
        %v2119 = vunpack.c.l.b16 %v2087
        %v2120 = vunpack.c.l.b16 %v2088
        %v2121 = vunpack.c.l.b16 %v2089
        %v2122 = vunpack.c.l.b16 %v2090
        %v2123 = vunpack.c.l.b16 %v2091
        %v2124 = vunpack.c.l.b16 %v2092
        %v2125 = vunpack.c.l.b16 %v2093
        %v2126 = vunpack.c.l.b16 %v2094
        %v2127 = vunpack.c.l.b16 %v2095
        %v2128 = vpack.c.b16 %v2113, %v2112
        %v2129 = vpack.c.b16 %v2115, %v2114
        %v2130 = vpack.c.b16 %v2117, %v2116
        %v2131 = vpack.c.b16 %v2119, %v2118
        %v2132 = vpack.c.b16 %v2121, %v2120
        %v2133 = vpack.c.b16 %v2123, %v2122
        %v2134 = vpack.c.b16 %v2125, %v2124
        %v2135 = vpack.c.b16 %v2127, %v2126
        %2144 = vmatprep.subr.bf16.mxu0 0
        %2145 = vmatpush1.bf16.msra.mxu0 %v2128
        %2146 = vmatprep.subr.bf16.mxu0 0
        %2147 = vmatpush1.bf16.msra.mxu0 %v2129
        %2148 = vmatprep.subr.bf16.mxu0 0
        %2149 = vmatpush1.bf16.msra.mxu0 %v2130
        %2150 = vmatprep.subr.bf16.mxu0 0
        %2151 = vmatpush1.bf16.msra.mxu0 %v2131
        %2152 = vmatprep.subr.bf16.mxu0 0
        %2153 = vmatpush1.bf16.msra.mxu0 %v2132
        %2154 = vmatprep.subr.bf16.mxu0 0
        %2155 = vmatpush1.bf16.msra.mxu0 %v2133
        %2156 = vmatprep.subr.bf16.mxu0 0
        %2157 = vmatpush1.bf16.msra.mxu0 %v2134
        %2158 = vmatprep.subr.bf16.mxu0 0
        %2159 = vmatpush1.bf16.msra.mxu0 %v2135
        %2160 = vmatprep.subr.bf16.mxu0 0
        %2161 = vmatpush1.bf16.msra.mxu0 0
        %2162 = vmatprep.subr.bf16.mxu0 0
        %2163 = vmatpush1.bf16.msra.mxu0 0
        %2164 = vmatprep.subr.bf16.mxu0 0
        %2165 = vmatpush1.bf16.msra.mxu0 0
        %2166 = vmatprep.subr.bf16.mxu0 0
        %2167 = vmatpush1.bf16.msra.mxu0 0
        %2168 = vmatprep.subr.bf16.mxu0 0
        %2169 = vmatpush1.bf16.msra.mxu0 0
        %2170 = vmatprep.subr.bf16.mxu0 0
        %2171 = vmatpush1.bf16.msra.mxu0 0
        %2172 = vmatprep.subr.bf16.mxu0 0
        %2173 = vmatpush1.bf16.msra.mxu0 0
        %2174 = vmatprep.subr.bf16.mxu0 0
        %2175 = vmatpush1.bf16.msra.mxu0 0
        %2176 = vmatprep.mubr.bf16.mxu0 0
        %2177 = vmatmul.mubr.bf16.gmra.mrb[0].mxu0 %v1894
        %v2178 = vpop.f32.mrb[0].mxu0
        %v2179 = vadd.f32 0.0, %v2178
        %v2180 = vpop.f32.mrb[0].mxu0
        %v2181 = vpop.f32.mrb[0].mxu0
        %v2182 = vadd.f32 0.0, %v2181
        %v2183 = vpop.f32.mrb[0].mxu0
        %2184 = vmatprep.mubr.bf16.mxu0 0
        %2185 = vmatmul.mubr.bf16.gmra.mrb[0].mxu0 %v1895
        %v2186 = vpop.f32.mrb[0].mxu0
        %v2187 = vadd.f32 0.0, %v2186
        %v2188 = vpop.f32.mrb[0].mxu0
        %v2189 = vpop.f32.mrb[0].mxu0
        %v2190 = vadd.f32 0.0, %v2189
        %v2191 = vpop.f32.mrb[0].mxu0
        %2192 = vmatprep.mubr.bf16.mxu0 0
        %2193 = vmatmul.mubr.bf16.gmra.mrb[0].mxu0 %v1896
        %v2194 = vpop.f32.mrb[0].mxu0
        %v2195 = vadd.f32 0.0, %v2194
        %v2196 = vpop.f32.mrb[0].mxu0
        %v2197 = vpop.f32.mrb[0].mxu0
        %v2198 = vadd.f32 0.0, %v2197
        %v2199 = vpop.f32.mrb[0].mxu0
        %2200 = vmatprep.mubr.bf16.mxu0 0
        %2201 = vmatmul.mubr.bf16.gmra.mrb[0].mxu0 %v1897
        %v2202 = vpop.f32.mrb[0].mxu0
        %v2203 = vadd.f32 0.0, %v2202
        %v2204 = vpop.f32.mrb[0].mxu0
        %v2205 = vpop.f32.mrb[0].mxu0
        %v2206 = vadd.f32 0.0, %v2205
        %v2207 = vpop.f32.mrb[0].mxu0
        %2208 = vmatprep.mubr.bf16.mxu0 0
        %2209 = vmatmul.mubr.bf16.gmra.mrb[0].mxu0 %v1898
        %v2210 = vpop.f32.mrb[0].mxu0
        %v2211 = vadd.f32 0.0, %v2210
        %v2212 = vpop.f32.mrb[0].mxu0
        %v2213 = vpop.f32.mrb[0].mxu0
        %v2214 = vadd.f32 0.0, %v2213
        %v2215 = vpop.f32.mrb[0].mxu0
        %2216 = vmatprep.mubr.bf16.mxu0 0
        %2217 = vmatmul.mubr.bf16.gmra.mrb[0].mxu0 %v1899
        %v2218 = vpop.f32.mrb[0].mxu0
        %v2219 = vadd.f32 0.0, %v2218
        %v2220 = vpop.f32.mrb[0].mxu0
        %v2221 = vpop.f32.mrb[0].mxu0
        %v2222 = vadd.f32 0.0, %v2221
        %v2223 = vpop.f32.mrb[0].mxu0
        %2224 = vmatprep.mubr.bf16.mxu0 0
        %2225 = vmatmul.mubr.bf16.gmra.mrb[0].mxu0 %v1900
        %v2226 = vpop.f32.mrb[0].mxu0
        %v2227 = vadd.f32 0.0, %v2226
        %v2228 = vpop.f32.mrb[0].mxu0
        %v2229 = vpop.f32.mrb[0].mxu0
        %v2230 = vadd.f32 0.0, %v2229
        %v2231 = vpop.f32.mrb[0].mxu0
        %2232 = vmatprep.mubr.bf16.mxu0 0
        %2233 = vmatmul.mubr.bf16.gmra.mrb[0].mxu0 %v1901
        %v2234 = vpop.f32.mrb[0].mxu0
        %v2235 = vadd.f32 0.0, %v2234
        %v2236 = vpop.f32.mrb[0].mxu0
        %v2237 = vpop.f32.mrb[0].mxu0
        %v2238 = vadd.f32 0.0, %v2237
        %v2239 = vpop.f32.mrb[0].mxu0
        %2240 = vmatprep.mubr.bf16.mxu0 0
        %2241 = vmatmul.mubr.bf16.gmra.mrb[0].mxu0 %v1902
        %v2242 = vpop.f32.mrb[0].mxu0
        %v2243 = vadd.f32 0.0, %v2242
        %v2244 = vpop.f32.mrb[0].mxu0
        %v2245 = vpop.f32.mrb[0].mxu0
        %v2246 = vpop.f32.mrb[0].mxu0
        %2247 = vdwg.mxu0
        %v2265 = vrot.slane %v2179, 1
        %v2266 = vrot.slane %v2182, 1
        %v2267 = vsel %vm747, %v2265, %v2266
        %v2268 = vrot.slane %v2187, 1
        %v2269 = vsel %vm747, %v2266, %v2268
        %v2270 = vrot.slane %v2190, 1
        %v2271 = vsel %vm747, %v2268, %v2270
        %v2272 = vrot.slane %v2195, 1
        %v2273 = vsel %vm747, %v2270, %v2272
        %v2274 = vrot.slane %v2198, 1
        %v2275 = vsel %vm747, %v2272, %v2274
        %v2276 = vrot.slane %v2203, 1
        %v2277 = vsel %vm747, %v2274, %v2276
        %v2278 = vrot.slane %v2206, 1
        %v2279 = vsel %vm747, %v2276, %v2278
        %v2280 = vrot.slane %v2211, 1
        %v2281 = vsel %vm747, %v2278, %v2280
        %v2282 = vrot.slane %v2214, 1
        %v2283 = vsel %vm747, %v2280, %v2282
        %v2284 = vrot.slane %v2219, 1
        %v2285 = vsel %vm747, %v2282, %v2284
        %v2286 = vrot.slane %v2222, 1
        %v2287 = vsel %vm747, %v2284, %v2286
        %v2288 = vrot.slane %v2227, 1
        %v2289 = vsel %vm747, %v2286, %v2288
        %v2290 = vrot.slane %v2230, 1
        %v2291 = vsel %vm747, %v2288, %v2290
        %v2292 = vrot.slane %v2235, 1
        %v2293 = vsel %vm747, %v2290, %v2292
        %v2294 = vrot.slane %v2238, 1
        %v2295 = vsel %vm747, %v2292, %v2294
        %v2296 = vrot.slane %v2243, 1
        %v2297 = vsel %vm747, %v2294, %v2296
        %v2314 = vadd.f32 %v2063, %v2267
        %v2315 = vadd.f32 %v2064, %v2269
        %v2316 = vadd.f32 %v2065, %v2271
        %v2317 = vadd.f32 %v2066, %v2273
        %v2318 = vadd.f32 %v2067, %v2275
        %v2319 = vadd.f32 %v2068, %v2277
        %v2320 = vadd.f32 %v2069, %v2279
        %v2321 = vadd.f32 %v2070, %v2281
        %v2322 = vadd.f32 %v2071, %v2283
        %v2323 = vadd.f32 %v2072, %v2285
        %v2324 = vadd.f32 %v2073, %v2287
        %v2325 = vadd.f32 %v2074, %v2289
        %v2326 = vadd.f32 %v2075, %v2291
        %v2327 = vadd.f32 %v2076, %v2293
        %v2328 = vadd.f32 %v2077, %v2295
        %v2329 = vadd.f32 %v2078, %v2297
        %s2330 = scalar_lea.vmem [#allocation6], 512
        %v2331 = vld [vmem:[%s2330] sm:$0xf]
        %v2332 = vld [vmem:[%s2330 + $0x4] sm:$0xf]
        %v2333 = vld [vmem:[%s2330 + $0x8] sm:$0xf]
        %v2334 = vld [vmem:[%s2330 + $0xc] sm:$0xf]
        %v2335 = vld [vmem:[%s2330 + $0x10] sm:$0xf]
        %v2336 = vld [vmem:[%s2330 + $0x14] sm:$0xf]
        %v2337 = vld [vmem:[%s2330 + $0x18] sm:$0xf]
        %v2338 = vld [vmem:[%s2330 + $0x1c] sm:$0xf]
        %v2339 = vld [vmem:[%s2330 + $0x20] sm:$0xf]
        %v2340 = vld [vmem:[%s2330 + $0x24] sm:$0xf]
        %v2341 = vld [vmem:[%s2330 + $0x28] sm:$0xf]
        %v2342 = vld [vmem:[%s2330 + $0x2c] sm:$0xf]
        %v2343 = vld [vmem:[%s2330 + $0x30] sm:$0xf]
        %v2344 = vld [vmem:[%s2330 + $0x34] sm:$0xf]
        %v2345 = vld [vmem:[%s2330 + $0x38] sm:$0xf]
        %v2346 = vld [vmem:[%s2330 + $0x3c] sm:$0xf]
        %v2363 = vunpack.c.l.b16 %v2331
        %v2364 = vunpack.c.l.b16 %v2332
        %v2365 = vunpack.c.l.b16 %v2333
        %v2366 = vunpack.c.l.b16 %v2334
        %v2367 = vunpack.c.l.b16 %v2335
        %v2368 = vunpack.c.l.b16 %v2336
        %v2369 = vunpack.c.l.b16 %v2337
        %v2370 = vunpack.c.l.b16 %v2338
        %v2371 = vunpack.c.l.b16 %v2339
        %v2372 = vunpack.c.l.b16 %v2340
        %v2373 = vunpack.c.l.b16 %v2341
        %v2374 = vunpack.c.l.b16 %v2342
        %v2375 = vunpack.c.l.b16 %v2343
        %v2376 = vunpack.c.l.b16 %v2344
        %v2377 = vunpack.c.l.b16 %v2345
        %v2378 = vunpack.c.l.b16 %v2346
        %v2379 = vpack.c.b16 %v2364, %v2363
        %v2380 = vpack.c.b16 %v2366, %v2365
        %v2381 = vpack.c.b16 %v2368, %v2367
        %v2382 = vpack.c.b16 %v2370, %v2369
        %v2383 = vpack.c.b16 %v2372, %v2371
        %v2384 = vpack.c.b16 %v2374, %v2373
        %v2385 = vpack.c.b16 %v2376, %v2375
        %v2386 = vpack.c.b16 %v2378, %v2377
        %2395 = vmatprep.subr.bf16.mxu0 0
        %2396 = vmatpush1.bf16.msra.mxu0 %v2379
        %2397 = vmatprep.subr.bf16.mxu0 0
        %2398 = vmatpush1.bf16.msra.mxu0 %v2380
        %2399 = vmatprep.subr.bf16.mxu0 0
        %2400 = vmatpush1.bf16.msra.mxu0 %v2381
        %2401 = vmatprep.subr.bf16.mxu0 0
        %2402 = vmatpush1.bf16.msra.mxu0 %v2382
        %2403 = vmatprep.subr.bf16.mxu0 0
        %2404 = vmatpush1.bf16.msra.mxu0 %v2383
        %2405 = vmatprep.subr.bf16.mxu0 0
        %2406 = vmatpush1.bf16.msra.mxu0 %v2384
        %2407 = vmatprep.subr.bf16.mxu0 0
        %2408 = vmatpush1.bf16.msra.mxu0 %v2385
        %2409 = vmatprep.subr.bf16.mxu0 0
        %2410 = vmatpush1.bf16.msra.mxu0 %v2386
        %2411 = vmatprep.subr.bf16.mxu0 0
        %2412 = vmatpush1.bf16.msra.mxu0 0
        %2413 = vmatprep.subr.bf16.mxu0 0
        %2414 = vmatpush1.bf16.msra.mxu0 0
        %2415 = vmatprep.subr.bf16.mxu0 0
        %2416 = vmatpush1.bf16.msra.mxu0 0
        %2417 = vmatprep.subr.bf16.mxu0 0
        %2418 = vmatpush1.bf16.msra.mxu0 0
        %2419 = vmatprep.subr.bf16.mxu0 0
        %2420 = vmatpush1.bf16.msra.mxu0 0
        %2421 = vmatprep.subr.bf16.mxu0 0
        %2422 = vmatpush1.bf16.msra.mxu0 0
        %2423 = vmatprep.subr.bf16.mxu0 0
        %2424 = vmatpush1.bf16.msra.mxu0 0
        %2425 = vmatprep.subr.bf16.mxu0 0
        %2426 = vmatpush1.bf16.msra.mxu0 0
        %2427 = vmatprep.mubr.bf16.mxu0 0
        %2428 = vmatmul.mubr.bf16.gmra.mrb[0].mxu0 %v1894
        %v2429 = vpop.f32.mrb[0].mxu0
        %v2430 = vadd.f32 0.0, %v2429
        %v2431 = vpop.f32.mrb[0].mxu0
        %v2432 = vpop.f32.mrb[0].mxu0
        %v2433 = vadd.f32 0.0, %v2432
        %v2434 = vpop.f32.mrb[0].mxu0
        %2435 = vmatprep.mubr.bf16.mxu0 0
        %2436 = vmatmul.mubr.bf16.gmra.mrb[0].mxu0 %v1895
        %v2437 = vpop.f32.mrb[0].mxu0
        %v2438 = vadd.f32 0.0, %v2437
        %v2439 = vpop.f32.mrb[0].mxu0
        %v2440 = vpop.f32.mrb[0].mxu0
        %v2441 = vadd.f32 0.0, %v2440
        %v2442 = vpop.f32.mrb[0].mxu0
        %2443 = vmatprep.mubr.bf16.mxu0 0
        %2444 = vmatmul.mubr.bf16.gmra.mrb[0].mxu0 %v1896
        %v2445 = vpop.f32.mrb[0].mxu0
        %v2446 = vadd.f32 0.0, %v2445
        %v2447 = vpop.f32.mrb[0].mxu0
        %v2448 = vpop.f32.mrb[0].mxu0
        %v2449 = vadd.f32 0.0, %v2448
        %v2450 = vpop.f32.mrb[0].mxu0
        %2451 = vmatprep.mubr.bf16.mxu0 0
        %2452 = vmatmul.mubr.bf16.gmra.mrb[0].mxu0 %v1897
        %v2453 = vpop.f32.mrb[0].mxu0
        %v2454 = vadd.f32 0.0, %v2453
        %v2455 = vpop.f32.mrb[0].mxu0
        %v2456 = vpop.f32.mrb[0].mxu0
        %v2457 = vadd.f32 0.0, %v2456
        %v2458 = vpop.f32.mrb[0].mxu0
        %2459 = vmatprep.mubr.bf16.mxu0 0
        %2460 = vmatmul.mubr.bf16.gmra.mrb[0].mxu0 %v1898
        %v2461 = vpop.f32.mrb[0].mxu0
        %v2462 = vadd.f32 0.0, %v2461
        %v2463 = vpop.f32.mrb[0].mxu0
        %v2464 = vpop.f32.mrb[0].mxu0
        %v2465 = vadd.f32 0.0, %v2464
        %v2466 = vpop.f32.mrb[0].mxu0
        %2467 = vmatprep.mubr.bf16.mxu0 0
        %2468 = vmatmul.mubr.bf16.gmra.mrb[0].mxu0 %v1899
        %v2469 = vpop.f32.mrb[0].mxu0
        %v2470 = vadd.f32 0.0, %v2469
        %v2471 = vpop.f32.mrb[0].mxu0
        %v2472 = vpop.f32.mrb[0].mxu0
        %v2473 = vadd.f32 0.0, %v2472
        %v2474 = vpop.f32.mrb[0].mxu0
        %2475 = vmatprep.mubr.bf16.mxu0 0
        %2476 = vmatmul.mubr.bf16.gmra.mrb[0].mxu0 %v1900
        %v2477 = vpop.f32.mrb[0].mxu0
        %v2478 = vadd.f32 0.0, %v2477
        %v2479 = vpop.f32.mrb[0].mxu0
        %v2480 = vpop.f32.mrb[0].mxu0
        %v2481 = vadd.f32 0.0, %v2480
        %v2482 = vpop.f32.mrb[0].mxu0
        %2483 = vmatprep.mubr.bf16.mxu0 0
        %2484 = vmatmul.mubr.bf16.gmra.mrb[0].mxu0 %v1901
        %v2485 = vpop.f32.mrb[0].mxu0
        %v2486 = vadd.f32 0.0, %v2485
        %v2487 = vpop.f32.mrb[0].mxu0
        %v2488 = vpop.f32.mrb[0].mxu0
        %v2489 = vadd.f32 0.0, %v2488
        %v2490 = vpop.f32.mrb[0].mxu0
        %2491 = vmatprep.mubr.bf16.mxu0 0
        %2492 = vmatmul.mubr.bf16.gmra.mrb[0].mxu0 %v1902
        %v2493 = vpop.f32.mrb[0].mxu0
        %v2494 = vadd.f32 0.0, %v2493
        %v2495 = vpop.f32.mrb[0].mxu0
        %v2496 = vpop.f32.mrb[0].mxu0
        %v2497 = vpop.f32.mrb[0].mxu0
        %2498 = vdwg.mxu0
        %v2516 = vrot.slane %v2430, 2
        %v2517 = vrot.slane %v2433, 2
        %v2518 = vsel %vm999, %v2516, %v2517
        %v2519 = vrot.slane %v2438, 2
        %v2520 = vsel %vm999, %v2517, %v2519
        %v2521 = vrot.slane %v2441, 2
        %v2522 = vsel %vm999, %v2519, %v2521
        %v2523 = vrot.slane %v2446, 2
        %v2524 = vsel %vm999, %v2521, %v2523
        %v2525 = vrot.slane %v2449, 2
        %v2526 = vsel %vm999, %v2523, %v2525
        %v2527 = vrot.slane %v2454, 2
        %v2528 = vsel %vm999, %v2525, %v2527
        %v2529 = vrot.slane %v2457, 2
        %v2530 = vsel %vm999, %v2527, %v2529
        %v2531 = vrot.slane %v2462, 2
        %v2532 = vsel %vm999, %v2529, %v2531
        %v2533 = vrot.slane %v2465, 2
        %v2534 = vsel %vm999, %v2531, %v2533
        %v2535 = vrot.slane %v2470, 2
        %v2536 = vsel %vm999, %v2533, %v2535
        %v2537 = vrot.slane %v2473, 2
        %v2538 = vsel %vm999, %v2535, %v2537
        %v2539 = vrot.slane %v2478, 2
        %v2540 = vsel %vm999, %v2537, %v2539
        %v2541 = vrot.slane %v2481, 2
        %v2542 = vsel %vm999, %v2539, %v2541
        %v2543 = vrot.slane %v2486, 2
        %v2544 = vsel %vm999, %v2541, %v2543
        %v2545 = vrot.slane %v2489, 2
        %v2546 = vsel %vm999, %v2543, %v2545
        %v2547 = vrot.slane %v2494, 2
        %v2548 = vsel %vm999, %v2545, %v2547
        %v2565 = vadd.f32 %v2314, %v2518
        %v2566 = vadd.f32 %v2315, %v2520
        %v2567 = vadd.f32 %v2316, %v2522
        %v2568 = vadd.f32 %v2317, %v2524
        %v2569 = vadd.f32 %v2318, %v2526
        %v2570 = vadd.f32 %v2319, %v2528
        %v2571 = vadd.f32 %v2320, %v2530
        %v2572 = vadd.f32 %v2321, %v2532
        %v2573 = vadd.f32 %v2322, %v2534
        %v2574 = vadd.f32 %v2323, %v2536
        %v2575 = vadd.f32 %v2324, %v2538
        %v2576 = vadd.f32 %v2325, %v2540
        %v2577 = vadd.f32 %v2326, %v2542
        %v2578 = vadd.f32 %v2327, %v2544
        %v2579 = vadd.f32 %v2328, %v2546
        %v2580 = vadd.f32 %v2329, %v2548
        %v2582 = vlaneseq
        %v2583 = vshrl.u32 %v2582, 7
        %v2584 = vsub.s32 0, %v2583
        %v2585 = vrot.slane %v303, %v2584
        %v2587 = vadd.f32 %v2565, %v2585
        %v2588 = vadd.f32 %v2566, %v2585
        %v2589 = vadd.f32 %v2567, %v2585
        %v2590 = vadd.f32 %v2568, %v2585
        %v2591 = vadd.f32 %v2569, %v2585
        %v2592 = vadd.f32 %v2570, %v2585
        %v2593 = vadd.f32 %v2571, %v2585
        %v2594 = vadd.f32 %v2572, %v2585
        %v2595 = vadd.f32 %v2573, %v2585
        %v2596 = vadd.f32 %v2574, %v2585
        %v2597 = vadd.f32 %v2575, %v2585
        %v2598 = vadd.f32 %v2576, %v2585
        %v2599 = vadd.f32 %v2577, %v2585
        %v2600 = vadd.f32 %v2578, %v2585
        %v2601 = vadd.f32 %v2579, %v2585
        %v2602 = vadd.f32 %v2580, %v2585
        %vm2603 = vcmp.ge.f32.partialorder %v2587, 0.0
        %vm2604 = vcmp.ge.f32.partialorder %v2588, 0.0
        %vm2605 = vcmp.ge.f32.partialorder %v2589, 0.0
        %vm2606 = vcmp.ge.f32.partialorder %v2590, 0.0
        %vm2607 = vcmp.ge.f32.partialorder %v2591, 0.0
        %vm2608 = vcmp.ge.f32.partialorder %v2592, 0.0
        %vm2609 = vcmp.ge.f32.partialorder %v2593, 0.0
        %vm2610 = vcmp.ge.f32.partialorder %v2594, 0.0
        %vm2611 = vcmp.ge.f32.partialorder %v2595, 0.0
        %vm2612 = vcmp.ge.f32.partialorder %v2596, 0.0
        %vm2613 = vcmp.ge.f32.partialorder %v2597, 0.0
        %vm2614 = vcmp.ge.f32.partialorder %v2598, 0.0
        %vm2615 = vcmp.ge.f32.partialorder %v2599, 0.0
        %vm2616 = vcmp.ge.f32.partialorder %v2600, 0.0
        %vm2617 = vcmp.ge.f32.partialorder %v2601, 0.0
        %vm2618 = vcmp.ge.f32.partialorder %v2602, 0.0
        %v2619 = vmul.f32 %v2587, 0.2
        %v2620 = vmul.f32 %v2588, 0.2
        %v2621 = vmul.f32 %v2589, 0.2
        %v2622 = vmul.f32 %v2590, 0.2
        %v2623 = vmul.f32 %v2591, 0.2
        %v2624 = vmul.f32 %v2592, 0.2
        %v2625 = vmul.f32 %v2593, 0.2
        %v2626 = vmul.f32 %v2594, 0.2
        %v2627 = vmul.f32 %v2595, 0.2
        %v2628 = vmul.f32 %v2596, 0.2
        %v2629 = vmul.f32 %v2597, 0.2
        %v2630 = vmul.f32 %v2598, 0.2
        %v2631 = vmul.f32 %v2599, 0.2
        %v2632 = vmul.f32 %v2600, 0.2
        %v2633 = vmul.f32 %v2601, 0.2
        %v2634 = vmul.f32 %v2602, 0.2
        %v2635 = vsel %vm2603, %v2587, %v2619
        %v2636 = vsel %vm2604, %v2588, %v2620
        %v2637 = vsel %vm2605, %v2589, %v2621
        %v2638 = vsel %vm2606, %v2590, %v2622
        %v2639 = vsel %vm2607, %v2591, %v2623
        %v2640 = vsel %vm2608, %v2592, %v2624
        %v2641 = vsel %vm2609, %v2593, %v2625
        %v2642 = vsel %vm2610, %v2594, %v2626
        %v2643 = vsel %vm2611, %v2595, %v2627
        %v2644 = vsel %vm2612, %v2596, %v2628
        %v2645 = vsel %vm2613, %v2597, %v2629
        %v2646 = vsel %vm2614, %v2598, %v2630
        %v2647 = vsel %vm2615, %v2599, %v2631
        %v2648 = vsel %vm2616, %v2600, %v2632
        %v2649 = vsel %vm2617, %v2601, %v2633
        %v2650 = vsel %vm2618, %v2602, %v2634
        %v2652 = vlaneseq
        %v2653 = vshrl.u32 %v2652, 7
        %v2654 = vsub.s32 0, %v2653
        %v2655 = vrot.slane %v304, %v2654
        %v2657 = vmul.f32 %v2635, %v2655
        %v2658 = vmul.f32 %v2636, %v2655
        %v2659 = vmul.f32 %v2637, %v2655
        %v2660 = vmul.f32 %v2638, %v2655
        %v2661 = vmul.f32 %v2639, %v2655
        %v2662 = vmul.f32 %v2640, %v2655
        %v2663 = vmul.f32 %v2641, %v2655
        %v2664 = vmul.f32 %v2642, %v2655
        %v2665 = vmul.f32 %v2643, %v2655
        %v2666 = vmul.f32 %v2644, %v2655
        %v2667 = vmul.f32 %v2645, %v2655
        %v2668 = vmul.f32 %v2646, %v2655
        %v2669 = vmul.f32 %v2647, %v2655
        %v2670 = vmul.f32 %v2648, %v2655
        %v2671 = vmul.f32 %v2649, %v2655
        %v2672 = vmul.f32 %v2650, %v2655
        %vm2673 = vcmask 523264
        %v2674 = vsel %vm2673, %v2657, 0.0
        %2675 = vadd.xlane.f32.xlu0 %v2674
        %v2676 = vpop.xlane.xlu0 %2675
        %v2677 = vsel %vm2673, %v2658, 0.0
        %2678 = vadd.xlane.f32.xlu0 %v2677
        %v2679 = vpop.xlane.xlu0 %2678
        %v2680 = vsel %vm2673, %v2659, 0.0
        %2681 = vadd.xlane.f32.xlu0 %v2680
        %v2682 = vpop.xlane.xlu0 %2681
        %v2683 = vsel %vm2673, %v2660, 0.0
        %2684 = vadd.xlane.f32.xlu0 %v2683
        %v2685 = vpop.xlane.xlu0 %2684
        %v2686 = vsel %vm2673, %v2661, 0.0
        %2687 = vadd.xlane.f32.xlu0 %v2686
        %v2688 = vpop.xlane.xlu0 %2687
        %v2689 = vsel %vm2673, %v2662, 0.0
        %2690 = vadd.xlane.f32.xlu0 %v2689
        %v2691 = vpop.xlane.xlu0 %2690
        %v2692 = vsel %vm2673, %v2663, 0.0
        %2693 = vadd.xlane.f32.xlu0 %v2692
        %v2694 = vpop.xlane.xlu0 %2693
        %v2695 = vsel %vm2673, %v2664, 0.0
        %2696 = vadd.xlane.f32.xlu0 %v2695
        %v2697 = vpop.xlane.xlu0 %2696
        %v2698 = vsel %vm2673, %v2665, 0.0
        %2699 = vadd.xlane.f32.xlu0 %v2698
        %v2700 = vpop.xlane.xlu0 %2699
        %v2701 = vsel %vm2673, %v2666, 0.0
        %2702 = vadd.xlane.f32.xlu0 %v2701
        %v2703 = vpop.xlane.xlu0 %2702
        %v2704 = vsel %vm2673, %v2667, 0.0
        %2705 = vadd.xlane.f32.xlu0 %v2704
        %v2706 = vpop.xlane.xlu0 %2705
        %v2707 = vsel %vm2673, %v2668, 0.0
        %2708 = vadd.xlane.f32.xlu0 %v2707
        %v2709 = vpop.xlane.xlu0 %2708
        %v2710 = vsel %vm2673, %v2669, 0.0
        %2711 = vadd.xlane.f32.xlu0 %v2710
        %v2712 = vpop.xlane.xlu0 %2711
        %v2713 = vsel %vm2673, %v2670, 0.0
        %2714 = vadd.xlane.f32.xlu0 %v2713
        %v2715 = vpop.xlane.xlu0 %2714
        %v2716 = vsel %vm2673, %v2671, 0.0
        %2717 = vadd.xlane.f32.xlu0 %v2716
        %v2718 = vpop.xlane.xlu0 %2717
        %v2719 = vsel %vm2673, %v2672, 0.0
        %2720 = vadd.xlane.f32.xlu0 %v2719
        %v2721 = vpop.xlane.xlu0 %2720
        %v2722 = vstv %s305
        %v2723 = vadd.f32 %v2676, %v2722
        %v2724 = vadd.f32 %v2679, %v2722
        %v2725 = vadd.f32 %v2682, %v2722
        %v2726 = vadd.f32 %v2685, %v2722
        %v2727 = vadd.f32 %v2688, %v2722
        %v2728 = vadd.f32 %v2691, %v2722
        %v2729 = vadd.f32 %v2694, %v2722
        %v2730 = vadd.f32 %v2697, %v2722
        %v2731 = vadd.f32 %v2700, %v2722
        %v2732 = vadd.f32 %v2703, %v2722
        %v2733 = vadd.f32 %v2706, %v2722
        %v2734 = vadd.f32 %v2709, %v2722
        %v2735 = vadd.f32 %v2712, %v2722
        %v2736 = vadd.f32 %v2715, %v2722
        %v2737 = vadd.f32 %v2718, %v2722
        %v2738 = vadd.f32 %v2721, %v2722
        %vm2739 = vcmask 7168
        %2740 = vst.msk [vmem:[%s301] sm:$0xff] %vm2739, %v2723
        %2741 = vst.msk [vmem:[%s301 + $0x8] sm:$0xff] %vm2739, %v2724
        %2742 = vst.msk [vmem:[%s301 + $0x10] sm:$0xff] %vm2739, %v2725
        %2743 = vst.msk [vmem:[%s301 + $0x18] sm:$0xff] %vm2739, %v2726
        %2744 = vst.msk [vmem:[%s301 + $0x20] sm:$0xff] %vm2739, %v2727
        %2745 = vst.msk [vmem:[%s301 + $0x28] sm:$0xff] %vm2739, %v2728
        %2746 = vst.msk [vmem:[%s301 + $0x30] sm:$0xff] %vm2739, %v2729
        %2747 = vst.msk [vmem:[%s301 + $0x38] sm:$0xff] %vm2739, %v2730
        %2748 = vst.msk [vmem:[%s301 + $0x40] sm:$0xff] %vm2739, %v2731
        %2749 = vst.msk [vmem:[%s301 + $0x48] sm:$0xff] %vm2739, %v2732
        %2750 = vst.msk [vmem:[%s301 + $0x50] sm:$0xff] %vm2739, %v2733
        %2751 = vst.msk [vmem:[%s301 + $0x58] sm:$0xff] %vm2739, %v2734
        %2752 = vst.msk [vmem:[%s301 + $0x60] sm:$0xff] %vm2739, %v2735
        %2753 = vst.msk [vmem:[%s301 + $0x68] sm:$0xff] %vm2739, %v2736
        %2754 = vst.msk [vmem:[%s301 + $0x70] sm:$0xff] %vm2739, %v2737
        %2755 = vst.msk [vmem:[%s301 + $0x78] sm:$0xff] %vm2739, %v2738
        %v2756 = vld [vmem:[%s263 + $0x40] sm:$0xf]
        %v2757 = vld [vmem:[%s263 + $0x44] sm:$0xf]
        %v2758 = vld [vmem:[%s263 + $0x48] sm:$0xf]
        %v2759 = vld [vmem:[%s263 + $0x4c] sm:$0xf]
        %v2760 = vld [vmem:[%s263 + $0x50] sm:$0xf]
        %v2761 = vld [vmem:[%s263 + $0x54] sm:$0xf]
        %v2762 = vld [vmem:[%s263 + $0x58] sm:$0xf]
        %v2763 = vld [vmem:[%s263 + $0x5c] sm:$0xf]
        %v2764 = vld [vmem:[%s263 + $0x60] sm:$0xf]
        %v2765 = vld [vmem:[%s263 + $0x64] sm:$0xf]
        %v2766 = vld [vmem:[%s263 + $0x68] sm:$0xf]
        %v2767 = vld [vmem:[%s263 + $0x6c] sm:$0xf]
        %v2768 = vld [vmem:[%s263 + $0x70] sm:$0xf]
        %v2769 = vld [vmem:[%s263 + $0x74] sm:$0xf]
        %v2770 = vld [vmem:[%s263 + $0x78] sm:$0xf]
        %v2771 = vld [vmem:[%s263 + $0x7c] sm:$0xf]
        %v2772 = vld [vmem:[%s263 + $0x80] sm:$0xf]
        %v2773 = vld [vmem:[%s263 + $0x84] sm:$0xf]
        %v2774 = vld [vmem:[#allocation6] sm:$0xf]
        %v2775 = vld [vmem:[#allocation6 + $0x4] sm:$0xf]
        %v2776 = vld [vmem:[#allocation6 + $0x8] sm:$0xf]
        %v2777 = vld [vmem:[#allocation6 + $0xc] sm:$0xf]
        %v2778 = vld [vmem:[#allocation6 + $0x10] sm:$0xf]
        %v2779 = vld [vmem:[#allocation6 + $0x14] sm:$0xf]
        %v2780 = vld [vmem:[#allocation6 + $0x18] sm:$0xf]
        %v2781 = vld [vmem:[#allocation6 + $0x1c] sm:$0xf]
        %v2782 = vld [vmem:[#allocation6 + $0x20] sm:$0xf]
        %v2783 = vld [vmem:[#allocation6 + $0x24] sm:$0xf]
        %v2784 = vld [vmem:[#allocation6 + $0x28] sm:$0xf]
        %v2785 = vld [vmem:[#allocation6 + $0x2c] sm:$0xf]
        %v2786 = vld [vmem:[#allocation6 + $0x30] sm:$0xf]
        %v2787 = vld [vmem:[#allocation6 + $0x34] sm:$0xf]
        %v2788 = vld [vmem:[#allocation6 + $0x38] sm:$0xf]
        %v2789 = vld [vmem:[#allocation6 + $0x3c] sm:$0xf]
        %v2808 = vunpack.c.l.b16 %v2756
        %v2809 = vunpack.c.l.b16 %v2757
        %v2810 = vunpack.c.l.b16 %v2758
        %v2811 = vunpack.c.l.b16 %v2759
        %v2812 = vunpack.c.l.b16 %v2760
        %v2813 = vunpack.c.l.b16 %v2761
        %v2814 = vunpack.c.l.b16 %v2762
        %v2815 = vunpack.c.l.b16 %v2763
        %v2816 = vunpack.c.l.b16 %v2764
        %v2817 = vunpack.c.l.b16 %v2765
        %v2818 = vunpack.c.l.b16 %v2766
        %v2819 = vunpack.c.l.b16 %v2767
        %v2820 = vunpack.c.l.b16 %v2768
        %v2821 = vunpack.c.l.b16 %v2769
        %v2822 = vunpack.c.l.b16 %v2770
        %v2823 = vunpack.c.l.b16 %v2771
        %v2824 = vunpack.c.l.b16 %v2772
        %v2825 = vunpack.c.l.b16 %v2773
        %v2826 = vpack.c.b16 %v2809, %v2808
        %v2827 = vpack.c.b16 %v2811, %v2810
        %v2828 = vpack.c.b16 %v2813, %v2812
        %v2829 = vpack.c.b16 %v2815, %v2814
        %v2830 = vpack.c.b16 %v2817, %v2816
        %v2831 = vpack.c.b16 %v2819, %v2818
        %v2832 = vpack.c.b16 %v2821, %v2820
        %v2833 = vpack.c.b16 %v2823, %v2822
        %v2834 = vpack.c.b16 %v2825, %v2824
        %v2860 = vunpack.c.l.b16 %v2774
        %v2861 = vunpack.c.l.b16 %v2775
        %v2862 = vunpack.c.l.b16 %v2776
        %v2863 = vunpack.c.l.b16 %v2777
        %v2864 = vunpack.c.l.b16 %v2778
        %v2865 = vunpack.c.l.b16 %v2779
        %v2866 = vunpack.c.l.b16 %v2780
        %v2867 = vunpack.c.l.b16 %v2781
        %v2868 = vunpack.c.l.b16 %v2782
        %v2869 = vunpack.c.l.b16 %v2783
        %v2870 = vunpack.c.l.b16 %v2784
        %v2871 = vunpack.c.l.b16 %v2785
        %v2872 = vunpack.c.l.b16 %v2786
        %v2873 = vunpack.c.l.b16 %v2787
        %v2874 = vunpack.c.l.b16 %v2788
        %v2875 = vunpack.c.l.b16 %v2789
        %v2876 = vpack.c.b16 %v2861, %v2860
        %v2877 = vpack.c.b16 %v2863, %v2862
        %v2878 = vpack.c.b16 %v2865, %v2864
        %v2879 = vpack.c.b16 %v2867, %v2866
        %v2880 = vpack.c.b16 %v2869, %v2868
        %v2881 = vpack.c.b16 %v2871, %v2870
        %v2882 = vpack.c.b16 %v2873, %v2872
        %v2883 = vpack.c.b16 %v2875, %v2874
        %2892 = vmatprep.subr.bf16.mxu0 0
        %2893 = vmatpush1.bf16.msra.mxu0 %v2876
        %2894 = vmatprep.subr.bf16.mxu0 0
        %2895 = vmatpush1.bf16.msra.mxu0 %v2877
        %2896 = vmatprep.subr.bf16.mxu0 0
        %2897 = vmatpush1.bf16.msra.mxu0 %v2878
        %2898 = vmatprep.subr.bf16.mxu0 0
        %2899 = vmatpush1.bf16.msra.mxu0 %v2879
        %2900 = vmatprep.subr.bf16.mxu0 0
        %2901 = vmatpush1.bf16.msra.mxu0 %v2880
        %2902 = vmatprep.subr.bf16.mxu0 0
        %2903 = vmatpush1.bf16.msra.mxu0 %v2881
        %2904 = vmatprep.subr.bf16.mxu0 0
        %2905 = vmatpush1.bf16.msra.mxu0 %v2882
        %2906 = vmatprep.subr.bf16.mxu0 0
        %2907 = vmatpush1.bf16.msra.mxu0 %v2883
        %2908 = vmatprep.subr.bf16.mxu0 0
        %2909 = vmatpush1.bf16.msra.mxu0 0
        %2910 = vmatprep.subr.bf16.mxu0 0
        %2911 = vmatpush1.bf16.msra.mxu0 0
        %2912 = vmatprep.subr.bf16.mxu0 0
        %2913 = vmatpush1.bf16.msra.mxu0 0
        %2914 = vmatprep.subr.bf16.mxu0 0
        %2915 = vmatpush1.bf16.msra.mxu0 0
        %2916 = vmatprep.subr.bf16.mxu0 0
        %2917 = vmatpush1.bf16.msra.mxu0 0
        %2918 = vmatprep.subr.bf16.mxu0 0
        %2919 = vmatpush1.bf16.msra.mxu0 0
        %2920 = vmatprep.subr.bf16.mxu0 0
        %2921 = vmatpush1.bf16.msra.mxu0 0
        %2922 = vmatprep.subr.bf16.mxu0 0
        %2923 = vmatpush1.bf16.msra.mxu0 0
        %2924 = vmatprep.mubr.bf16.mxu0 0
        %2925 = vmatmul.mubr.bf16.gmra.mrb[0].mxu0 %v2826
        %v2926 = vpop.f32.mrb[0].mxu0
        %v2927 = vadd.f32 0.0, %v2926
        %v2928 = vpop.f32.mrb[0].mxu0
        %v2929 = vpop.f32.mrb[0].mxu0
        %v2930 = vadd.f32 0.0, %v2929
        %v2931 = vpop.f32.mrb[0].mxu0
        %2932 = vmatprep.mubr.bf16.mxu0 0
        %2933 = vmatmul.mubr.bf16.gmra.mrb[0].mxu0 %v2827
        %v2934 = vpop.f32.mrb[0].mxu0
        %v2935 = vadd.f32 0.0, %v2934
        %v2936 = vpop.f32.mrb[0].mxu0
        %v2937 = vpop.f32.mrb[0].mxu0
        %v2938 = vadd.f32 0.0, %v2937
        %v2939 = vpop.f32.mrb[0].mxu0
        %2940 = vmatprep.mubr.bf16.mxu0 0
        %2941 = vmatmul.mubr.bf16.gmra.mrb[0].mxu0 %v2828
        %v2942 = vpop.f32.mrb[0].mxu0
        %v2943 = vadd.f32 0.0, %v2942
        %v2944 = vpop.f32.mrb[0].mxu0
        %v2945 = vpop.f32.mrb[0].mxu0
        %v2946 = vadd.f32 0.0, %v2945
        %v2947 = vpop.f32.mrb[0].mxu0
        %2948 = vmatprep.mubr.bf16.mxu0 0
        %2949 = vmatmul.mubr.bf16.gmra.mrb[0].mxu0 %v2829
        %v2950 = vpop.f32.mrb[0].mxu0
        %v2951 = vadd.f32 0.0, %v2950
        %v2952 = vpop.f32.mrb[0].mxu0
        %v2953 = vpop.f32.mrb[0].mxu0
        %v2954 = vadd.f32 0.0, %v2953
        %v2955 = vpop.f32.mrb[0].mxu0
        %2956 = vmatprep.mubr.bf16.mxu0 0
        %2957 = vmatmul.mubr.bf16.gmra.mrb[0].mxu0 %v2830
        %v2958 = vpop.f32.mrb[0].mxu0
        %v2959 = vadd.f32 0.0, %v2958
        %v2960 = vpop.f32.mrb[0].mxu0
        %v2961 = vpop.f32.mrb[0].mxu0
        %v2962 = vadd.f32 0.0, %v2961
        %v2963 = vpop.f32.mrb[0].mxu0
        %2964 = vmatprep.mubr.bf16.mxu0 0
        %2965 = vmatmul.mubr.bf16.gmra.mrb[0].mxu0 %v2831
        %v2966 = vpop.f32.mrb[0].mxu0
        %v2967 = vadd.f32 0.0, %v2966
        %v2968 = vpop.f32.mrb[0].mxu0
        %v2969 = vpop.f32.mrb[0].mxu0
        %v2970 = vadd.f32 0.0, %v2969
        %v2971 = vpop.f32.mrb[0].mxu0
        %2972 = vmatprep.mubr.bf16.mxu0 0
        %2973 = vmatmul.mubr.bf16.gmra.mrb[0].mxu0 %v2832
        %v2974 = vpop.f32.mrb[0].mxu0
        %v2975 = vadd.f32 0.0, %v2974
        %v2976 = vpop.f32.mrb[0].mxu0
        %v2977 = vpop.f32.mrb[0].mxu0
        %v2978 = vadd.f32 0.0, %v2977
        %v2979 = vpop.f32.mrb[0].mxu0
        %2980 = vmatprep.mubr.bf16.mxu0 0
        %2981 = vmatmul.mubr.bf16.gmra.mrb[0].mxu0 %v2833
        %v2982 = vpop.f32.mrb[0].mxu0
        %v2983 = vadd.f32 0.0, %v2982
        %v2984 = vpop.f32.mrb[0].mxu0
        %v2985 = vpop.f32.mrb[0].mxu0
        %v2986 = vadd.f32 0.0, %v2985
        %v2987 = vpop.f32.mrb[0].mxu0
        %2988 = vmatprep.mubr.bf16.mxu0 0
        %2989 = vmatmul.mubr.bf16.gmra.mrb[0].mxu0 %v2834
        %v2990 = vpop.f32.mrb[0].mxu0
        %v2991 = vpop.f32.mrb[0].mxu0
        %v2992 = vpop.f32.mrb[0].mxu0
        %v2993 = vpop.f32.mrb[0].mxu0
        %2994 = vdwg.mxu0
        %v2995 = vadd.f32 %v2927, 0.0
        %v2996 = vadd.f32 %v2930, 0.0
        %v2997 = vadd.f32 %v2935, 0.0
        %v2998 = vadd.f32 %v2938, 0.0
        %v2999 = vadd.f32 %v2943, 0.0
        %v3000 = vadd.f32 %v2946, 0.0
        %v3001 = vadd.f32 %v2951, 0.0
        %v3002 = vadd.f32 %v2954, 0.0
        %v3003 = vadd.f32 %v2959, 0.0
        %v3004 = vadd.f32 %v2962, 0.0
        %v3005 = vadd.f32 %v2967, 0.0
        %v3006 = vadd.f32 %v2970, 0.0
        %v3007 = vadd.f32 %v2975, 0.0
        %v3008 = vadd.f32 %v2978, 0.0
        %v3009 = vadd.f32 %v2983, 0.0
        %v3010 = vadd.f32 %v2986, 0.0
        %v3011 = vld [vmem:[%s561] sm:$0xf]
        %v3012 = vld [vmem:[%s561 + $0x4] sm:$0xf]
        %v3013 = vld [vmem:[%s561 + $0x8] sm:$0xf]
        %v3014 = vld [vmem:[%s561 + $0xc] sm:$0xf]
        %v3015 = vld [vmem:[%s561 + $0x10] sm:$0xf]
        %v3016 = vld [vmem:[%s561 + $0x14] sm:$0xf]
        %v3017 = vld [vmem:[%s561 + $0x18] sm:$0xf]
        %v3018 = vld [vmem:[%s561 + $0x1c] sm:$0xf]
        %v3019 = vld [vmem:[%s561 + $0x20] sm:$0xf]
        %v3020 = vld [vmem:[%s561 + $0x24] sm:$0xf]
        %v3021 = vld [vmem:[%s561 + $0x28] sm:$0xf]
        %v3022 = vld [vmem:[%s561 + $0x2c] sm:$0xf]
        %v3023 = vld [vmem:[%s561 + $0x30] sm:$0xf]
        %v3024 = vld [vmem:[%s561 + $0x34] sm:$0xf]
        %v3025 = vld [vmem:[%s561 + $0x38] sm:$0xf]
        %v3026 = vld [vmem:[%s561 + $0x3c] sm:$0xf]
        %v3043 = vunpack.c.l.b16 %v3011
        %v3044 = vunpack.c.l.b16 %v3012
        %v3045 = vunpack.c.l.b16 %v3013
        %v3046 = vunpack.c.l.b16 %v3014
        %v3047 = vunpack.c.l.b16 %v3015
        %v3048 = vunpack.c.l.b16 %v3016
        %v3049 = vunpack.c.l.b16 %v3017
        %v3050 = vunpack.c.l.b16 %v3018
        %v3051 = vunpack.c.l.b16 %v3019
        %v3052 = vunpack.c.l.b16 %v3020
        %v3053 = vunpack.c.l.b16 %v3021
        %v3054 = vunpack.c.l.b16 %v3022
        %v3055 = vunpack.c.l.b16 %v3023
        %v3056 = vunpack.c.l.b16 %v3024
        %v3057 = vunpack.c.l.b16 %v3025
        %v3058 = vunpack.c.l.b16 %v3026
        %v3059 = vpack.c.b16 %v3044, %v3043
        %v3060 = vpack.c.b16 %v3046, %v3045
        %v3061 = vpack.c.b16 %v3048, %v3047
        %v3062 = vpack.c.b16 %v3050, %v3049
        %v3063 = vpack.c.b16 %v3052, %v3051
        %v3064 = vpack.c.b16 %v3054, %v3053
        %v3065 = vpack.c.b16 %v3056, %v3055
        %v3066 = vpack.c.b16 %v3058, %v3057
        %3075 = vmatprep.subr.bf16.mxu0 0
        %3076 = vmatpush1.bf16.msra.mxu0 %v3059
        %3077 = vmatprep.subr.bf16.mxu0 0
        %3078 = vmatpush1.bf16.msra.mxu0 %v3060
        %3079 = vmatprep.subr.bf16.mxu0 0
        %3080 = vmatpush1.bf16.msra.mxu0 %v3061
        %3081 = vmatprep.subr.bf16.mxu0 0
        %3082 = vmatpush1.bf16.msra.mxu0 %v3062
        %3083 = vmatprep.subr.bf16.mxu0 0
        %3084 = vmatpush1.bf16.msra.mxu0 %v3063
        %3085 = vmatprep.subr.bf16.mxu0 0
        %3086 = vmatpush1.bf16.msra.mxu0 %v3064
        %3087 = vmatprep.subr.bf16.mxu0 0
        %3088 = vmatpush1.bf16.msra.mxu0 %v3065
        %3089 = vmatprep.subr.bf16.mxu0 0
        %3090 = vmatpush1.bf16.msra.mxu0 %v3066
        %3091 = vmatprep.subr.bf16.mxu0 0
        %3092 = vmatpush1.bf16.msra.mxu0 0
        %3093 = vmatprep.subr.bf16.mxu0 0
        %3094 = vmatpush1.bf16.msra.mxu0 0
        %3095 = vmatprep.subr.bf16.mxu0 0
        %3096 = vmatpush1.bf16.msra.mxu0 0
        %3097 = vmatprep.subr.bf16.mxu0 0
        %3098 = vmatpush1.bf16.msra.mxu0 0
        %3099 = vmatprep.subr.bf16.mxu0 0
        %3100 = vmatpush1.bf16.msra.mxu0 0
        %3101 = vmatprep.subr.bf16.mxu0 0
        %3102 = vmatpush1.bf16.msra.mxu0 0
        %3103 = vmatprep.subr.bf16.mxu0 0
        %3104 = vmatpush1.bf16.msra.mxu0 0
        %3105 = vmatprep.subr.bf16.mxu0 0
        %3106 = vmatpush1.bf16.msra.mxu0 0
        %3107 = vmatprep.mubr.bf16.mxu0 0
        %3108 = vmatmul.mubr.bf16.gmra.mrb[0].mxu0 %v2826
        %v3109 = vpop.f32.mrb[0].mxu0
        %v3110 = vadd.f32 0.0, %v3109
        %v3111 = vpop.f32.mrb[0].mxu0
        %v3112 = vpop.f32.mrb[0].mxu0
        %v3113 = vadd.f32 0.0, %v3112
        %v3114 = vpop.f32.mrb[0].mxu0
        %3115 = vmatprep.mubr.bf16.mxu0 0
        %3116 = vmatmul.mubr.bf16.gmra.mrb[0].mxu0 %v2827
        %v3117 = vpop.f32.mrb[0].mxu0
        %v3118 = vadd.f32 0.0, %v3117
        %v3119 = vpop.f32.mrb[0].mxu0
        %v3120 = vpop.f32.mrb[0].mxu0
        %v3121 = vadd.f32 0.0, %v3120
        %v3122 = vpop.f32.mrb[0].mxu0
        %3123 = vmatprep.mubr.bf16.mxu0 0
        %3124 = vmatmul.mubr.bf16.gmra.mrb[0].mxu0 %v2828
        %v3125 = vpop.f32.mrb[0].mxu0
        %v3126 = vadd.f32 0.0, %v3125
        %v3127 = vpop.f32.mrb[0].mxu0
        %v3128 = vpop.f32.mrb[0].mxu0
        %v3129 = vadd.f32 0.0, %v3128
        %v3130 = vpop.f32.mrb[0].mxu0
        %3131 = vmatprep.mubr.bf16.mxu0 0
        %3132 = vmatmul.mubr.bf16.gmra.mrb[0].mxu0 %v2829
        %v3133 = vpop.f32.mrb[0].mxu0
        %v3134 = vadd.f32 0.0, %v3133
        %v3135 = vpop.f32.mrb[0].mxu0
        %v3136 = vpop.f32.mrb[0].mxu0
        %v3137 = vadd.f32 0.0, %v3136
        %v3138 = vpop.f32.mrb[0].mxu0
        %3139 = vmatprep.mubr.bf16.mxu0 0
        %3140 = vmatmul.mubr.bf16.gmra.mrb[0].mxu0 %v2830
        %v3141 = vpop.f32.mrb[0].mxu0
        %v3142 = vadd.f32 0.0, %v3141
        %v3143 = vpop.f32.mrb[0].mxu0
        %v3144 = vpop.f32.mrb[0].mxu0
        %v3145 = vadd.f32 0.0, %v3144
        %v3146 = vpop.f32.mrb[0].mxu0
        %3147 = vmatprep.mubr.bf16.mxu0 0
        %3148 = vmatmul.mubr.bf16.gmra.mrb[0].mxu0 %v2831
        %v3149 = vpop.f32.mrb[0].mxu0
        %v3150 = vadd.f32 0.0, %v3149
        %v3151 = vpop.f32.mrb[0].mxu0
        %v3152 = vpop.f32.mrb[0].mxu0
        %v3153 = vadd.f32 0.0, %v3152
        %v3154 = vpop.f32.mrb[0].mxu0
        %3155 = vmatprep.mubr.bf16.mxu0 0
        %3156 = vmatmul.mubr.bf16.gmra.mrb[0].mxu0 %v2832
        %v3157 = vpop.f32.mrb[0].mxu0
        %v3158 = vadd.f32 0.0, %v3157
        %v3159 = vpop.f32.mrb[0].mxu0
        %v3160 = vpop.f32.mrb[0].mxu0
        %v3161 = vadd.f32 0.0, %v3160
        %v3162 = vpop.f32.mrb[0].mxu0
        %3163 = vmatprep.mubr.bf16.mxu0 0
        %3164 = vmatmul.mubr.bf16.gmra.mrb[0].mxu0 %v2833
        %v3165 = vpop.f32.mrb[0].mxu0
        %v3166 = vadd.f32 0.0, %v3165
        %v3167 = vpop.f32.mrb[0].mxu0
        %v3168 = vpop.f32.mrb[0].mxu0
        %v3169 = vadd.f32 0.0, %v3168
        %v3170 = vpop.f32.mrb[0].mxu0
        %3171 = vmatprep.mubr.bf16.mxu0 0
        %3172 = vmatmul.mubr.bf16.gmra.mrb[0].mxu0 %v2834
        %v3173 = vpop.f32.mrb[0].mxu0
        %v3174 = vadd.f32 0.0, %v3173
        %v3175 = vpop.f32.mrb[0].mxu0
        %v3176 = vpop.f32.mrb[0].mxu0
        %v3177 = vpop.f32.mrb[0].mxu0
        %3178 = vdwg.mxu0
        %v3196 = vrot.slane %v3110, 1
        %v3197 = vrot.slane %v3113, 1
        %v3198 = vsel %vm747, %v3196, %v3197
        %v3199 = vrot.slane %v3118, 1
        %v3200 = vsel %vm747, %v3197, %v3199
        %v3201 = vrot.slane %v3121, 1
        %v3202 = vsel %vm747, %v3199, %v3201
        %v3203 = vrot.slane %v3126, 1
        %v3204 = vsel %vm747, %v3201, %v3203
        %v3205 = vrot.slane %v3129, 1
        %v3206 = vsel %vm747, %v3203, %v3205
        %v3207 = vrot.slane %v3134, 1
        %v3208 = vsel %vm747, %v3205, %v3207
        %v3209 = vrot.slane %v3137, 1
        %v3210 = vsel %vm747, %v3207, %v3209
        %v3211 = vrot.slane %v3142, 1
        %v3212 = vsel %vm747, %v3209, %v3211
        %v3213 = vrot.slane %v3145, 1
        %v3214 = vsel %vm747, %v3211, %v3213
        %v3215 = vrot.slane %v3150, 1
        %v3216 = vsel %vm747, %v3213, %v3215
        %v3217 = vrot.slane %v3153, 1
        %v3218 = vsel %vm747, %v3215, %v3217
        %v3219 = vrot.slane %v3158, 1
        %v3220 = vsel %vm747, %v3217, %v3219
        %v3221 = vrot.slane %v3161, 1
        %v3222 = vsel %vm747, %v3219, %v3221
        %v3223 = vrot.slane %v3166, 1
        %v3224 = vsel %vm747, %v3221, %v3223
        %v3225 = vrot.slane %v3169, 1
        %v3226 = vsel %vm747, %v3223, %v3225
        %v3227 = vrot.slane %v3174, 1
        %v3228 = vsel %vm747, %v3225, %v3227
        %v3245 = vadd.f32 %v2995, %v3198
        %v3246 = vadd.f32 %v2996, %v3200
        %v3247 = vadd.f32 %v2997, %v3202
        %v3248 = vadd.f32 %v2998, %v3204
        %v3249 = vadd.f32 %v2999, %v3206
        %v3250 = vadd.f32 %v3000, %v3208
        %v3251 = vadd.f32 %v3001, %v3210
        %v3252 = vadd.f32 %v3002, %v3212
        %v3253 = vadd.f32 %v3003, %v3214
        %v3254 = vadd.f32 %v3004, %v3216
        %v3255 = vadd.f32 %v3005, %v3218
        %v3256 = vadd.f32 %v3006, %v3220
        %v3257 = vadd.f32 %v3007, %v3222
        %v3258 = vadd.f32 %v3008, %v3224
        %v3259 = vadd.f32 %v3009, %v3226
        %v3260 = vadd.f32 %v3010, %v3228
        %v3261 = vld [vmem:[%s813] sm:$0xf]
        %v3262 = vld [vmem:[%s813 + $0x4] sm:$0xf]
        %v3263 = vld [vmem:[%s813 + $0x8] sm:$0xf]
        %v3264 = vld [vmem:[%s813 + $0xc] sm:$0xf]
        %v3265 = vld [vmem:[%s813 + $0x10] sm:$0xf]
        %v3266 = vld [vmem:[%s813 + $0x14] sm:$0xf]
        %v3267 = vld [vmem:[%s813 + $0x18] sm:$0xf]
        %v3268 = vld [vmem:[%s813 + $0x1c] sm:$0xf]
        %v3269 = vld [vmem:[%s813 + $0x20] sm:$0xf]
        %v3270 = vld [vmem:[%s813 + $0x24] sm:$0xf]
        %v3271 = vld [vmem:[%s813 + $0x28] sm:$0xf]
        %v3272 = vld [vmem:[%s813 + $0x2c] sm:$0xf]
        %v3273 = vld [vmem:[%s813 + $0x30] sm:$0xf]
        %v3274 = vld [vmem:[%s813 + $0x34] sm:$0xf]
        %v3275 = vld [vmem:[%s813 + $0x38] sm:$0xf]
        %v3276 = vld [vmem:[%s813 + $0x3c] sm:$0xf]
        %v3293 = vunpack.c.l.b16 %v3261
        %v3294 = vunpack.c.l.b16 %v3262
        %v3295 = vunpack.c.l.b16 %v3263
        %v3296 = vunpack.c.l.b16 %v3264
        %v3297 = vunpack.c.l.b16 %v3265
        %v3298 = vunpack.c.l.b16 %v3266
        %v3299 = vunpack.c.l.b16 %v3267
        %v3300 = vunpack.c.l.b16 %v3268
        %v3301 = vunpack.c.l.b16 %v3269
        %v3302 = vunpack.c.l.b16 %v3270
        %v3303 = vunpack.c.l.b16 %v3271
        %v3304 = vunpack.c.l.b16 %v3272
        %v3305 = vunpack.c.l.b16 %v3273
        %v3306 = vunpack.c.l.b16 %v3274
        %v3307 = vunpack.c.l.b16 %v3275
        %v3308 = vunpack.c.l.b16 %v3276
        %v3309 = vpack.c.b16 %v3294, %v3293
        %v3310 = vpack.c.b16 %v3296, %v3295
        %v3311 = vpack.c.b16 %v3298, %v3297
        %v3312 = vpack.c.b16 %v3300, %v3299
        %v3313 = vpack.c.b16 %v3302, %v3301
        %v3314 = vpack.c.b16 %v3304, %v3303
        %v3315 = vpack.c.b16 %v3306, %v3305
        %v3316 = vpack.c.b16 %v3308, %v3307
        %3325 = vmatprep.subr.bf16.mxu0 0
        %3326 = vmatpush1.bf16.msra.mxu0 %v3309
        %3327 = vmatprep.subr.bf16.mxu0 0
        %3328 = vmatpush1.bf16.msra.mxu0 %v3310
        %3329 = vmatprep.subr.bf16.mxu0 0
        %3330 = vmatpush1.bf16.msra.mxu0 %v3311
        %3331 = vmatprep.subr.bf16.mxu0 0
        %3332 = vmatpush1.bf16.msra.mxu0 %v3312
        %3333 = vmatprep.subr.bf16.mxu0 0
        %3334 = vmatpush1.bf16.msra.mxu0 %v3313
        %3335 = vmatprep.subr.bf16.mxu0 0
        %3336 = vmatpush1.bf16.msra.mxu0 %v3314
        %3337 = vmatprep.subr.bf16.mxu0 0
        %3338 = vmatpush1.bf16.msra.mxu0 %v3315
        %3339 = vmatprep.subr.bf16.mxu0 0
        %3340 = vmatpush1.bf16.msra.mxu0 %v3316
        %3341 = vmatprep.subr.bf16.mxu0 0
        %3342 = vmatpush1.bf16.msra.mxu0 0
        %3343 = vmatprep.subr.bf16.mxu0 0
        %3344 = vmatpush1.bf16.msra.mxu0 0
        %3345 = vmatprep.subr.bf16.mxu0 0
        %3346 = vmatpush1.bf16.msra.mxu0 0
        %3347 = vmatprep.subr.bf16.mxu0 0
        %3348 = vmatpush1.bf16.msra.mxu0 0
        %3349 = vmatprep.subr.bf16.mxu0 0
        %3350 = vmatpush1.bf16.msra.mxu0 0
        %3351 = vmatprep.subr.bf16.mxu0 0
        %3352 = vmatpush1.bf16.msra.mxu0 0
        %3353 = vmatprep.subr.bf16.mxu0 0
        %3354 = vmatpush1.bf16.msra.mxu0 0
        %3355 = vmatprep.subr.bf16.mxu0 0
        %3356 = vmatpush1.bf16.msra.mxu0 0
        %3357 = vmatprep.mubr.bf16.mxu0 0
        %3358 = vmatmul.mubr.bf16.gmra.mrb[0].mxu0 %v2826
        %v3359 = vpop.f32.mrb[0].mxu0
        %v3360 = vadd.f32 0.0, %v3359
        %v3361 = vpop.f32.mrb[0].mxu0
        %v3362 = vpop.f32.mrb[0].mxu0
        %v3363 = vadd.f32 0.0, %v3362
        %v3364 = vpop.f32.mrb[0].mxu0
        %3365 = vmatprep.mubr.bf16.mxu0 0
        %3366 = vmatmul.mubr.bf16.gmra.mrb[0].mxu0 %v2827
        %v3367 = vpop.f32.mrb[0].mxu0
        %v3368 = vadd.f32 0.0, %v3367
        %v3369 = vpop.f32.mrb[0].mxu0
        %v3370 = vpop.f32.mrb[0].mxu0
        %v3371 = vadd.f32 0.0, %v3370
        %v3372 = vpop.f32.mrb[0].mxu0
        %3373 = vmatprep.mubr.bf16.mxu0 0
        %3374 = vmatmul.mubr.bf16.gmra.mrb[0].mxu0 %v2828
        %v3375 = vpop.f32.mrb[0].mxu0
        %v3376 = vadd.f32 0.0, %v3375
        %v3377 = vpop.f32.mrb[0].mxu0
        %v3378 = vpop.f32.mrb[0].mxu0
        %v3379 = vadd.f32 0.0, %v3378
        %v3380 = vpop.f32.mrb[0].mxu0
        %3381 = vmatprep.mubr.bf16.mxu0 0
        %3382 = vmatmul.mubr.bf16.gmra.mrb[0].mxu0 %v2829
        %v3383 = vpop.f32.mrb[0].mxu0
        %v3384 = vadd.f32 0.0, %v3383
        %v3385 = vpop.f32.mrb[0].mxu0
        %v3386 = vpop.f32.mrb[0].mxu0
        %v3387 = vadd.f32 0.0, %v3386
        %v3388 = vpop.f32.mrb[0].mxu0
        %3389 = vmatprep.mubr.bf16.mxu0 0
        %3390 = vmatmul.mubr.bf16.gmra.mrb[0].mxu0 %v2830
        %v3391 = vpop.f32.mrb[0].mxu0
        %v3392 = vadd.f32 0.0, %v3391
        %v3393 = vpop.f32.mrb[0].mxu0
        %v3394 = vpop.f32.mrb[0].mxu0
        %v3395 = vadd.f32 0.0, %v3394
        %v3396 = vpop.f32.mrb[0].mxu0
        %3397 = vmatprep.mubr.bf16.mxu0 0
        %3398 = vmatmul.mubr.bf16.gmra.mrb[0].mxu0 %v2831
        %v3399 = vpop.f32.mrb[0].mxu0
        %v3400 = vadd.f32 0.0, %v3399
        %v3401 = vpop.f32.mrb[0].mxu0
        %v3402 = vpop.f32.mrb[0].mxu0
        %v3403 = vadd.f32 0.0, %v3402
        %v3404 = vpop.f32.mrb[0].mxu0
        %3405 = vmatprep.mubr.bf16.mxu0 0
        %3406 = vmatmul.mubr.bf16.gmra.mrb[0].mxu0 %v2832
        %v3407 = vpop.f32.mrb[0].mxu0
        %v3408 = vadd.f32 0.0, %v3407
        %v3409 = vpop.f32.mrb[0].mxu0
        %v3410 = vpop.f32.mrb[0].mxu0
        %v3411 = vadd.f32 0.0, %v3410
        %v3412 = vpop.f32.mrb[0].mxu0
        %3413 = vmatprep.mubr.bf16.mxu0 0
        %3414 = vmatmul.mubr.bf16.gmra.mrb[0].mxu0 %v2833
        %v3415 = vpop.f32.mrb[0].mxu0
        %v3416 = vadd.f32 0.0, %v3415
        %v3417 = vpop.f32.mrb[0].mxu0
        %v3418 = vpop.f32.mrb[0].mxu0
        %v3419 = vadd.f32 0.0, %v3418
        %v3420 = vpop.f32.mrb[0].mxu0
        %3421 = vmatprep.mubr.bf16.mxu0 0
        %3422 = vmatmul.mubr.bf16.gmra.mrb[0].mxu0 %v2834
        %v3423 = vpop.f32.mrb[0].mxu0
        %v3424 = vadd.f32 0.0, %v3423
        %v3425 = vpop.f32.mrb[0].mxu0
        %v3426 = vpop.f32.mrb[0].mxu0
        %v3427 = vpop.f32.mrb[0].mxu0
        %3428 = vdwg.mxu0
        %v3446 = vrot.slane %v3360, 2
        %v3447 = vrot.slane %v3363, 2
        %v3448 = vsel %vm999, %v3446, %v3447
        %v3449 = vrot.slane %v3368, 2
        %v3450 = vsel %vm999, %v3447, %v3449
        %v3451 = vrot.slane %v3371, 2
        %v3452 = vsel %vm999, %v3449, %v3451
        %v3453 = vrot.slane %v3376, 2
        %v3454 = vsel %vm999, %v3451, %v3453
        %v3455 = vrot.slane %v3379, 2
        %v3456 = vsel %vm999, %v3453, %v3455
        %v3457 = vrot.slane %v3384, 2
        %v3458 = vsel %vm999, %v3455, %v3457
        %v3459 = vrot.slane %v3387, 2
        %v3460 = vsel %vm999, %v3457, %v3459
        %v3461 = vrot.slane %v3392, 2
        %v3462 = vsel %vm999, %v3459, %v3461
        %v3463 = vrot.slane %v3395, 2
        %v3464 = vsel %vm999, %v3461, %v3463
        %v3465 = vrot.slane %v3400, 2
        %v3466 = vsel %vm999, %v3463, %v3465
        %v3467 = vrot.slane %v3403, 2
        %v3468 = vsel %vm999, %v3465, %v3467
        %v3469 = vrot.slane %v3408, 2
        %v3470 = vsel %vm999, %v3467, %v3469
        %v3471 = vrot.slane %v3411, 2
        %v3472 = vsel %vm999, %v3469, %v3471
        %v3473 = vrot.slane %v3416, 2
        %v3474 = vsel %vm999, %v3471, %v3473
        %v3475 = vrot.slane %v3419, 2
        %v3476 = vsel %vm999, %v3473, %v3475
        %v3477 = vrot.slane %v3424, 2
        %v3478 = vsel %vm999, %v3475, %v3477
        %v3495 = vadd.f32 %v3245, %v3448
        %v3496 = vadd.f32 %v3246, %v3450
        %v3497 = vadd.f32 %v3247, %v3452
        %v3498 = vadd.f32 %v3248, %v3454
        %v3499 = vadd.f32 %v3249, %v3456
        %v3500 = vadd.f32 %v3250, %v3458
        %v3501 = vadd.f32 %v3251, %v3460
        %v3502 = vadd.f32 %v3252, %v3462
        %v3503 = vadd.f32 %v3253, %v3464
        %v3504 = vadd.f32 %v3254, %v3466
        %v3505 = vadd.f32 %v3255, %v3468
        %v3506 = vadd.f32 %v3256, %v3470
        %v3507 = vadd.f32 %v3257, %v3472
        %v3508 = vadd.f32 %v3258, %v3474
        %v3509 = vadd.f32 %v3259, %v3476
        %v3510 = vadd.f32 %v3260, %v3478
        %v3511 = vld [vmem:[%s263 + $0x48] sm:$0xf]
        %v3512 = vld [vmem:[%s263 + $0x4c] sm:$0xf]
        %v3513 = vld [vmem:[%s263 + $0x50] sm:$0xf]
        %v3514 = vld [vmem:[%s263 + $0x54] sm:$0xf]
        %v3515 = vld [vmem:[%s263 + $0x58] sm:$0xf]
        %v3516 = vld [vmem:[%s263 + $0x5c] sm:$0xf]
        %v3517 = vld [vmem:[%s263 + $0x60] sm:$0xf]
        %v3518 = vld [vmem:[%s263 + $0x64] sm:$0xf]
        %v3519 = vld [vmem:[%s263 + $0x68] sm:$0xf]
        %v3520 = vld [vmem:[%s263 + $0x6c] sm:$0xf]
        %v3521 = vld [vmem:[%s263 + $0x70] sm:$0xf]
        %v3522 = vld [vmem:[%s263 + $0x74] sm:$0xf]
        %v3523 = vld [vmem:[%s263 + $0x78] sm:$0xf]
        %v3524 = vld [vmem:[%s263 + $0x7c] sm:$0xf]
        %v3525 = vld [vmem:[%s263 + $0x80] sm:$0xf]
        %v3526 = vld [vmem:[%s263 + $0x84] sm:$0xf]
        %v3527 = vld [vmem:[%s263 + $0x88] sm:$0xf]
        %v3528 = vld [vmem:[%s263 + $0x8c] sm:$0xf]
        %v3529 = vld [vmem:[%s1083] sm:$0xf]
        %v3530 = vld [vmem:[%s1083 + $0x4] sm:$0xf]
        %v3531 = vld [vmem:[%s1083 + $0x8] sm:$0xf]
        %v3532 = vld [vmem:[%s1083 + $0xc] sm:$0xf]
        %v3533 = vld [vmem:[%s1083 + $0x10] sm:$0xf]
        %v3534 = vld [vmem:[%s1083 + $0x14] sm:$0xf]
        %v3535 = vld [vmem:[%s1083 + $0x18] sm:$0xf]
        %v3536 = vld [vmem:[%s1083 + $0x1c] sm:$0xf]
        %v3537 = vld [vmem:[%s1083 + $0x20] sm:$0xf]
        %v3538 = vld [vmem:[%s1083 + $0x24] sm:$0xf]
        %v3539 = vld [vmem:[%s1083 + $0x28] sm:$0xf]
        %v3540 = vld [vmem:[%s1083 + $0x2c] sm:$0xf]
        %v3541 = vld [vmem:[%s1083 + $0x30] sm:$0xf]
        %v3542 = vld [vmem:[%s1083 + $0x34] sm:$0xf]
        %v3543 = vld [vmem:[%s1083 + $0x38] sm:$0xf]
        %v3544 = vld [vmem:[%s1083 + $0x3c] sm:$0xf]
        %v3563 = vunpack.c.l.b16 %v3511
        %v3564 = vunpack.c.l.b16 %v3512
        %v3565 = vunpack.c.l.b16 %v3513
        %v3566 = vunpack.c.l.b16 %v3514
        %v3567 = vunpack.c.l.b16 %v3515
        %v3568 = vunpack.c.l.b16 %v3516
        %v3569 = vunpack.c.l.b16 %v3517
        %v3570 = vunpack.c.l.b16 %v3518
        %v3571 = vunpack.c.l.b16 %v3519
        %v3572 = vunpack.c.l.b16 %v3520
        %v3573 = vunpack.c.l.b16 %v3521
        %v3574 = vunpack.c.l.b16 %v3522
        %v3575 = vunpack.c.l.b16 %v3523
        %v3576 = vunpack.c.l.b16 %v3524
        %v3577 = vunpack.c.l.b16 %v3525
        %v3578 = vunpack.c.l.b16 %v3526
        %v3579 = vunpack.c.l.b16 %v3527
        %v3580 = vunpack.c.l.b16 %v3528
        %v3581 = vpack.c.b16 %v3564, %v3563
        %v3582 = vpack.c.b16 %v3566, %v3565
        %v3583 = vpack.c.b16 %v3568, %v3567
        %v3584 = vpack.c.b16 %v3570, %v3569
        %v3585 = vpack.c.b16 %v3572, %v3571
        %v3586 = vpack.c.b16 %v3574, %v3573
        %v3587 = vpack.c.b16 %v3576, %v3575
        %v3588 = vpack.c.b16 %v3578, %v3577
        %v3589 = vpack.c.b16 %v3580, %v3579
        %v3615 = vunpack.c.l.b16 %v3529
        %v3616 = vunpack.c.l.b16 %v3530
        %v3617 = vunpack.c.l.b16 %v3531
        %v3618 = vunpack.c.l.b16 %v3532
        %v3619 = vunpack.c.l.b16 %v3533
        %v3620 = vunpack.c.l.b16 %v3534
        %v3621 = vunpack.c.l.b16 %v3535
        %v3622 = vunpack.c.l.b16 %v3536
        %v3623 = vunpack.c.l.b16 %v3537
        %v3624 = vunpack.c.l.b16 %v3538
        %v3625 = vunpack.c.l.b16 %v3539
        %v3626 = vunpack.c.l.b16 %v3540
        %v3627 = vunpack.c.l.b16 %v3541
        %v3628 = vunpack.c.l.b16 %v3542
        %v3629 = vunpack.c.l.b16 %v3543
        %v3630 = vunpack.c.l.b16 %v3544
        %v3631 = vpack.c.b16 %v3616, %v3615
        %v3632 = vpack.c.b16 %v3618, %v3617
        %v3633 = vpack.c.b16 %v3620, %v3619
        %v3634 = vpack.c.b16 %v3622, %v3621
        %v3635 = vpack.c.b16 %v3624, %v3623
        %v3636 = vpack.c.b16 %v3626, %v3625
        %v3637 = vpack.c.b16 %v3628, %v3627
        %v3638 = vpack.c.b16 %v3630, %v3629
        %3647 = vmatprep.subr.bf16.mxu0 0
        %3648 = vmatpush1.bf16.msra.mxu0 %v3631
        %3649 = vmatprep.subr.bf16.mxu0 0
        %3650 = vmatpush1.bf16.msra.mxu0 %v3632
        %3651 = vmatprep.subr.bf16.mxu0 0
        %3652 = vmatpush1.bf16.msra.mxu0 %v3633
        %3653 = vmatprep.subr.bf16.mxu0 0
        %3654 = vmatpush1.bf16.msra.mxu0 %v3634
        %3655 = vmatprep.subr.bf16.mxu0 0
        %3656 = vmatpush1.bf16.msra.mxu0 %v3635
        %3657 = vmatprep.subr.bf16.mxu0 0
        %3658 = vmatpush1.bf16.msra.mxu0 %v3636
        %3659 = vmatprep.subr.bf16.mxu0 0
        %3660 = vmatpush1.bf16.msra.mxu0 %v3637
        %3661 = vmatprep.subr.bf16.mxu0 0
        %3662 = vmatpush1.bf16.msra.mxu0 %v3638
        %3663 = vmatprep.subr.bf16.mxu0 0
        %3664 = vmatpush1.bf16.msra.mxu0 0
        %3665 = vmatprep.subr.bf16.mxu0 0
        %3666 = vmatpush1.bf16.msra.mxu0 0
        %3667 = vmatprep.subr.bf16.mxu0 0
        %3668 = vmatpush1.bf16.msra.mxu0 0
        %3669 = vmatprep.subr.bf16.mxu0 0
        %3670 = vmatpush1.bf16.msra.mxu0 0
        %3671 = vmatprep.subr.bf16.mxu0 0
        %3672 = vmatpush1.bf16.msra.mxu0 0
        %3673 = vmatprep.subr.bf16.mxu0 0
        %3674 = vmatpush1.bf16.msra.mxu0 0
        %3675 = vmatprep.subr.bf16.mxu0 0
        %3676 = vmatpush1.bf16.msra.mxu0 0
        %3677 = vmatprep.subr.bf16.mxu0 0
        %3678 = vmatpush1.bf16.msra.mxu0 0
        %3679 = vmatprep.mubr.bf16.mxu0 0
        %3680 = vmatmul.mubr.bf16.gmra.mrb[0].mxu0 %v3581
        %v3681 = vpop.f32.mrb[0].mxu0
        %v3682 = vadd.f32 0.0, %v3681
        %v3683 = vpop.f32.mrb[0].mxu0
        %v3684 = vpop.f32.mrb[0].mxu0
        %v3685 = vadd.f32 0.0, %v3684
        %v3686 = vpop.f32.mrb[0].mxu0
        %3687 = vmatprep.mubr.bf16.mxu0 0
        %3688 = vmatmul.mubr.bf16.gmra.mrb[0].mxu0 %v3582
        %v3689 = vpop.f32.mrb[0].mxu0
        %v3690 = vadd.f32 0.0, %v3689
        %v3691 = vpop.f32.mrb[0].mxu0
        %v3692 = vpop.f32.mrb[0].mxu0
        %v3693 = vadd.f32 0.0, %v3692
        %v3694 = vpop.f32.mrb[0].mxu0
        %3695 = vmatprep.mubr.bf16.mxu0 0
        %3696 = vmatmul.mubr.bf16.gmra.mrb[0].mxu0 %v3583
        %v3697 = vpop.f32.mrb[0].mxu0
        %v3698 = vadd.f32 0.0, %v3697
        %v3699 = vpop.f32.mrb[0].mxu0
        %v3700 = vpop.f32.mrb[0].mxu0
        %v3701 = vadd.f32 0.0, %v3700
        %v3702 = vpop.f32.mrb[0].mxu0
        %3703 = vmatprep.mubr.bf16.mxu0 0
        %3704 = vmatmul.mubr.bf16.gmra.mrb[0].mxu0 %v3584
        %v3705 = vpop.f32.mrb[0].mxu0
        %v3706 = vadd.f32 0.0, %v3705
        %v3707 = vpop.f32.mrb[0].mxu0
        %v3708 = vpop.f32.mrb[0].mxu0
        %v3709 = vadd.f32 0.0, %v3708
        %v3710 = vpop.f32.mrb[0].mxu0
        %3711 = vmatprep.mubr.bf16.mxu0 0
        %3712 = vmatmul.mubr.bf16.gmra.mrb[0].mxu0 %v3585
        %v3713 = vpop.f32.mrb[0].mxu0
        %v3714 = vadd.f32 0.0, %v3713
        %v3715 = vpop.f32.mrb[0].mxu0
        %v3716 = vpop.f32.mrb[0].mxu0
        %v3717 = vadd.f32 0.0, %v3716
        %v3718 = vpop.f32.mrb[0].mxu0
        %3719 = vmatprep.mubr.bf16.mxu0 0
        %3720 = vmatmul.mubr.bf16.gmra.mrb[0].mxu0 %v3586
        %v3721 = vpop.f32.mrb[0].mxu0
        %v3722 = vadd.f32 0.0, %v3721
        %v3723 = vpop.f32.mrb[0].mxu0
        %v3724 = vpop.f32.mrb[0].mxu0
        %v3725 = vadd.f32 0.0, %v3724
        %v3726 = vpop.f32.mrb[0].mxu0
        %3727 = vmatprep.mubr.bf16.mxu0 0
        %3728 = vmatmul.mubr.bf16.gmra.mrb[0].mxu0 %v3587
        %v3729 = vpop.f32.mrb[0].mxu0
        %v3730 = vadd.f32 0.0, %v3729
        %v3731 = vpop.f32.mrb[0].mxu0
        %v3732 = vpop.f32.mrb[0].mxu0
        %v3733 = vadd.f32 0.0, %v3732
        %v3734 = vpop.f32.mrb[0].mxu0
        %3735 = vmatprep.mubr.bf16.mxu0 0
        %3736 = vmatmul.mubr.bf16.gmra.mrb[0].mxu0 %v3588
        %v3737 = vpop.f32.mrb[0].mxu0
        %v3738 = vadd.f32 0.0, %v3737
        %v3739 = vpop.f32.mrb[0].mxu0
        %v3740 = vpop.f32.mrb[0].mxu0
        %v3741 = vadd.f32 0.0, %v3740
        %v3742 = vpop.f32.mrb[0].mxu0
        %3743 = vmatprep.mubr.bf16.mxu0 0
        %3744 = vmatmul.mubr.bf16.gmra.mrb[0].mxu0 %v3589
        %v3745 = vpop.f32.mrb[0].mxu0
        %v3746 = vpop.f32.mrb[0].mxu0
        %v3747 = vpop.f32.mrb[0].mxu0
        %v3748 = vpop.f32.mrb[0].mxu0
        %3749 = vdwg.mxu0
        %v3750 = vadd.f32 %v3495, %v3682
        %v3751 = vadd.f32 %v3496, %v3685
        %v3752 = vadd.f32 %v3497, %v3690
        %v3753 = vadd.f32 %v3498, %v3693
        %v3754 = vadd.f32 %v3499, %v3698
        %v3755 = vadd.f32 %v3500, %v3701
        %v3756 = vadd.f32 %v3501, %v3706
        %v3757 = vadd.f32 %v3502, %v3709
        %v3758 = vadd.f32 %v3503, %v3714
        %v3759 = vadd.f32 %v3504, %v3717
        %v3760 = vadd.f32 %v3505, %v3722
        %v3761 = vadd.f32 %v3506, %v3725
        %v3762 = vadd.f32 %v3507, %v3730
        %v3763 = vadd.f32 %v3508, %v3733
        %v3764 = vadd.f32 %v3509, %v3738
        %v3765 = vadd.f32 %v3510, %v3741
        %v3766 = vld [vmem:[%s1321] sm:$0xf]
        %v3767 = vld [vmem:[%s1321 + $0x4] sm:$0xf]
        %v3768 = vld [vmem:[%s1321 + $0x8] sm:$0xf]
        %v3769 = vld [vmem:[%s1321 + $0xc] sm:$0xf]
        %v3770 = vld [vmem:[%s1321 + $0x10] sm:$0xf]
        %v3771 = vld [vmem:[%s1321 + $0x14] sm:$0xf]
        %v3772 = vld [vmem:[%s1321 + $0x18] sm:$0xf]
        %v3773 = vld [vmem:[%s1321 + $0x1c] sm:$0xf]
        %v3774 = vld [vmem:[%s1321 + $0x20] sm:$0xf]
        %v3775 = vld [vmem:[%s1321 + $0x24] sm:$0xf]
        %v3776 = vld [vmem:[%s1321 + $0x28] sm:$0xf]
        %v3777 = vld [vmem:[%s1321 + $0x2c] sm:$0xf]
        %v3778 = vld [vmem:[%s1321 + $0x30] sm:$0xf]
        %v3779 = vld [vmem:[%s1321 + $0x34] sm:$0xf]
        %v3780 = vld [vmem:[%s1321 + $0x38] sm:$0xf]
        %v3781 = vld [vmem:[%s1321 + $0x3c] sm:$0xf]
        %v3798 = vunpack.c.l.b16 %v3766
        %v3799 = vunpack.c.l.b16 %v3767
        %v3800 = vunpack.c.l.b16 %v3768
        %v3801 = vunpack.c.l.b16 %v3769
        %v3802 = vunpack.c.l.b16 %v3770
        %v3803 = vunpack.c.l.b16 %v3771
        %v3804 = vunpack.c.l.b16 %v3772
        %v3805 = vunpack.c.l.b16 %v3773
        %v3806 = vunpack.c.l.b16 %v3774
        %v3807 = vunpack.c.l.b16 %v3775
        %v3808 = vunpack.c.l.b16 %v3776
        %v3809 = vunpack.c.l.b16 %v3777
        %v3810 = vunpack.c.l.b16 %v3778
        %v3811 = vunpack.c.l.b16 %v3779
        %v3812 = vunpack.c.l.b16 %v3780
        %v3813 = vunpack.c.l.b16 %v3781
        %v3814 = vpack.c.b16 %v3799, %v3798
        %v3815 = vpack.c.b16 %v3801, %v3800
        %v3816 = vpack.c.b16 %v3803, %v3802
        %v3817 = vpack.c.b16 %v3805, %v3804
        %v3818 = vpack.c.b16 %v3807, %v3806
        %v3819 = vpack.c.b16 %v3809, %v3808
        %v3820 = vpack.c.b16 %v3811, %v3810
        %v3821 = vpack.c.b16 %v3813, %v3812
        %3830 = vmatprep.subr.bf16.mxu0 0
        %3831 = vmatpush1.bf16.msra.mxu0 %v3814
        %3832 = vmatprep.subr.bf16.mxu0 0
        %3833 = vmatpush1.bf16.msra.mxu0 %v3815
        %3834 = vmatprep.subr.bf16.mxu0 0
        %3835 = vmatpush1.bf16.msra.mxu0 %v3816
        %3836 = vmatprep.subr.bf16.mxu0 0
        %3837 = vmatpush1.bf16.msra.mxu0 %v3817
        %3838 = vmatprep.subr.bf16.mxu0 0
        %3839 = vmatpush1.bf16.msra.mxu0 %v3818
        %3840 = vmatprep.subr.bf16.mxu0 0
        %3841 = vmatpush1.bf16.msra.mxu0 %v3819
        %3842 = vmatprep.subr.bf16.mxu0 0
        %3843 = vmatpush1.bf16.msra.mxu0 %v3820
        %3844 = vmatprep.subr.bf16.mxu0 0
        %3845 = vmatpush1.bf16.msra.mxu0 %v3821
        %3846 = vmatprep.subr.bf16.mxu0 0
        %3847 = vmatpush1.bf16.msra.mxu0 0
        %3848 = vmatprep.subr.bf16.mxu0 0
        %3849 = vmatpush1.bf16.msra.mxu0 0
        %3850 = vmatprep.subr.bf16.mxu0 0
        %3851 = vmatpush1.bf16.msra.mxu0 0
        %3852 = vmatprep.subr.bf16.mxu0 0
        %3853 = vmatpush1.bf16.msra.mxu0 0
        %3854 = vmatprep.subr.bf16.mxu0 0
        %3855 = vmatpush1.bf16.msra.mxu0 0
        %3856 = vmatprep.subr.bf16.mxu0 0
        %3857 = vmatpush1.bf16.msra.mxu0 0
        %3858 = vmatprep.subr.bf16.mxu0 0
        %3859 = vmatpush1.bf16.msra.mxu0 0
        %3860 = vmatprep.subr.bf16.mxu0 0
        %3861 = vmatpush1.bf16.msra.mxu0 0
        %3862 = vmatprep.mubr.bf16.mxu0 0
        %3863 = vmatmul.mubr.bf16.gmra.mrb[0].mxu0 %v3581
        %v3864 = vpop.f32.mrb[0].mxu0
        %v3865 = vadd.f32 0.0, %v3864
        %v3866 = vpop.f32.mrb[0].mxu0
        %v3867 = vpop.f32.mrb[0].mxu0
        %v3868 = vadd.f32 0.0, %v3867
        %v3869 = vpop.f32.mrb[0].mxu0
        %3870 = vmatprep.mubr.bf16.mxu0 0
        %3871 = vmatmul.mubr.bf16.gmra.mrb[0].mxu0 %v3582
        %v3872 = vpop.f32.mrb[0].mxu0
        %v3873 = vadd.f32 0.0, %v3872
        %v3874 = vpop.f32.mrb[0].mxu0
        %v3875 = vpop.f32.mrb[0].mxu0
        %v3876 = vadd.f32 0.0, %v3875
        %v3877 = vpop.f32.mrb[0].mxu0
        %3878 = vmatprep.mubr.bf16.mxu0 0
        %3879 = vmatmul.mubr.bf16.gmra.mrb[0].mxu0 %v3583
        %v3880 = vpop.f32.mrb[0].mxu0
        %v3881 = vadd.f32 0.0, %v3880
        %v3882 = vpop.f32.mrb[0].mxu0
        %v3883 = vpop.f32.mrb[0].mxu0
        %v3884 = vadd.f32 0.0, %v3883
        %v3885 = vpop.f32.mrb[0].mxu0
        %3886 = vmatprep.mubr.bf16.mxu0 0
        %3887 = vmatmul.mubr.bf16.gmra.mrb[0].mxu0 %v3584
        %v3888 = vpop.f32.mrb[0].mxu0
        %v3889 = vadd.f32 0.0, %v3888
        %v3890 = vpop.f32.mrb[0].mxu0
        %v3891 = vpop.f32.mrb[0].mxu0
        %v3892 = vadd.f32 0.0, %v3891
        %v3893 = vpop.f32.mrb[0].mxu0
        %3894 = vmatprep.mubr.bf16.mxu0 0
        %3895 = vmatmul.mubr.bf16.gmra.mrb[0].mxu0 %v3585
        %v3896 = vpop.f32.mrb[0].mxu0
        %v3897 = vadd.f32 0.0, %v3896
        %v3898 = vpop.f32.mrb[0].mxu0
        %v3899 = vpop.f32.mrb[0].mxu0
        %v3900 = vadd.f32 0.0, %v3899
        %v3901 = vpop.f32.mrb[0].mxu0
        %3902 = vmatprep.mubr.bf16.mxu0 0
        %3903 = vmatmul.mubr.bf16.gmra.mrb[0].mxu0 %v3586
        %v3904 = vpop.f32.mrb[0].mxu0
        %v3905 = vadd.f32 0.0, %v3904
        %v3906 = vpop.f32.mrb[0].mxu0
        %v3907 = vpop.f32.mrb[0].mxu0
        %v3908 = vadd.f32 0.0, %v3907
        %v3909 = vpop.f32.mrb[0].mxu0
        %3910 = vmatprep.mubr.bf16.mxu0 0
        %3911 = vmatmul.mubr.bf16.gmra.mrb[0].mxu0 %v3587
        %v3912 = vpop.f32.mrb[0].mxu0
        %v3913 = vadd.f32 0.0, %v3912
        %v3914 = vpop.f32.mrb[0].mxu0
        %v3915 = vpop.f32.mrb[0].mxu0
        %v3916 = vadd.f32 0.0, %v3915
        %v3917 = vpop.f32.mrb[0].mxu0
        %3918 = vmatprep.mubr.bf16.mxu0 0
        %3919 = vmatmul.mubr.bf16.gmra.mrb[0].mxu0 %v3588
        %v3920 = vpop.f32.mrb[0].mxu0
        %v3921 = vadd.f32 0.0, %v3920
        %v3922 = vpop.f32.mrb[0].mxu0
        %v3923 = vpop.f32.mrb[0].mxu0
        %v3924 = vadd.f32 0.0, %v3923
        %v3925 = vpop.f32.mrb[0].mxu0
        %3926 = vmatprep.mubr.bf16.mxu0 0
        %3927 = vmatmul.mubr.bf16.gmra.mrb[0].mxu0 %v3589
        %v3928 = vpop.f32.mrb[0].mxu0
        %v3929 = vadd.f32 0.0, %v3928
        %v3930 = vpop.f32.mrb[0].mxu0
        %v3931 = vpop.f32.mrb[0].mxu0
        %v3932 = vpop.f32.mrb[0].mxu0
        %3933 = vdwg.mxu0
        %v3951 = vrot.slane %v3865, 1
        %v3952 = vrot.slane %v3868, 1
        %v3953 = vsel %vm747, %v3951, %v3952
        %v3954 = vrot.slane %v3873, 1
        %v3955 = vsel %vm747, %v3952, %v3954
        %v3956 = vrot.slane %v3876, 1
        %v3957 = vsel %vm747, %v3954, %v3956
        %v3958 = vrot.slane %v3881, 1
        %v3959 = vsel %vm747, %v3956, %v3958
        %v3960 = vrot.slane %v3884, 1
        %v3961 = vsel %vm747, %v3958, %v3960
        %v3962 = vrot.slane %v3889, 1
        %v3963 = vsel %vm747, %v3960, %v3962
        %v3964 = vrot.slane %v3892, 1
        %v3965 = vsel %vm747, %v3962, %v3964
        %v3966 = vrot.slane %v3897, 1
        %v3967 = vsel %vm747, %v3964, %v3966
        %v3968 = vrot.slane %v3900, 1
        %v3969 = vsel %vm747, %v3966, %v3968
        %v3970 = vrot.slane %v3905, 1
        %v3971 = vsel %vm747, %v3968, %v3970
        %v3972 = vrot.slane %v3908, 1
        %v3973 = vsel %vm747, %v3970, %v3972
        %v3974 = vrot.slane %v3913, 1
        %v3975 = vsel %vm747, %v3972, %v3974
        %v3976 = vrot.slane %v3916, 1
        %v3977 = vsel %vm747, %v3974, %v3976
        %v3978 = vrot.slane %v3921, 1
        %v3979 = vsel %vm747, %v3976, %v3978
        %v3980 = vrot.slane %v3924, 1
        %v3981 = vsel %vm747, %v3978, %v3980
        %v3982 = vrot.slane %v3929, 1
        %v3983 = vsel %vm747, %v3980, %v3982
        %v4000 = vadd.f32 %v3750, %v3953
        %v4001 = vadd.f32 %v3751, %v3955
        %v4002 = vadd.f32 %v3752, %v3957
        %v4003 = vadd.f32 %v3753, %v3959
        %v4004 = vadd.f32 %v3754, %v3961
        %v4005 = vadd.f32 %v3755, %v3963
        %v4006 = vadd.f32 %v3756, %v3965
        %v4007 = vadd.f32 %v3757, %v3967
        %v4008 = vadd.f32 %v3758, %v3969
        %v4009 = vadd.f32 %v3759, %v3971
        %v4010 = vadd.f32 %v3760, %v3973
        %v4011 = vadd.f32 %v3761, %v3975
        %v4012 = vadd.f32 %v3762, %v3977
        %v4013 = vadd.f32 %v3763, %v3979
        %v4014 = vadd.f32 %v3764, %v3981
        %v4015 = vadd.f32 %v3765, %v3983
        %v4016 = vld [vmem:[%s1572] sm:$0xf]
        %v4017 = vld [vmem:[%s1572 + $0x4] sm:$0xf]
        %v4018 = vld [vmem:[%s1572 + $0x8] sm:$0xf]
        %v4019 = vld [vmem:[%s1572 + $0xc] sm:$0xf]
        %v4020 = vld [vmem:[%s1572 + $0x10] sm:$0xf]
        %v4021 = vld [vmem:[%s1572 + $0x14] sm:$0xf]
        %v4022 = vld [vmem:[%s1572 + $0x18] sm:$0xf]
        %v4023 = vld [vmem:[%s1572 + $0x1c] sm:$0xf]
        %v4024 = vld [vmem:[%s1572 + $0x20] sm:$0xf]
        %v4025 = vld [vmem:[%s1572 + $0x24] sm:$0xf]
        %v4026 = vld [vmem:[%s1572 + $0x28] sm:$0xf]
        %v4027 = vld [vmem:[%s1572 + $0x2c] sm:$0xf]
        %v4028 = vld [vmem:[%s1572 + $0x30] sm:$0xf]
        %v4029 = vld [vmem:[%s1572 + $0x34] sm:$0xf]
        %v4030 = vld [vmem:[%s1572 + $0x38] sm:$0xf]
        %v4031 = vld [vmem:[%s1572 + $0x3c] sm:$0xf]
        %v4048 = vunpack.c.l.b16 %v4016
        %v4049 = vunpack.c.l.b16 %v4017
        %v4050 = vunpack.c.l.b16 %v4018
        %v4051 = vunpack.c.l.b16 %v4019
        %v4052 = vunpack.c.l.b16 %v4020
        %v4053 = vunpack.c.l.b16 %v4021
        %v4054 = vunpack.c.l.b16 %v4022
        %v4055 = vunpack.c.l.b16 %v4023
        %v4056 = vunpack.c.l.b16 %v4024
        %v4057 = vunpack.c.l.b16 %v4025
        %v4058 = vunpack.c.l.b16 %v4026
        %v4059 = vunpack.c.l.b16 %v4027
        %v4060 = vunpack.c.l.b16 %v4028
        %v4061 = vunpack.c.l.b16 %v4029
        %v4062 = vunpack.c.l.b16 %v4030
        %v4063 = vunpack.c.l.b16 %v4031
        %v4064 = vpack.c.b16 %v4049, %v4048
        %v4065 = vpack.c.b16 %v4051, %v4050
        %v4066 = vpack.c.b16 %v4053, %v4052
        %v4067 = vpack.c.b16 %v4055, %v4054
        %v4068 = vpack.c.b16 %v4057, %v4056
        %v4069 = vpack.c.b16 %v4059, %v4058
        %v4070 = vpack.c.b16 %v4061, %v4060
        %v4071 = vpack.c.b16 %v4063, %v4062
        %4080 = vmatprep.subr.bf16.mxu0 0
        %4081 = vmatpush1.bf16.msra.mxu0 %v4064
        %4082 = vmatprep.subr.bf16.mxu0 0
        %4083 = vmatpush1.bf16.msra.mxu0 %v4065
        %4084 = vmatprep.subr.bf16.mxu0 0
        %4085 = vmatpush1.bf16.msra.mxu0 %v4066
        %4086 = vmatprep.subr.bf16.mxu0 0
        %4087 = vmatpush1.bf16.msra.mxu0 %v4067
        %4088 = vmatprep.subr.bf16.mxu0 0
        %4089 = vmatpush1.bf16.msra.mxu0 %v4068
        %4090 = vmatprep.subr.bf16.mxu0 0
        %4091 = vmatpush1.bf16.msra.mxu0 %v4069
        %4092 = vmatprep.subr.bf16.mxu0 0
        %4093 = vmatpush1.bf16.msra.mxu0 %v4070
        %4094 = vmatprep.subr.bf16.mxu0 0
        %4095 = vmatpush1.bf16.msra.mxu0 %v4071
        %4096 = vmatprep.subr.bf16.mxu0 0
        %4097 = vmatpush1.bf16.msra.mxu0 0
        %4098 = vmatprep.subr.bf16.mxu0 0
        %4099 = vmatpush1.bf16.msra.mxu0 0
        %4100 = vmatprep.subr.bf16.mxu0 0
        %4101 = vmatpush1.bf16.msra.mxu0 0
        %4102 = vmatprep.subr.bf16.mxu0 0
        %4103 = vmatpush1.bf16.msra.mxu0 0
        %4104 = vmatprep.subr.bf16.mxu0 0
        %4105 = vmatpush1.bf16.msra.mxu0 0
        %4106 = vmatprep.subr.bf16.mxu0 0
        %4107 = vmatpush1.bf16.msra.mxu0 0
        %4108 = vmatprep.subr.bf16.mxu0 0
        %4109 = vmatpush1.bf16.msra.mxu0 0
        %4110 = vmatprep.subr.bf16.mxu0 0
        %4111 = vmatpush1.bf16.msra.mxu0 0
        %4112 = vmatprep.mubr.bf16.mxu0 0
        %4113 = vmatmul.mubr.bf16.gmra.mrb[0].mxu0 %v3581
        %v4114 = vpop.f32.mrb[0].mxu0
        %v4115 = vadd.f32 0.0, %v4114
        %v4116 = vpop.f32.mrb[0].mxu0
        %v4117 = vpop.f32.mrb[0].mxu0
        %v4118 = vadd.f32 0.0, %v4117
        %v4119 = vpop.f32.mrb[0].mxu0
        %4120 = vmatprep.mubr.bf16.mxu0 0
        %4121 = vmatmul.mubr.bf16.gmra.mrb[0].mxu0 %v3582
        %v4122 = vpop.f32.mrb[0].mxu0
        %v4123 = vadd.f32 0.0, %v4122
        %v4124 = vpop.f32.mrb[0].mxu0
        %v4125 = vpop.f32.mrb[0].mxu0
        %v4126 = vadd.f32 0.0, %v4125
        %v4127 = vpop.f32.mrb[0].mxu0
        %4128 = vmatprep.mubr.bf16.mxu0 0
        %4129 = vmatmul.mubr.bf16.gmra.mrb[0].mxu0 %v3583
        %v4130 = vpop.f32.mrb[0].mxu0
        %v4131 = vadd.f32 0.0, %v4130
        %v4132 = vpop.f32.mrb[0].mxu0
        %v4133 = vpop.f32.mrb[0].mxu0
        %v4134 = vadd.f32 0.0, %v4133
        %v4135 = vpop.f32.mrb[0].mxu0
        %4136 = vmatprep.mubr.bf16.mxu0 0
        %4137 = vmatmul.mubr.bf16.gmra.mrb[0].mxu0 %v3584
        %v4138 = vpop.f32.mrb[0].mxu0
        %v4139 = vadd.f32 0.0, %v4138
        %v4140 = vpop.f32.mrb[0].mxu0
        %v4141 = vpop.f32.mrb[0].mxu0
        %v4142 = vadd.f32 0.0, %v4141
        %v4143 = vpop.f32.mrb[0].mxu0
        %4144 = vmatprep.mubr.bf16.mxu0 0
        %4145 = vmatmul.mubr.bf16.gmra.mrb[0].mxu0 %v3585
        %v4146 = vpop.f32.mrb[0].mxu0
        %v4147 = vadd.f32 0.0, %v4146
        %v4148 = vpop.f32.mrb[0].mxu0
        %v4149 = vpop.f32.mrb[0].mxu0
        %v4150 = vadd.f32 0.0, %v4149
        %v4151 = vpop.f32.mrb[0].mxu0
        %4152 = vmatprep.mubr.bf16.mxu0 0
        %4153 = vmatmul.mubr.bf16.gmra.mrb[0].mxu0 %v3586
        %v4154 = vpop.f32.mrb[0].mxu0
        %v4155 = vadd.f32 0.0, %v4154
        %v4156 = vpop.f32.mrb[0].mxu0
        %v4157 = vpop.f32.mrb[0].mxu0
        %v4158 = vadd.f32 0.0, %v4157
        %v4159 = vpop.f32.mrb[0].mxu0
        %4160 = vmatprep.mubr.bf16.mxu0 0
        %4161 = vmatmul.mubr.bf16.gmra.mrb[0].mxu0 %v3587
        %v4162 = vpop.f32.mrb[0].mxu0
        %v4163 = vadd.f32 0.0, %v4162
        %v4164 = vpop.f32.mrb[0].mxu0
        %v4165 = vpop.f32.mrb[0].mxu0
        %v4166 = vadd.f32 0.0, %v4165
        %v4167 = vpop.f32.mrb[0].mxu0
        %4168 = vmatprep.mubr.bf16.mxu0 0
        %4169 = vmatmul.mubr.bf16.gmra.mrb[0].mxu0 %v3588
        %v4170 = vpop.f32.mrb[0].mxu0
        %v4171 = vadd.f32 0.0, %v4170
        %v4172 = vpop.f32.mrb[0].mxu0
        %v4173 = vpop.f32.mrb[0].mxu0
        %v4174 = vadd.f32 0.0, %v4173
        %v4175 = vpop.f32.mrb[0].mxu0
        %4176 = vmatprep.mubr.bf16.mxu0 0
        %4177 = vmatmul.mubr.bf16.gmra.mrb[0].mxu0 %v3589
        %v4178 = vpop.f32.mrb[0].mxu0
        %v4179 = vadd.f32 0.0, %v4178
        %v4180 = vpop.f32.mrb[0].mxu0
        %v4181 = vpop.f32.mrb[0].mxu0
        %v4182 = vpop.f32.mrb[0].mxu0
        %4183 = vdwg.mxu0
        %v4201 = vrot.slane %v4115, 2
        %v4202 = vrot.slane %v4118, 2
        %v4203 = vsel %vm999, %v4201, %v4202
        %v4204 = vrot.slane %v4123, 2
        %v4205 = vsel %vm999, %v4202, %v4204
        %v4206 = vrot.slane %v4126, 2
        %v4207 = vsel %vm999, %v4204, %v4206
        %v4208 = vrot.slane %v4131, 2
        %v4209 = vsel %vm999, %v4206, %v4208
        %v4210 = vrot.slane %v4134, 2
        %v4211 = vsel %vm999, %v4208, %v4210
        %v4212 = vrot.slane %v4139, 2
        %v4213 = vsel %vm999, %v4210, %v4212
        %v4214 = vrot.slane %v4142, 2
        %v4215 = vsel %vm999, %v4212, %v4214
        %v4216 = vrot.slane %v4147, 2
        %v4217 = vsel %vm999, %v4214, %v4216
        %v4218 = vrot.slane %v4150, 2
        %v4219 = vsel %vm999, %v4216, %v4218
        %v4220 = vrot.slane %v4155, 2
        %v4221 = vsel %vm999, %v4218, %v4220
        %v4222 = vrot.slane %v4158, 2
        %v4223 = vsel %vm999, %v4220, %v4222
        %v4224 = vrot.slane %v4163, 2
        %v4225 = vsel %vm999, %v4222, %v4224
        %v4226 = vrot.slane %v4166, 2
        %v4227 = vsel %vm999, %v4224, %v4226
        %v4228 = vrot.slane %v4171, 2
        %v4229 = vsel %vm999, %v4226, %v4228
        %v4230 = vrot.slane %v4174, 2
        %v4231 = vsel %vm999, %v4228, %v4230
        %v4232 = vrot.slane %v4179, 2
        %v4233 = vsel %vm999, %v4230, %v4232
        %v4250 = vadd.f32 %v4000, %v4203
        %v4251 = vadd.f32 %v4001, %v4205
        %v4252 = vadd.f32 %v4002, %v4207
        %v4253 = vadd.f32 %v4003, %v4209
        %v4254 = vadd.f32 %v4004, %v4211
        %v4255 = vadd.f32 %v4005, %v4213
        %v4256 = vadd.f32 %v4006, %v4215
        %v4257 = vadd.f32 %v4007, %v4217
        %v4258 = vadd.f32 %v4008, %v4219
        %v4259 = vadd.f32 %v4009, %v4221
        %v4260 = vadd.f32 %v4010, %v4223
        %v4261 = vadd.f32 %v4011, %v4225
        %v4262 = vadd.f32 %v4012, %v4227
        %v4263 = vadd.f32 %v4013, %v4229
        %v4264 = vadd.f32 %v4014, %v4231
        %v4265 = vadd.f32 %v4015, %v4233
        %v4266 = vld [vmem:[%s263 + $0x50] sm:$0xf]
        %v4267 = vld [vmem:[%s263 + $0x54] sm:$0xf]
        %v4268 = vld [vmem:[%s263 + $0x58] sm:$0xf]
        %v4269 = vld [vmem:[%s263 + $0x5c] sm:$0xf]
        %v4270 = vld [vmem:[%s263 + $0x60] sm:$0xf]
        %v4271 = vld [vmem:[%s263 + $0x64] sm:$0xf]
        %v4272 = vld [vmem:[%s263 + $0x68] sm:$0xf]
        %v4273 = vld [vmem:[%s263 + $0x6c] sm:$0xf]
        %v4274 = vld [vmem:[%s263 + $0x70] sm:$0xf]
        %v4275 = vld [vmem:[%s263 + $0x74] sm:$0xf]
        %v4276 = vld [vmem:[%s263 + $0x78] sm:$0xf]
        %v4277 = vld [vmem:[%s263 + $0x7c] sm:$0xf]
        %v4278 = vld [vmem:[%s263 + $0x80] sm:$0xf]
        %v4279 = vld [vmem:[%s263 + $0x84] sm:$0xf]
        %v4280 = vld [vmem:[%s263 + $0x88] sm:$0xf]
        %v4281 = vld [vmem:[%s263 + $0x8c] sm:$0xf]
        %v4282 = vld [vmem:[%s263 + $0x90] sm:$0xf]
        %v4283 = vld [vmem:[%s263 + $0x94] sm:$0xf]
        %v4284 = vld [vmem:[%s1841] sm:$0xf]
        %v4285 = vld [vmem:[%s1841 + $0x4] sm:$0xf]
        %v4286 = vld [vmem:[%s1841 + $0x8] sm:$0xf]
        %v4287 = vld [vmem:[%s1841 + $0xc] sm:$0xf]
        %v4288 = vld [vmem:[%s1841 + $0x10] sm:$0xf]
        %v4289 = vld [vmem:[%s1841 + $0x14] sm:$0xf]
        %v4290 = vld [vmem:[%s1841 + $0x18] sm:$0xf]
        %v4291 = vld [vmem:[%s1841 + $0x1c] sm:$0xf]
        %v4292 = vld [vmem:[%s1841 + $0x20] sm:$0xf]
        %v4293 = vld [vmem:[%s1841 + $0x24] sm:$0xf]
        %v4294 = vld [vmem:[%s1841 + $0x28] sm:$0xf]
        %v4295 = vld [vmem:[%s1841 + $0x2c] sm:$0xf]
        %v4296 = vld [vmem:[%s1841 + $0x30] sm:$0xf]
        %v4297 = vld [vmem:[%s1841 + $0x34] sm:$0xf]
        %v4298 = vld [vmem:[%s1841 + $0x38] sm:$0xf]
        %v4299 = vld [vmem:[%s1841 + $0x3c] sm:$0xf]
        %v4318 = vunpack.c.l.b16 %v4266
        %v4319 = vunpack.c.l.b16 %v4267
        %v4320 = vunpack.c.l.b16 %v4268
        %v4321 = vunpack.c.l.b16 %v4269
        %v4322 = vunpack.c.l.b16 %v4270
        %v4323 = vunpack.c.l.b16 %v4271
        %v4324 = vunpack.c.l.b16 %v4272
        %v4325 = vunpack.c.l.b16 %v4273
        %v4326 = vunpack.c.l.b16 %v4274
        %v4327 = vunpack.c.l.b16 %v4275
        %v4328 = vunpack.c.l.b16 %v4276
        %v4329 = vunpack.c.l.b16 %v4277
        %v4330 = vunpack.c.l.b16 %v4278
        %v4331 = vunpack.c.l.b16 %v4279
        %v4332 = vunpack.c.l.b16 %v4280
        %v4333 = vunpack.c.l.b16 %v4281
        %v4334 = vunpack.c.l.b16 %v4282
        %v4335 = vunpack.c.l.b16 %v4283
        %v4336 = vpack.c.b16 %v4319, %v4318
        %v4337 = vpack.c.b16 %v4321, %v4320
        %v4338 = vpack.c.b16 %v4323, %v4322
        %v4339 = vpack.c.b16 %v4325, %v4324
        %v4340 = vpack.c.b16 %v4327, %v4326
        %v4341 = vpack.c.b16 %v4329, %v4328
        %v4342 = vpack.c.b16 %v4331, %v4330
        %v4343 = vpack.c.b16 %v4333, %v4332
        %v4344 = vpack.c.b16 %v4335, %v4334
        %v4370 = vunpack.c.l.b16 %v4284
        %v4371 = vunpack.c.l.b16 %v4285
        %v4372 = vunpack.c.l.b16 %v4286
        %v4373 = vunpack.c.l.b16 %v4287
        %v4374 = vunpack.c.l.b16 %v4288
        %v4375 = vunpack.c.l.b16 %v4289
        %v4376 = vunpack.c.l.b16 %v4290
        %v4377 = vunpack.c.l.b16 %v4291
        %v4378 = vunpack.c.l.b16 %v4292
        %v4379 = vunpack.c.l.b16 %v4293
        %v4380 = vunpack.c.l.b16 %v4294
        %v4381 = vunpack.c.l.b16 %v4295
        %v4382 = vunpack.c.l.b16 %v4296
        %v4383 = vunpack.c.l.b16 %v4297
        %v4384 = vunpack.c.l.b16 %v4298
        %v4385 = vunpack.c.l.b16 %v4299
        %v4386 = vpack.c.b16 %v4371, %v4370
        %v4387 = vpack.c.b16 %v4373, %v4372
        %v4388 = vpack.c.b16 %v4375, %v4374
        %v4389 = vpack.c.b16 %v4377, %v4376
        %v4390 = vpack.c.b16 %v4379, %v4378
        %v4391 = vpack.c.b16 %v4381, %v4380
        %v4392 = vpack.c.b16 %v4383, %v4382
        %v4393 = vpack.c.b16 %v4385, %v4384
        %4402 = vmatprep.subr.bf16.mxu0 0
        %4403 = vmatpush1.bf16.msra.mxu0 %v4386
        %4404 = vmatprep.subr.bf16.mxu0 0
        %4405 = vmatpush1.bf16.msra.mxu0 %v4387
        %4406 = vmatprep.subr.bf16.mxu0 0
        %4407 = vmatpush1.bf16.msra.mxu0 %v4388
        %4408 = vmatprep.subr.bf16.mxu0 0
        %4409 = vmatpush1.bf16.msra.mxu0 %v4389
        %4410 = vmatprep.subr.bf16.mxu0 0
        %4411 = vmatpush1.bf16.msra.mxu0 %v4390
        %4412 = vmatprep.subr.bf16.mxu0 0
        %4413 = vmatpush1.bf16.msra.mxu0 %v4391
        %4414 = vmatprep.subr.bf16.mxu0 0
        %4415 = vmatpush1.bf16.msra.mxu0 %v4392
        %4416 = vmatprep.subr.bf16.mxu0 0
        %4417 = vmatpush1.bf16.msra.mxu0 %v4393
        %4418 = vmatprep.subr.bf16.mxu0 0
        %4419 = vmatpush1.bf16.msra.mxu0 0
        %4420 = vmatprep.subr.bf16.mxu0 0
        %4421 = vmatpush1.bf16.msra.mxu0 0
        %4422 = vmatprep.subr.bf16.mxu0 0
        %4423 = vmatpush1.bf16.msra.mxu0 0
        %4424 = vmatprep.subr.bf16.mxu0 0
        %4425 = vmatpush1.bf16.msra.mxu0 0
        %4426 = vmatprep.subr.bf16.mxu0 0
        %4427 = vmatpush1.bf16.msra.mxu0 0
        %4428 = vmatprep.subr.bf16.mxu0 0
        %4429 = vmatpush1.bf16.msra.mxu0 0
        %4430 = vmatprep.subr.bf16.mxu0 0
        %4431 = vmatpush1.bf16.msra.mxu0 0
        %4432 = vmatprep.subr.bf16.mxu0 0
        %4433 = vmatpush1.bf16.msra.mxu0 0
        %4434 = vmatprep.mubr.bf16.mxu0 0
        %4435 = vmatmul.mubr.bf16.gmra.mrb[0].mxu0 %v4336
        %v4436 = vpop.f32.mrb[0].mxu0
        %v4437 = vadd.f32 0.0, %v4436
        %v4438 = vpop.f32.mrb[0].mxu0
        %v4439 = vpop.f32.mrb[0].mxu0
        %v4440 = vadd.f32 0.0, %v4439
        %v4441 = vpop.f32.mrb[0].mxu0
        %4442 = vmatprep.mubr.bf16.mxu0 0
        %4443 = vmatmul.mubr.bf16.gmra.mrb[0].mxu0 %v4337
        %v4444 = vpop.f32.mrb[0].mxu0
        %v4445 = vadd.f32 0.0, %v4444
        %v4446 = vpop.f32.mrb[0].mxu0
        %v4447 = vpop.f32.mrb[0].mxu0
        %v4448 = vadd.f32 0.0, %v4447
        %v4449 = vpop.f32.mrb[0].mxu0
        %4450 = vmatprep.mubr.bf16.mxu0 0
        %4451 = vmatmul.mubr.bf16.gmra.mrb[0].mxu0 %v4338
        %v4452 = vpop.f32.mrb[0].mxu0
        %v4453 = vadd.f32 0.0, %v4452
        %v4454 = vpop.f32.mrb[0].mxu0
        %v4455 = vpop.f32.mrb[0].mxu0
        %v4456 = vadd.f32 0.0, %v4455
        %v4457 = vpop.f32.mrb[0].mxu0
        %4458 = vmatprep.mubr.bf16.mxu0 0
        %4459 = vmatmul.mubr.bf16.gmra.mrb[0].mxu0 %v4339
        %v4460 = vpop.f32.mrb[0].mxu0
        %v4461 = vadd.f32 0.0, %v4460
        %v4462 = vpop.f32.mrb[0].mxu0
        %v4463 = vpop.f32.mrb[0].mxu0
        %v4464 = vadd.f32 0.0, %v4463
        %v4465 = vpop.f32.mrb[0].mxu0
        %4466 = vmatprep.mubr.bf16.mxu0 0
        %4467 = vmatmul.mubr.bf16.gmra.mrb[0].mxu0 %v4340
        %v4468 = vpop.f32.mrb[0].mxu0
        %v4469 = vadd.f32 0.0, %v4468
        %v4470 = vpop.f32.mrb[0].mxu0
        %v4471 = vpop.f32.mrb[0].mxu0
        %v4472 = vadd.f32 0.0, %v4471
        %v4473 = vpop.f32.mrb[0].mxu0
        %4474 = vmatprep.mubr.bf16.mxu0 0
        %4475 = vmatmul.mubr.bf16.gmra.mrb[0].mxu0 %v4341
        %v4476 = vpop.f32.mrb[0].mxu0
        %v4477 = vadd.f32 0.0, %v4476
        %v4478 = vpop.f32.mrb[0].mxu0
        %v4479 = vpop.f32.mrb[0].mxu0
        %v4480 = vadd.f32 0.0, %v4479
        %v4481 = vpop.f32.mrb[0].mxu0
        %4482 = vmatprep.mubr.bf16.mxu0 0
        %4483 = vmatmul.mubr.bf16.gmra.mrb[0].mxu0 %v4342
        %v4484 = vpop.f32.mrb[0].mxu0
        %v4485 = vadd.f32 0.0, %v4484
        %v4486 = vpop.f32.mrb[0].mxu0
        %v4487 = vpop.f32.mrb[0].mxu0
        %v4488 = vadd.f32 0.0, %v4487
        %v4489 = vpop.f32.mrb[0].mxu0
        %4490 = vmatprep.mubr.bf16.mxu0 0
        %4491 = vmatmul.mubr.bf16.gmra.mrb[0].mxu0 %v4343
        %v4492 = vpop.f32.mrb[0].mxu0
        %v4493 = vadd.f32 0.0, %v4492
        %v4494 = vpop.f32.mrb[0].mxu0
        %v4495 = vpop.f32.mrb[0].mxu0
        %v4496 = vadd.f32 0.0, %v4495
        %v4497 = vpop.f32.mrb[0].mxu0
        %4498 = vmatprep.mubr.bf16.mxu0 0
        %4499 = vmatmul.mubr.bf16.gmra.mrb[0].mxu0 %v4344
        %v4500 = vpop.f32.mrb[0].mxu0
        %v4501 = vpop.f32.mrb[0].mxu0
        %v4502 = vpop.f32.mrb[0].mxu0
        %v4503 = vpop.f32.mrb[0].mxu0
        %4504 = vdwg.mxu0
        %v4505 = vadd.f32 %v4250, %v4437
        %v4506 = vadd.f32 %v4251, %v4440
        %v4507 = vadd.f32 %v4252, %v4445
        %v4508 = vadd.f32 %v4253, %v4448
        %v4509 = vadd.f32 %v4254, %v4453
        %v4510 = vadd.f32 %v4255, %v4456
        %v4511 = vadd.f32 %v4256, %v4461
        %v4512 = vadd.f32 %v4257, %v4464
        %v4513 = vadd.f32 %v4258, %v4469
        %v4514 = vadd.f32 %v4259, %v4472
        %v4515 = vadd.f32 %v4260, %v4477
        %v4516 = vadd.f32 %v4261, %v4480
        %v4517 = vadd.f32 %v4262, %v4485
        %v4518 = vadd.f32 %v4263, %v4488
        %v4519 = vadd.f32 %v4264, %v4493
        %v4520 = vadd.f32 %v4265, %v4496
        %v4521 = vld [vmem:[%s2079] sm:$0xf]
        %v4522 = vld [vmem:[%s2079 + $0x4] sm:$0xf]
        %v4523 = vld [vmem:[%s2079 + $0x8] sm:$0xf]
        %v4524 = vld [vmem:[%s2079 + $0xc] sm:$0xf]
        %v4525 = vld [vmem:[%s2079 + $0x10] sm:$0xf]
        %v4526 = vld [vmem:[%s2079 + $0x14] sm:$0xf]
        %v4527 = vld [vmem:[%s2079 + $0x18] sm:$0xf]
        %v4528 = vld [vmem:[%s2079 + $0x1c] sm:$0xf]
        %v4529 = vld [vmem:[%s2079 + $0x20] sm:$0xf]
        %v4530 = vld [vmem:[%s2079 + $0x24] sm:$0xf]
        %v4531 = vld [vmem:[%s2079 + $0x28] sm:$0xf]
        %v4532 = vld [vmem:[%s2079 + $0x2c] sm:$0xf]
        %v4533 = vld [vmem:[%s2079 + $0x30] sm:$0xf]
        %v4534 = vld [vmem:[%s2079 + $0x34] sm:$0xf]
        %v4535 = vld [vmem:[%s2079 + $0x38] sm:$0xf]
        %v4536 = vld [vmem:[%s2079 + $0x3c] sm:$0xf]
        %v4553 = vunpack.c.l.b16 %v4521
        %v4554 = vunpack.c.l.b16 %v4522
        %v4555 = vunpack.c.l.b16 %v4523
        %v4556 = vunpack.c.l.b16 %v4524
        %v4557 = vunpack.c.l.b16 %v4525
        %v4558 = vunpack.c.l.b16 %v4526
        %v4559 = vunpack.c.l.b16 %v4527
        %v4560 = vunpack.c.l.b16 %v4528
        %v4561 = vunpack.c.l.b16 %v4529
        %v4562 = vunpack.c.l.b16 %v4530
        %v4563 = vunpack.c.l.b16 %v4531
        %v4564 = vunpack.c.l.b16 %v4532
        %v4565 = vunpack.c.l.b16 %v4533
        %v4566 = vunpack.c.l.b16 %v4534
        %v4567 = vunpack.c.l.b16 %v4535
        %v4568 = vunpack.c.l.b16 %v4536
        %v4569 = vpack.c.b16 %v4554, %v4553
        %v4570 = vpack.c.b16 %v4556, %v4555
        %v4571 = vpack.c.b16 %v4558, %v4557
        %v4572 = vpack.c.b16 %v4560, %v4559
        %v4573 = vpack.c.b16 %v4562, %v4561
        %v4574 = vpack.c.b16 %v4564, %v4563
        %v4575 = vpack.c.b16 %v4566, %v4565
        %v4576 = vpack.c.b16 %v4568, %v4567
        %4585 = vmatprep.subr.bf16.mxu0 0
        %4586 = vmatpush1.bf16.msra.mxu0 %v4569
        %4587 = vmatprep.subr.bf16.mxu0 0
        %4588 = vmatpush1.bf16.msra.mxu0 %v4570
        %4589 = vmatprep.subr.bf16.mxu0 0
        %4590 = vmatpush1.bf16.msra.mxu0 %v4571
        %4591 = vmatprep.subr.bf16.mxu0 0
        %4592 = vmatpush1.bf16.msra.mxu0 %v4572
        %4593 = vmatprep.subr.bf16.mxu0 0
        %4594 = vmatpush1.bf16.msra.mxu0 %v4573
        %4595 = vmatprep.subr.bf16.mxu0 0
        %4596 = vmatpush1.bf16.msra.mxu0 %v4574
        %4597 = vmatprep.subr.bf16.mxu0 0
        %4598 = vmatpush1.bf16.msra.mxu0 %v4575
        %4599 = vmatprep.subr.bf16.mxu0 0
        %4600 = vmatpush1.bf16.msra.mxu0 %v4576
        %4601 = vmatprep.subr.bf16.mxu0 0
        %4602 = vmatpush1.bf16.msra.mxu0 0
        %4603 = vmatprep.subr.bf16.mxu0 0
        %4604 = vmatpush1.bf16.msra.mxu0 0
        %4605 = vmatprep.subr.bf16.mxu0 0
        %4606 = vmatpush1.bf16.msra.mxu0 0
        %4607 = vmatprep.subr.bf16.mxu0 0
        %4608 = vmatpush1.bf16.msra.mxu0 0
        %4609 = vmatprep.subr.bf16.mxu0 0
        %4610 = vmatpush1.bf16.msra.mxu0 0
        %4611 = vmatprep.subr.bf16.mxu0 0
        %4612 = vmatpush1.bf16.msra.mxu0 0
        %4613 = vmatprep.subr.bf16.mxu0 0
        %4614 = vmatpush1.bf16.msra.mxu0 0
        %4615 = vmatprep.subr.bf16.mxu0 0
        %4616 = vmatpush1.bf16.msra.mxu0 0
        %4617 = vmatprep.mubr.bf16.mxu0 0
        %4618 = vmatmul.mubr.bf16.gmra.mrb[0].mxu0 %v4336
        %v4619 = vpop.f32.mrb[0].mxu0
        %v4620 = vadd.f32 0.0, %v4619
        %v4621 = vpop.f32.mrb[0].mxu0
        %v4622 = vpop.f32.mrb[0].mxu0
        %v4623 = vadd.f32 0.0, %v4622
        %v4624 = vpop.f32.mrb[0].mxu0
        %4625 = vmatprep.mubr.bf16.mxu0 0
        %4626 = vmatmul.mubr.bf16.gmra.mrb[0].mxu0 %v4337
        %v4627 = vpop.f32.mrb[0].mxu0
        %v4628 = vadd.f32 0.0, %v4627
        %v4629 = vpop.f32.mrb[0].mxu0
        %v4630 = vpop.f32.mrb[0].mxu0
        %v4631 = vadd.f32 0.0, %v4630
        %v4632 = vpop.f32.mrb[0].mxu0
        %4633 = vmatprep.mubr.bf16.mxu0 0
        %4634 = vmatmul.mubr.bf16.gmra.mrb[0].mxu0 %v4338
        %v4635 = vpop.f32.mrb[0].mxu0
        %v4636 = vadd.f32 0.0, %v4635
        %v4637 = vpop.f32.mrb[0].mxu0
        %v4638 = vpop.f32.mrb[0].mxu0
        %v4639 = vadd.f32 0.0, %v4638
        %v4640 = vpop.f32.mrb[0].mxu0
        %4641 = vmatprep.mubr.bf16.mxu0 0
        %4642 = vmatmul.mubr.bf16.gmra.mrb[0].mxu0 %v4339
        %v4643 = vpop.f32.mrb[0].mxu0
        %v4644 = vadd.f32 0.0, %v4643
        %v4645 = vpop.f32.mrb[0].mxu0
        %v4646 = vpop.f32.mrb[0].mxu0
        %v4647 = vadd.f32 0.0, %v4646
        %v4648 = vpop.f32.mrb[0].mxu0
        %4649 = vmatprep.mubr.bf16.mxu0 0
        %4650 = vmatmul.mubr.bf16.gmra.mrb[0].mxu0 %v4340
        %v4651 = vpop.f32.mrb[0].mxu0
        %v4652 = vadd.f32 0.0, %v4651
        %v4653 = vpop.f32.mrb[0].mxu0
        %v4654 = vpop.f32.mrb[0].mxu0
        %v4655 = vadd.f32 0.0, %v4654
        %v4656 = vpop.f32.mrb[0].mxu0
        %4657 = vmatprep.mubr.bf16.mxu0 0
        %4658 = vmatmul.mubr.bf16.gmra.mrb[0].mxu0 %v4341
        %v4659 = vpop.f32.mrb[0].mxu0
        %v4660 = vadd.f32 0.0, %v4659
        %v4661 = vpop.f32.mrb[0].mxu0
        %v4662 = vpop.f32.mrb[0].mxu0
        %v4663 = vadd.f32 0.0, %v4662
        %v4664 = vpop.f32.mrb[0].mxu0
        %4665 = vmatprep.mubr.bf16.mxu0 0
        %4666 = vmatmul.mubr.bf16.gmra.mrb[0].mxu0 %v4342
        %v4667 = vpop.f32.mrb[0].mxu0
        %v4668 = vadd.f32 0.0, %v4667
        %v4669 = vpop.f32.mrb[0].mxu0
        %v4670 = vpop.f32.mrb[0].mxu0
        %v4671 = vadd.f32 0.0, %v4670
        %v4672 = vpop.f32.mrb[0].mxu0
        %4673 = vmatprep.mubr.bf16.mxu0 0
        %4674 = vmatmul.mubr.bf16.gmra.mrb[0].mxu0 %v4343
        %v4675 = vpop.f32.mrb[0].mxu0
        %v4676 = vadd.f32 0.0, %v4675
        %v4677 = vpop.f32.mrb[0].mxu0
        %v4678 = vpop.f32.mrb[0].mxu0
        %v4679 = vadd.f32 0.0, %v4678
        %v4680 = vpop.f32.mrb[0].mxu0
        %4681 = vmatprep.mubr.bf16.mxu0 0
        %4682 = vmatmul.mubr.bf16.gmra.mrb[0].mxu0 %v4344
        %v4683 = vpop.f32.mrb[0].mxu0
        %v4684 = vadd.f32 0.0, %v4683
        %v4685 = vpop.f32.mrb[0].mxu0
        %v4686 = vpop.f32.mrb[0].mxu0
        %v4687 = vpop.f32.mrb[0].mxu0
        %4688 = vdwg.mxu0
        %v4706 = vrot.slane %v4620, 1
        %v4707 = vrot.slane %v4623, 1
        %v4708 = vsel %vm747, %v4706, %v4707
        %v4709 = vrot.slane %v4628, 1
        %v4710 = vsel %vm747, %v4707, %v4709
        %v4711 = vrot.slane %v4631, 1
        %v4712 = vsel %vm747, %v4709, %v4711
        %v4713 = vrot.slane %v4636, 1
        %v4714 = vsel %vm747, %v4711, %v4713
        %v4715 = vrot.slane %v4639, 1
        %v4716 = vsel %vm747, %v4713, %v4715
        %v4717 = vrot.slane %v4644, 1
        %v4718 = vsel %vm747, %v4715, %v4717
        %v4719 = vrot.slane %v4647, 1
        %v4720 = vsel %vm747, %v4717, %v4719
        %v4721 = vrot.slane %v4652, 1
        %v4722 = vsel %vm747, %v4719, %v4721
        %v4723 = vrot.slane %v4655, 1
        %v4724 = vsel %vm747, %v4721, %v4723
        %v4725 = vrot.slane %v4660, 1
        %v4726 = vsel %vm747, %v4723, %v4725
        %v4727 = vrot.slane %v4663, 1
        %v4728 = vsel %vm747, %v4725, %v4727
        %v4729 = vrot.slane %v4668, 1
        %v4730 = vsel %vm747, %v4727, %v4729
        %v4731 = vrot.slane %v4671, 1
        %v4732 = vsel %vm747, %v4729, %v4731
        %v4733 = vrot.slane %v4676, 1
        %v4734 = vsel %vm747, %v4731, %v4733
        %v4735 = vrot.slane %v4679, 1
        %v4736 = vsel %vm747, %v4733, %v4735
        %v4737 = vrot.slane %v4684, 1
        %v4738 = vsel %vm747, %v4735, %v4737
        %v4755 = vadd.f32 %v4505, %v4708
        %v4756 = vadd.f32 %v4506, %v4710
        %v4757 = vadd.f32 %v4507, %v4712
        %v4758 = vadd.f32 %v4508, %v4714
        %v4759 = vadd.f32 %v4509, %v4716
        %v4760 = vadd.f32 %v4510, %v4718
        %v4761 = vadd.f32 %v4511, %v4720
        %v4762 = vadd.f32 %v4512, %v4722
        %v4763 = vadd.f32 %v4513, %v4724
        %v4764 = vadd.f32 %v4514, %v4726
        %v4765 = vadd.f32 %v4515, %v4728
        %v4766 = vadd.f32 %v4516, %v4730
        %v4767 = vadd.f32 %v4517, %v4732
        %v4768 = vadd.f32 %v4518, %v4734
        %v4769 = vadd.f32 %v4519, %v4736
        %v4770 = vadd.f32 %v4520, %v4738
        %v4771 = vld [vmem:[%s2330] sm:$0xf]
        %v4772 = vld [vmem:[%s2330 + $0x4] sm:$0xf]
        %v4773 = vld [vmem:[%s2330 + $0x8] sm:$0xf]
        %v4774 = vld [vmem:[%s2330 + $0xc] sm:$0xf]
        %v4775 = vld [vmem:[%s2330 + $0x10] sm:$0xf]
        %v4776 = vld [vmem:[%s2330 + $0x14] sm:$0xf]
        %v4777 = vld [vmem:[%s2330 + $0x18] sm:$0xf]
        %v4778 = vld [vmem:[%s2330 + $0x1c] sm:$0xf]
        %v4779 = vld [vmem:[%s2330 + $0x20] sm:$0xf]
        %v4780 = vld [vmem:[%s2330 + $0x24] sm:$0xf]
        %v4781 = vld [vmem:[%s2330 + $0x28] sm:$0xf]
        %v4782 = vld [vmem:[%s2330 + $0x2c] sm:$0xf]
        %v4783 = vld [vmem:[%s2330 + $0x30] sm:$0xf]
        %v4784 = vld [vmem:[%s2330 + $0x34] sm:$0xf]
        %v4785 = vld [vmem:[%s2330 + $0x38] sm:$0xf]
        %v4786 = vld [vmem:[%s2330 + $0x3c] sm:$0xf]
        %v4803 = vunpack.c.l.b16 %v4771
        %v4804 = vunpack.c.l.b16 %v4772
        %v4805 = vunpack.c.l.b16 %v4773
        %v4806 = vunpack.c.l.b16 %v4774
        %v4807 = vunpack.c.l.b16 %v4775
        %v4808 = vunpack.c.l.b16 %v4776
        %v4809 = vunpack.c.l.b16 %v4777
        %v4810 = vunpack.c.l.b16 %v4778
        %v4811 = vunpack.c.l.b16 %v4779
        %v4812 = vunpack.c.l.b16 %v4780
        %v4813 = vunpack.c.l.b16 %v4781
        %v4814 = vunpack.c.l.b16 %v4782
        %v4815 = vunpack.c.l.b16 %v4783
        %v4816 = vunpack.c.l.b16 %v4784
        %v4817 = vunpack.c.l.b16 %v4785
        %v4818 = vunpack.c.l.b16 %v4786
        %v4819 = vpack.c.b16 %v4804, %v4803
        %v4820 = vpack.c.b16 %v4806, %v4805
        %v4821 = vpack.c.b16 %v4808, %v4807
        %v4822 = vpack.c.b16 %v4810, %v4809
        %v4823 = vpack.c.b16 %v4812, %v4811
        %v4824 = vpack.c.b16 %v4814, %v4813
        %v4825 = vpack.c.b16 %v4816, %v4815
        %v4826 = vpack.c.b16 %v4818, %v4817
        %4835 = vmatprep.subr.bf16.mxu0 0
        %4836 = vmatpush1.bf16.msra.mxu0 %v4819
        %4837 = vmatprep.subr.bf16.mxu0 0
        %4838 = vmatpush1.bf16.msra.mxu0 %v4820
        %4839 = vmatprep.subr.bf16.mxu0 0
        %4840 = vmatpush1.bf16.msra.mxu0 %v4821
        %4841 = vmatprep.subr.bf16.mxu0 0
        %4842 = vmatpush1.bf16.msra.mxu0 %v4822
        %4843 = vmatprep.subr.bf16.mxu0 0
        %4844 = vmatpush1.bf16.msra.mxu0 %v4823
        %4845 = vmatprep.subr.bf16.mxu0 0
        %4846 = vmatpush1.bf16.msra.mxu0 %v4824
        %4847 = vmatprep.subr.bf16.mxu0 0
        %4848 = vmatpush1.bf16.msra.mxu0 %v4825
        %4849 = vmatprep.subr.bf16.mxu0 0
        %4850 = vmatpush1.bf16.msra.mxu0 %v4826
        %4851 = vmatprep.subr.bf16.mxu0 0
        %4852 = vmatpush1.bf16.msra.mxu0 0
        %4853 = vmatprep.subr.bf16.mxu0 0
        %4854 = vmatpush1.bf16.msra.mxu0 0
        %4855 = vmatprep.subr.bf16.mxu0 0
        %4856 = vmatpush1.bf16.msra.mxu0 0
        %4857 = vmatprep.subr.bf16.mxu0 0
        %4858 = vmatpush1.bf16.msra.mxu0 0
        %4859 = vmatprep.subr.bf16.mxu0 0
        %4860 = vmatpush1.bf16.msra.mxu0 0
        %4861 = vmatprep.subr.bf16.mxu0 0
        %4862 = vmatpush1.bf16.msra.mxu0 0
        %4863 = vmatprep.subr.bf16.mxu0 0
        %4864 = vmatpush1.bf16.msra.mxu0 0
        %4865 = vmatprep.subr.bf16.mxu0 0
        %4866 = vmatpush1.bf16.msra.mxu0 0
        %4867 = vmatprep.mubr.bf16.mxu0 0
        %4868 = vmatmul.mubr.bf16.gmra.mrb[0].mxu0 %v4336
        %v4869 = vpop.f32.mrb[0].mxu0
        %v4870 = vadd.f32 0.0, %v4869
        %v4871 = vpop.f32.mrb[0].mxu0
        %v4872 = vpop.f32.mrb[0].mxu0
        %v4873 = vadd.f32 0.0, %v4872
        %v4874 = vpop.f32.mrb[0].mxu0
        %4875 = vmatprep.mubr.bf16.mxu0 0
        %4876 = vmatmul.mubr.bf16.gmra.mrb[0].mxu0 %v4337
        %v4877 = vpop.f32.mrb[0].mxu0
        %v4878 = vadd.f32 0.0, %v4877
        %v4879 = vpop.f32.mrb[0].mxu0
        %v4880 = vpop.f32.mrb[0].mxu0
        %v4881 = vadd.f32 0.0, %v4880
        %v4882 = vpop.f32.mrb[0].mxu0
        %4883 = vmatprep.mubr.bf16.mxu0 0
        %4884 = vmatmul.mubr.bf16.gmra.mrb[0].mxu0 %v4338
        %v4885 = vpop.f32.mrb[0].mxu0
        %v4886 = vadd.f32 0.0, %v4885
        %v4887 = vpop.f32.mrb[0].mxu0
        %v4888 = vpop.f32.mrb[0].mxu0
        %v4889 = vadd.f32 0.0, %v4888
        %v4890 = vpop.f32.mrb[0].mxu0
        %4891 = vmatprep.mubr.bf16.mxu0 0
        %4892 = vmatmul.mubr.bf16.gmra.mrb[0].mxu0 %v4339
        %v4893 = vpop.f32.mrb[0].mxu0
        %v4894 = vadd.f32 0.0, %v4893
        %v4895 = vpop.f32.mrb[0].mxu0
        %v4896 = vpop.f32.mrb[0].mxu0
        %v4897 = vadd.f32 0.0, %v4896
        %v4898 = vpop.f32.mrb[0].mxu0
        %4899 = vmatprep.mubr.bf16.mxu0 0
        %4900 = vmatmul.mubr.bf16.gmra.mrb[0].mxu0 %v4340
        %v4901 = vpop.f32.mrb[0].mxu0
        %v4902 = vadd.f32 0.0, %v4901
        %v4903 = vpop.f32.mrb[0].mxu0
        %v4904 = vpop.f32.mrb[0].mxu0
        %v4905 = vadd.f32 0.0, %v4904
        %v4906 = vpop.f32.mrb[0].mxu0
        %4907 = vmatprep.mubr.bf16.mxu0 0
        %4908 = vmatmul.mubr.bf16.gmra.mrb[0].mxu0 %v4341
        %v4909 = vpop.f32.mrb[0].mxu0
        %v4910 = vadd.f32 0.0, %v4909
        %v4911 = vpop.f32.mrb[0].mxu0
        %v4912 = vpop.f32.mrb[0].mxu0
        %v4913 = vadd.f32 0.0, %v4912
        %v4914 = vpop.f32.mrb[0].mxu0
        %4915 = vmatprep.mubr.bf16.mxu0 0
        %4916 = vmatmul.mubr.bf16.gmra.mrb[0].mxu0 %v4342
        %v4917 = vpop.f32.mrb[0].mxu0
        %v4918 = vadd.f32 0.0, %v4917
        %v4919 = vpop.f32.mrb[0].mxu0
        %v4920 = vpop.f32.mrb[0].mxu0
        %v4921 = vadd.f32 0.0, %v4920
        %v4922 = vpop.f32.mrb[0].mxu0
        %4923 = vmatprep.mubr.bf16.mxu0 0
        %4924 = vmatmul.mubr.bf16.gmra.mrb[0].mxu0 %v4343
        %v4925 = vpop.f32.mrb[0].mxu0
        %v4926 = vadd.f32 0.0, %v4925
        %v4927 = vpop.f32.mrb[0].mxu0
        %v4928 = vpop.f32.mrb[0].mxu0
        %v4929 = vadd.f32 0.0, %v4928
        %v4930 = vpop.f32.mrb[0].mxu0
        %4931 = vmatprep.mubr.bf16.mxu0 0
        %4932 = vmatmul.mubr.bf16.gmra.mrb[0].mxu0 %v4344
        %v4933 = vpop.f32.mrb[0].mxu0
        %v4934 = vadd.f32 0.0, %v4933
        %v4935 = vpop.f32.mrb[0].mxu0
        %v4936 = vpop.f32.mrb[0].mxu0
        %v4937 = vpop.f32.mrb[0].mxu0
        %4938 = vdwg.mxu0
        %v4956 = vrot.slane %v4870, 2
        %v4957 = vrot.slane %v4873, 2
        %v4958 = vsel %vm999, %v4956, %v4957
        %v4959 = vrot.slane %v4878, 2
        %v4960 = vsel %vm999, %v4957, %v4959
        %v4961 = vrot.slane %v4881, 2
        %v4962 = vsel %vm999, %v4959, %v4961
        %v4963 = vrot.slane %v4886, 2
        %v4964 = vsel %vm999, %v4961, %v4963
        %v4965 = vrot.slane %v4889, 2
        %v4966 = vsel %vm999, %v4963, %v4965
        %v4967 = vrot.slane %v4894, 2
        %v4968 = vsel %vm999, %v4965, %v4967
        %v4969 = vrot.slane %v4897, 2
        %v4970 = vsel %vm999, %v4967, %v4969
        %v4971 = vrot.slane %v4902, 2
        %v4972 = vsel %vm999, %v4969, %v4971
        %v4973 = vrot.slane %v4905, 2
        %v4974 = vsel %vm999, %v4971, %v4973
        %v4975 = vrot.slane %v4910, 2
        %v4976 = vsel %vm999, %v4973, %v4975
        %v4977 = vrot.slane %v4913, 2
        %v4978 = vsel %vm999, %v4975, %v4977
        %v4979 = vrot.slane %v4918, 2
        %v4980 = vsel %vm999, %v4977, %v4979
        %v4981 = vrot.slane %v4921, 2
        %v4982 = vsel %vm999, %v4979, %v4981
        %v4983 = vrot.slane %v4926, 2
        %v4984 = vsel %vm999, %v4981, %v4983
        %v4985 = vrot.slane %v4929, 2
        %v4986 = vsel %vm999, %v4983, %v4985
        %v4987 = vrot.slane %v4934, 2
        %v4988 = vsel %vm999, %v4985, %v4987
        %v5005 = vadd.f32 %v4755, %v4958
        %v5006 = vadd.f32 %v4756, %v4960
        %v5007 = vadd.f32 %v4757, %v4962
        %v5008 = vadd.f32 %v4758, %v4964
        %v5009 = vadd.f32 %v4759, %v4966
        %v5010 = vadd.f32 %v4760, %v4968
        %v5011 = vadd.f32 %v4761, %v4970
        %v5012 = vadd.f32 %v4762, %v4972
        %v5013 = vadd.f32 %v4763, %v4974
        %v5014 = vadd.f32 %v4764, %v4976
        %v5015 = vadd.f32 %v4765, %v4978
        %v5016 = vadd.f32 %v4766, %v4980
        %v5017 = vadd.f32 %v4767, %v4982
        %v5018 = vadd.f32 %v4768, %v4984
        %v5019 = vadd.f32 %v4769, %v4986
        %v5020 = vadd.f32 %v4770, %v4988
        %v5021 = vadd.f32 %v5005, %v2585
        %v5022 = vadd.f32 %v5006, %v2585
        %v5023 = vadd.f32 %v5007, %v2585
        %v5024 = vadd.f32 %v5008, %v2585
        %v5025 = vadd.f32 %v5009, %v2585
        %v5026 = vadd.f32 %v5010, %v2585
        %v5027 = vadd.f32 %v5011, %v2585
        %v5028 = vadd.f32 %v5012, %v2585
        %v5029 = vadd.f32 %v5013, %v2585
        %v5030 = vadd.f32 %v5014, %v2585
        %v5031 = vadd.f32 %v5015, %v2585
        %v5032 = vadd.f32 %v5016, %v2585
        %v5033 = vadd.f32 %v5017, %v2585
        %v5034 = vadd.f32 %v5018, %v2585
        %v5035 = vadd.f32 %v5019, %v2585
        %v5036 = vadd.f32 %v5020, %v2585
        %vm5037 = vcmp.ge.f32.partialorder %v5021, 0.0
        %vm5038 = vcmp.ge.f32.partialorder %v5022, 0.0
        %vm5039 = vcmp.ge.f32.partialorder %v5023, 0.0
        %vm5040 = vcmp.ge.f32.partialorder %v5024, 0.0
        %vm5041 = vcmp.ge.f32.partialorder %v5025, 0.0
        %vm5042 = vcmp.ge.f32.partialorder %v5026, 0.0
        %vm5043 = vcmp.ge.f32.partialorder %v5027, 0.0
        %vm5044 = vcmp.ge.f32.partialorder %v5028, 0.0
        %vm5045 = vcmp.ge.f32.partialorder %v5029, 0.0
        %vm5046 = vcmp.ge.f32.partialorder %v5030, 0.0
        %vm5047 = vcmp.ge.f32.partialorder %v5031, 0.0
        %vm5048 = vcmp.ge.f32.partialorder %v5032, 0.0
        %vm5049 = vcmp.ge.f32.partialorder %v5033, 0.0
        %vm5050 = vcmp.ge.f32.partialorder %v5034, 0.0
        %vm5051 = vcmp.ge.f32.partialorder %v5035, 0.0
        %vm5052 = vcmp.ge.f32.partialorder %v5036, 0.0
        %v5053 = vmul.f32 %v5021, 0.2
        %v5054 = vmul.f32 %v5022, 0.2
        %v5055 = vmul.f32 %v5023, 0.2
        %v5056 = vmul.f32 %v5024, 0.2
        %v5057 = vmul.f32 %v5025, 0.2
        %v5058 = vmul.f32 %v5026, 0.2
        %v5059 = vmul.f32 %v5027, 0.2
        %v5060 = vmul.f32 %v5028, 0.2
        %v5061 = vmul.f32 %v5029, 0.2
        %v5062 = vmul.f32 %v5030, 0.2
        %v5063 = vmul.f32 %v5031, 0.2
        %v5064 = vmul.f32 %v5032, 0.2
        %v5065 = vmul.f32 %v5033, 0.2
        %v5066 = vmul.f32 %v5034, 0.2
        %v5067 = vmul.f32 %v5035, 0.2
        %v5068 = vmul.f32 %v5036, 0.2
        %v5069 = vsel %vm5037, %v5021, %v5053
        %v5070 = vsel %vm5038, %v5022, %v5054
        %v5071 = vsel %vm5039, %v5023, %v5055
        %v5072 = vsel %vm5040, %v5024, %v5056
        %v5073 = vsel %vm5041, %v5025, %v5057
        %v5074 = vsel %vm5042, %v5026, %v5058
        %v5075 = vsel %vm5043, %v5027, %v5059
        %v5076 = vsel %vm5044, %v5028, %v5060
        %v5077 = vsel %vm5045, %v5029, %v5061
        %v5078 = vsel %vm5046, %v5030, %v5062
        %v5079 = vsel %vm5047, %v5031, %v5063
        %v5080 = vsel %vm5048, %v5032, %v5064
        %v5081 = vsel %vm5049, %v5033, %v5065
        %v5082 = vsel %vm5050, %v5034, %v5066
        %v5083 = vsel %vm5051, %v5035, %v5067
        %v5084 = vsel %vm5052, %v5036, %v5068
        %v5085 = vmul.f32 %v5069, %v2655
        %v5086 = vmul.f32 %v5070, %v2655
        %v5087 = vmul.f32 %v5071, %v2655
        %v5088 = vmul.f32 %v5072, %v2655
        %v5089 = vmul.f32 %v5073, %v2655
        %v5090 = vmul.f32 %v5074, %v2655
        %v5091 = vmul.f32 %v5075, %v2655
        %v5092 = vmul.f32 %v5076, %v2655
        %v5093 = vmul.f32 %v5077, %v2655
        %v5094 = vmul.f32 %v5078, %v2655
        %v5095 = vmul.f32 %v5079, %v2655
        %v5096 = vmul.f32 %v5080, %v2655
        %v5097 = vmul.f32 %v5081, %v2655
        %v5098 = vmul.f32 %v5082, %v2655
        %v5099 = vmul.f32 %v5083, %v2655
        %v5100 = vmul.f32 %v5084, %v2655
        %v5101 = vsel %vm2673, %v5085, 0.0
        %5102 = vadd.xlane.f32.xlu0 %v5101
        %v5103 = vpop.xlane.xlu0 %5102
        %v5104 = vsel %vm2673, %v5086, 0.0
        %5105 = vadd.xlane.f32.xlu0 %v5104
        %v5106 = vpop.xlane.xlu0 %5105
        %v5107 = vsel %vm2673, %v5087, 0.0
        %5108 = vadd.xlane.f32.xlu0 %v5107
        %v5109 = vpop.xlane.xlu0 %5108
        %v5110 = vsel %vm2673, %v5088, 0.0
        %5111 = vadd.xlane.f32.xlu0 %v5110
        %v5112 = vpop.xlane.xlu0 %5111
        %v5113 = vsel %vm2673, %v5089, 0.0
        %5114 = vadd.xlane.f32.xlu0 %v5113
        %v5115 = vpop.xlane.xlu0 %5114
        %v5116 = vsel %vm2673, %v5090, 0.0
        %5117 = vadd.xlane.f32.xlu0 %v5116
        %v5118 = vpop.xlane.xlu0 %5117
        %v5119 = vsel %vm2673, %v5091, 0.0
        %5120 = vadd.xlane.f32.xlu0 %v5119
        %v5121 = vpop.xlane.xlu0 %5120
        %v5122 = vsel %vm2673, %v5092, 0.0
        %5123 = vadd.xlane.f32.xlu0 %v5122
        %v5124 = vpop.xlane.xlu0 %5123
        %v5125 = vsel %vm2673, %v5093, 0.0
        %5126 = vadd.xlane.f32.xlu0 %v5125
        %v5127 = vpop.xlane.xlu0 %5126
        %v5128 = vsel %vm2673, %v5094, 0.0
        %5129 = vadd.xlane.f32.xlu0 %v5128
        %v5130 = vpop.xlane.xlu0 %5129
        %v5131 = vsel %vm2673, %v5095, 0.0
        %5132 = vadd.xlane.f32.xlu0 %v5131
        %v5133 = vpop.xlane.xlu0 %5132
        %v5134 = vsel %vm2673, %v5096, 0.0
        %5135 = vadd.xlane.f32.xlu0 %v5134
        %v5136 = vpop.xlane.xlu0 %5135
        %v5137 = vsel %vm2673, %v5097, 0.0
        %5138 = vadd.xlane.f32.xlu0 %v5137
        %v5139 = vpop.xlane.xlu0 %5138
        %v5140 = vsel %vm2673, %v5098, 0.0
        %5141 = vadd.xlane.f32.xlu0 %v5140
        %v5142 = vpop.xlane.xlu0 %5141
        %v5143 = vsel %vm2673, %v5099, 0.0
        %5144 = vadd.xlane.f32.xlu0 %v5143
        %v5145 = vpop.xlane.xlu0 %5144
        %v5146 = vsel %vm2673, %v5100, 0.0
        %5147 = vadd.xlane.f32.xlu0 %v5146
        %v5148 = vpop.xlane.xlu0 %5147
        %v5149 = vadd.f32 %v5103, %v2722
        %v5150 = vadd.f32 %v5106, %v2722
        %v5151 = vadd.f32 %v5109, %v2722
        %v5152 = vadd.f32 %v5112, %v2722
        %v5153 = vadd.f32 %v5115, %v2722
        %v5154 = vadd.f32 %v5118, %v2722
        %v5155 = vadd.f32 %v5121, %v2722
        %v5156 = vadd.f32 %v5124, %v2722
        %v5157 = vadd.f32 %v5127, %v2722
        %v5158 = vadd.f32 %v5130, %v2722
        %v5159 = vadd.f32 %v5133, %v2722
        %v5160 = vadd.f32 %v5136, %v2722
        %v5161 = vadd.f32 %v5139, %v2722
        %v5162 = vadd.f32 %v5142, %v2722
        %v5163 = vadd.f32 %v5145, %v2722
        %v5164 = vadd.f32 %v5148, %v2722
        %5165 = vst.msk [vmem:[%s301 + $0x80] sm:$0xff] %vm2739, %v5149
        %5166 = vst.msk [vmem:[%s301 + $0x88] sm:$0xff] %vm2739, %v5150
        %5167 = vst.msk [vmem:[%s301 + $0x90] sm:$0xff] %vm2739, %v5151
        %5168 = vst.msk [vmem:[%s301 + $0x98] sm:$0xff] %vm2739, %v5152
        %5169 = vst.msk [vmem:[%s301 + $0xa0] sm:$0xff] %vm2739, %v5153
        %5170 = vst.msk [vmem:[%s301 + $0xa8] sm:$0xff] %vm2739, %v5154
        %5171 = vst.msk [vmem:[%s301 + $0xb0] sm:$0xff] %vm2739, %v5155
        %5172 = vst.msk [vmem:[%s301 + $0xb8] sm:$0xff] %vm2739, %v5156
        %5173 = vst.msk [vmem:[%s301 + $0xc0] sm:$0xff] %vm2739, %v5157
        %5174 = vst.msk [vmem:[%s301 + $0xc8] sm:$0xff] %vm2739, %v5158
        %5175 = vst.msk [vmem:[%s301 + $0xd0] sm:$0xff] %vm2739, %v5159
        %5176 = vst.msk [vmem:[%s301 + $0xd8] sm:$0xff] %vm2739, %v5160
        %5177 = vst.msk [vmem:[%s301 + $0xe0] sm:$0xff] %vm2739, %v5161
        %5178 = vst.msk [vmem:[%s301 + $0xe8] sm:$0xff] %vm2739, %v5162
        %5179 = vst.msk [vmem:[%s301 + $0xf0] sm:$0xff] %vm2739, %v5163
        %5180 = vst.msk [vmem:[%s301 + $0xf8] sm:$0xff] %vm2739, %v5164
        %s5181 = sand.u32 %s159, 1
        %s5182 = scalar_lea.sflag [#allocation5], %s5181
        %s5183 = sand.u32 %s159, 1
        %s5184 = smul.addr %s5183, 256
        %s5185 = scalar_lea.vmem [#allocation11], %s5184
        // Predicated region
        $region57: #{discriminator_forward.3} parent=39 // pred_check
          %p5186 = pneg %p169
        $region58: #{discriminator_forward.3} parent=39 // pred_check_branch
          %5188 = sbr.rel (%p5186) target = $region60
        $region59: #{discriminator_forward.3} parent=39 // pred_region
          %s5190 = ssub.s32 4096, 4096
          %5191 = vsyncadd %s5182, %s5190
          %s5192 = smul.addr %s30, 32
          %s5193 = smul.addr %s29, 32
          %s5194 = sadd.s32 %s5192, %s5193
          %s5195 = smul.addr %s5194, 128
          %s5196 = scalar_lea.hbm %s5, %s5195
          %s5197 = sshll.u32 %s5185, 4
          %s5198 = int_to_ptr.vmem [resolvable:$true] %s5197
          %5203 = dma.vmem_to_hbm [thread:$0]  %s5198, 4096, %s5196, %s5182, 128, 128, 8
        $region60: #{discriminator_forward.3} parent=39 // pred_fallthru
          _
      $region40: #{discriminator_forward.3} parent=5 // pred_fallthru
        _
      %p5204 = scmp.le.s32.totalorder 2, %s20
      // Predicated region
      $region61: #{discriminator_forward.3} parent=5 // pred_check
        %p5205 = pneg %p5204
      $region62: #{discriminator_forward.3} parent=5 // pred_check_branch
        %5207 = sbr.rel (%p5205) target = $region64
      $region63: #{discriminator_forward.3} parent=5 // pred_region
        %s5208 = ssub.s32 %s20, 2
        // Predicated region
        $region65: #{discriminator_forward.3} parent=63 // pred_check
          %p5209 = pneg %p175
        $region66: #{discriminator_forward.3} parent=63 // pred_check_branch
          %5211 = sbr.rel (%p5209) target = $region68
        $region67: #{discriminator_forward.3} parent=63 // pred_region
          %s5212 = sand.u32 %s160, 1
          %s5213 = scalar_lea.sflag [#allocation5], %s5212
          %s5214 = sand.u32 %s160, 1
          %s5215 = smul.addr %s5214, 256
          %s5216 = scalar_lea.vmem [#allocation11], %s5215
          %5217 = dma.done %s5213, 4096
        $region68: #{discriminator_forward.3} parent=63 // pred_fallthru
          _
      $region64: #{discriminator_forward.3} parent=5 // pred_fallthru
        _
    $region6: #{discriminator_forward.3} parent=1 // loop_footer
      %s24 = sadd.s32 1, %s20
    $region7: #{discriminator_forward.3} parent=1 // loop_footer_branch
      %19 = sbr.rel target = $region3
    $region8: #{discriminator_forward.3} parent=1 // loop_exit
      _
    %5218 = vsyncpa [#allocation4], 1
    %s5219 = scalar_lea.sflag [#allocation4], 1
    %5220 = vsyncpa %s5219, 1
    %5221 = vsyncpa [#allocation7], 1
    %5222 = vsyncpa [#allocation10], 1
    %5223 = vsyncpa [#allocation5], 1
    %s5224 = scalar_lea.sflag [#allocation5], 1
    %5225 = vsyncpa %s5224, 1

</llo_original>
